<compile_context>
chip_gen: v7x
topology: tpu7x:2x2x1
jax: 0.10.0
libtpu: 0.0.40
codegen_flags: <defaults>
</compile_context>

<pallas_src>
import functools

import jax
import jax.numpy as jnp
from jax.experimental import pallas as pl
from jax.experimental.pallas import tpu as pltpu


def _zero_border(ref):
    """Zero only the 1-pixel border of a (Hp, Wp, C) VMEM scratch buffer.

    The interior is fully overwritten right after, so zeroing the whole buffer
    every grid step is redundant work.  Done every iteration (not just step 0)
    so it stays correct when the batch grid is sharded across TensorCores,
    each of which has its own scratch instance.
    """
    Hp, Wp, C = ref.shape
    row = jnp.zeros((1, Wp, C), ref.dtype)
    col = jnp.zeros((Hp, 1, C), ref.dtype)
    ref[0:1, :, :] = row
    ref[Hp - 1:Hp, :, :] = row
    ref[:, 0:1, :] = col
    ref[:, Wp - 1:Wp, :] = col


# ----------------------------------------------------------------------------
# Fused kernel: conv3x3+ReLU -> conv3x3+ReLU -> global average pool, for one
# batch element per grid step.  No intermediate feature map is written to HBM.
# ----------------------------------------------------------------------------
def _fused_stem_gap_kernel(x_ref, w1_ref, b1_ref, w2_ref, b2_ref, o_ref,
                           xpad_ref, h1pad_ref):
    # x_ref    : (1, H, W, Cin)   unpadded input tile, f32
    # w1_ref   : (9*Cin, C1)      im2col-flattened 3x3 weights, bf16
    # b1_ref   : (1, C1)          f32
    # w2_ref   : (9*C1, C2)       bf16
    # b2_ref   : (1, C2)          f32
    # o_ref    : (1, 1, C2)       pooled features, f32
    # xpad_ref : (H+2, W+2, Cin)  VMEM scratch, zero-padded input
    # h1pad_ref: (H+2, W+2, C1)   VMEM scratch, zero-padded conv1 output
    H, W, Cin = x_ref.shape[1], x_ref.shape[2], x_ref.shape[3]
    C1 = w1_ref.shape[1]

    def im2col(src_ref, c):
        # Build the (H*W, 9*c) patch matrix from the padded map; one MXU
        # matmul per layer instead of 9 per-tap K=c matmuls.
        cols = []
        for dy in range(3):
            for dx in range(3):
                cols.append(src_ref[dy:dy + H, dx:dx + W, :].reshape(H * W, c))
        return jnp.concatenate(cols, axis=-1)

    # ---- layer 1: zero-pad in VMEM, im2col, single MXU matmul (K = 9*Cin) ----
    _zero_border(xpad_ref)
    xpad_ref[1:H + 1, 1:W + 1, :] = x_ref[0]
    p1 = im2col(xpad_ref, Cin).astype(jnp.bfloat16)              # (H*W, 9*Cin)
    h1 = jnp.dot(p1, w1_ref[...], preferred_element_type=jnp.float32)
    h1 = jnp.maximum(h1 + b1_ref[...], 0.0)                      # (H*W, C1) f32

    # ---- layer 2: pad the VMEM-resident conv1 output, im2col, matmul ----
    _zero_border(h1pad_ref)
    h1pad_ref[1:H + 1, 1:W + 1, :] = h1.reshape(H, W, C1)
    p2 = im2col(h1pad_ref, C1).astype(jnp.bfloat16)              # (H*W, 9*C1)
    h2 = jnp.dot(p2, w2_ref[...], preferred_element_type=jnp.float32)
    h2 = jnp.maximum(h2 + b2_ref[...], 0.0)                      # (H*W, C2) f32

    # ---- fused global average pool: only (1, C2) ever leaves the kernel ----
    pooled = jnp.sum(h2, axis=0, keepdims=True) * (1.0 / (H * W))
    o_ref[0] = pooled.astype(o_ref.dtype)


def fused_stem_gap(x_nhwc, w1, b1, w2, b2):
    """x: (N,H,W,Cin) f32 -> pooled features (N, C2) f32."""
    N, H, W, Cin = x_nhwc.shape
    C1 = w1.shape[-1]
    C2 = w2.shape[-1]
    # bf16 MXU operands (f32 accumulation inside the kernel); im2col layout so
    # the contraction depth is 9*Cin instead of Cin.
    w1f = w1.reshape(9 * Cin, C1).astype(jnp.bfloat16)
    w2f = w2.reshape(9 * C1, C2).astype(jnp.bfloat16)
    b1r = b1.reshape(1, C1).astype(jnp.float32)
    b2r = b2.reshape(1, C2).astype(jnp.float32)

    # TODO(synk): when the real 2048-d InceptionV3 trunk replaces this stem,
    # pad channels to multiples of 128 lanes and re-derive spatial tiles
    # against v7x's 64 MiB VMEM (vmem_limit_bytes) instead of v5e/v6e's 128 MiB.
    out = pl.pallas_call(
        _fused_stem_gap_kernel,
        out_shape=jax.ShapeDtypeStruct((N, 1, C2), jnp.float32),
        grid_spec=pltpu.PrefetchScalarGridSpec(
            num_scalar_prefetch=0,
            grid=(N,),
            in_specs=[
                pl.BlockSpec((1, H, W, Cin), lambda n: (n, 0, 0, 0)),
                # Weights/biases: constant block index -> stay resident in VMEM.
                pl.BlockSpec((9 * Cin, C1), lambda n: (0, 0)),
                pl.BlockSpec((1, C1), lambda n: (0, 0)),
                pl.BlockSpec((9 * C1, C2), lambda n: (0, 0)),
                pl.BlockSpec((1, C2), lambda n: (0, 0)),
            ],
            out_specs=pl.BlockSpec((1, 1, C2), lambda n: (n, 0, 0)),
            scratch_shapes=[
                pltpu.VMEM((H + 2, W + 2, Cin), jnp.float32),
                pltpu.VMEM((H + 2, W + 2, C1), jnp.float32),
            ],
        ),
        compiler_params=pltpu.CompilerParams(
            dimension_semantics=("parallel",)),   # batch -> both TCs on v7x
    )(x_nhwc, w1f, b1r, w2f, b2r)
    return out[:, 0, :]


# ----------------------------------------------------------------------------
# Synthetic fid_incv3 + exact WrapperInceptionV3 forward semantics.
# ----------------------------------------------------------------------------
def init_params(key, cin=4, c1=16, c2=64):
    k1, k2, k3, k4 = jax.random.split(key, 4)
    return dict(
        w1=jax.random.normal(k1, (3, 3, cin, c1), jnp.float32) * 0.1,
        b1=jax.random.normal(k2, (c1,), jnp.float32) * 0.1,
        w2=jax.random.normal(k3, (3, 3, c1, c2), jnp.float32) * 0.1,
        b2=jax.random.normal(k4, (c2,), jnp.float32) * 0.1,
    )


def fid_incv3_forward(params, x_nchw):
    # Stand-in for the pytorch-fid InceptionV3: conv stem + global avg pool,
    # returning a tuple of NCHW feature maps (last one is (N, C, 1, 1)).
    # TODO(synk): the real pretrained InceptionV3 trunk (inception blocks,
    # 2048-d pool3) is replaced by a small deterministic conv stem; the
    # wrapper's indexing/slicing semantics are exact.
    x = jnp.transpose(x_nchw, (0, 2, 3, 1))          # NCHW -> NHWC
    pooled = fused_stem_gap(x, params["w1"], params["b1"],
                            params["w2"], params["b2"])       # (N, C2)
    feat_nchw = pooled[:, :, None, None]             # (N, C, 1, 1), NCHW like torch
    return (feat_nchw,)


def wrapper_inception_v3(params, x_nchw):
    # Exact WrapperInceptionV3.forward semantics:
    y = fid_incv3_forward(params, x_nchw)
    y = y[0]
    y = y[:, :, 0, 0]
    return y


if __name__ == "__main__":
    key = jax.random.PRNGKey(0)
    kx, kp = jax.random.split(key)
    # PyTorch-convention NCHW input at small shapes.
    x = jax.random.normal(kx, (2, 4, 16, 16), jnp.float32)
    params = init_params(kp, cin=4, c1=16, c2=64)

    fwd = jax.jit(functools.partial(wrapper_inception_v3, params))
    y = fwd(x)
    y = jax.block_until_ready(y)

    assert y.shape == (2, 64), y.shape
    assert y.dtype == jnp.float32
    print("KERNEL_OK")
</pallas_src>

<mosaic_0001>
module attributes {stable_mosaic.version = 11 : i64} {
  func.func @_fused_stem_gap_kernel(%arg0: i32, %arg1: memref<1x16x16x4xf32, #tpu.memory_space<vmem>>, %arg2: memref<36x16xbf16, #tpu.memory_space<vmem>>, %arg3: memref<1x16xf32, #tpu.memory_space<vmem>>, %arg4: memref<144x64xbf16, #tpu.memory_space<vmem>>, %arg5: memref<1x64xf32, #tpu.memory_space<vmem>>, %arg6: memref<1x1x64xf32, #tpu.memory_space<vmem>>, %arg7: memref<18x18x4xf32, #tpu.memory_space<vmem>>, %arg8: memref<18x18x16xf32, #tpu.memory_space<vmem>>) attributes {dimension_semantics = [#tpu.dimension_semantics<parallel>], iteration_bounds = array<i64: 2>, scalar_prefetch = 0 : i64, scratch_operands = 2 : i64, tpu.core_type = #tpu.core_type<tc>, window_params = [{transform_indices = @transform_0, window_bounds = array<i64: 1, 16, 16, 4>}, {pipeline_mode = #tpu.pipeline_mode<synchronous>, transform_indices = @transform_1, window_bounds = array<i64: 36, 16>}, {pipeline_mode = #tpu.pipeline_mode<synchronous>, transform_indices = @transform_2, window_bounds = array<i64: 1, 16>}, {pipeline_mode = #tpu.pipeline_mode<synchronous>, transform_indices = @transform_3, window_bounds = array<i64: 144, 64>}, {pipeline_mode = #tpu.pipeline_mode<synchronous>, transform_indices = @transform_4, window_bounds = array<i64: 1, 64>}, {transform_indices = @transform_5, window_bounds = array<i64: 1, 1, 64>}]} {
    %cst = arith.constant 0.000000e+00 : f32
    %0 = vector.broadcast %cst : f32 to vector<1x18x4xf32>
    %cst_0 = arith.constant 0.000000e+00 : f32
    %1 = vector.broadcast %cst_0 : f32 to vector<18x1x4xf32>
    %c0 = arith.constant 0 : index
    %c0_1 = arith.constant 0 : index
    %c0_2 = arith.constant 0 : index
    %2 = vector.load %arg7[%c0, %c0_1, %c0_2] : memref<18x18x4xf32, #tpu.memory_space<vmem>>, vector<1x18x4xf32>
    tpu.vector_store %arg7[%c0, %c0_1, %c0_2], %0 {strides = array<i32>} : memref<18x18x4xf32, #tpu.memory_space<vmem>>, vector<1x18x4xf32>,
    %c17 = arith.constant 17 : index
    %c0_3 = arith.constant 0 : index
    %c0_4 = arith.constant 0 : index
    %3 = vector.load %arg7[%c17, %c0_3, %c0_4] : memref<18x18x4xf32, #tpu.memory_space<vmem>>, vector<1x18x4xf32>
    tpu.vector_store %arg7[%c17, %c0_3, %c0_4], %0 {strides = array<i32>} : memref<18x18x4xf32, #tpu.memory_space<vmem>>, vector<1x18x4xf32>,
    %c0_5 = arith.constant 0 : index
    %c0_6 = arith.constant 0 : index
    %c0_7 = arith.constant 0 : index
    %4 = vector.load %arg7[%c0_5, %c0_6, %c0_7] : memref<18x18x4xf32, #tpu.memory_space<vmem>>, vector<18x1x4xf32>
    tpu.vector_store %arg7[%c0_5, %c0_6, %c0_7], %1 {strides = array<i32>} : memref<18x18x4xf32, #tpu.memory_space<vmem>>, vector<18x1x4xf32>,
    %c0_8 = arith.constant 0 : index
    %c17_9 = arith.constant 17 : index
    %c0_10 = arith.constant 0 : index
    %5 = vector.load %arg7[%c0_8, %c17_9, %c0_10] : memref<18x18x4xf32, #tpu.memory_space<vmem>>, vector<18x1x4xf32>
    tpu.vector_store %arg7[%c0_8, %c17_9, %c0_10], %1 {strides = array<i32>} : memref<18x18x4xf32, #tpu.memory_space<vmem>>, vector<18x1x4xf32>,
    %c0_11 = arith.constant 0 : index
    %c0_12 = arith.constant 0 : index
    %c0_13 = arith.constant 0 : index
    %c0_14 = arith.constant 0 : index
    %6 = vector.load %arg1[%c0_11, %c0_12, %c0_13, %c0_14] : memref<1x16x16x4xf32, #tpu.memory_space<vmem>>, vector<1x16x16x4xf32>
    %7 = vector.shape_cast %6 : vector<1x16x16x4xf32> to vector<16x16x4xf32>
    %c1 = arith.constant 1 : index
    %c1_15 = arith.constant 1 : index
    %c0_16 = arith.constant 0 : index
    %8 = vector.load %arg7[%c1, %c1_15, %c0_16] : memref<18x18x4xf32, #tpu.memory_space<vmem>>, vector<16x16x4xf32>
    tpu.vector_store %arg7[%c1, %c1_15, %c0_16], %7 {strides = array<i32>} : memref<18x18x4xf32, #tpu.memory_space<vmem>>, vector<16x16x4xf32>,
    %c0_17 = arith.constant 0 : index
    %c0_18 = arith.constant 0 : index
    %c0_19 = arith.constant 0 : index
    %9 = vector.load %arg7[%c0_17, %c0_18, %c0_19] : memref<18x18x4xf32, #tpu.memory_space<vmem>>, vector<16x16x4xf32>
    %10 = vector.shape_cast %9 : vector<16x16x4xf32> to vector<256x4xf32>
    %c0_20 = arith.constant 0 : index
    %c1_21 = arith.constant 1 : index
    %c0_22 = arith.constant 0 : index
    %11 = vector.load %arg7[%c0_20, %c1_21, %c0_22] : memref<18x18x4xf32, #tpu.memory_space<vmem>>, vector<16x16x4xf32>
    %12 = vector.shape_cast %11 : vector<16x16x4xf32> to vector<256x4xf32>
    %c0_23 = arith.constant 0 : index
    %c2 = arith.constant 2 : index
    %c0_24 = arith.constant 0 : index
    %13 = vector.load %arg7[%c0_23, %c2, %c0_24] : memref<18x18x4xf32, #tpu.memory_space<vmem>>, vector<16x16x4xf32>
    %14 = vector.shape_cast %13 : vector<16x16x4xf32> to vector<256x4xf32>
    %c1_25 = arith.constant 1 : index
    %c0_26 = arith.constant 0 : index
    %c0_27 = arith.constant 0 : index
    %15 = vector.load %arg7[%c1_25, %c0_26, %c0_27] : memref<18x18x4xf32, #tpu.memory_space<vmem>>, vector<16x16x4xf32>
    %16 = vector.shape_cast %15 : vector<16x16x4xf32> to vector<256x4xf32>
    %c1_28 = arith.constant 1 : index
    %c1_29 = arith.constant 1 : index
    %c0_30 = arith.constant 0 : index
    %17 = vector.load %arg7[%c1_28, %c1_29, %c0_30] : memref<18x18x4xf32, #tpu.memory_space<vmem>>, vector<16x16x4xf32>
    %18 = vector.shape_cast %17 : vector<16x16x4xf32> to vector<256x4xf32>
    %c1_31 = arith.constant 1 : index
    %c2_32 = arith.constant 2 : index
    %c0_33 = arith.constant 0 : index
    %19 = vector.load %arg7[%c1_31, %c2_32, %c0_33] : memref<18x18x4xf32, #tpu.memory_space<vmem>>, vector<16x16x4xf32>
    %20 = vector.shape_cast %19 : vector<16x16x4xf32> to vector<256x4xf32>
    %c2_34 = arith.constant 2 : index
    %c0_35 = arith.constant 0 : index
    %c0_36 = arith.constant 0 : index
    %21 = vector.load %arg7[%c2_34, %c0_35, %c0_36] : memref<18x18x4xf32, #tpu.memory_space<vmem>>, vector<16x16x4xf32>
    %22 = vector.shape_cast %21 : vector<16x16x4xf32> to vector<256x4xf32>
    %c2_37 = arith.constant 2 : index
    %c1_38 = arith.constant 1 : index
    %c0_39 = arith.constant 0 : index
    %23 = vector.load %arg7[%c2_37, %c1_38, %c0_39] : memref<18x18x4xf32, #tpu.memory_space<vmem>>, vector<16x16x4xf32>
    %24 = vector.shape_cast %23 : vector<16x16x4xf32> to vector<256x4xf32>
    %c2_40 = arith.constant 2 : index
    %c2_41 = arith.constant 2 : index
    %c0_42 = arith.constant 0 : index
    %25 = vector.load %arg7[%c2_40, %c2_41, %c0_42] : memref<18x18x4xf32, #tpu.memory_space<vmem>>, vector<16x16x4xf32>
    %26 = vector.shape_cast %25 : vector<16x16x4xf32> to vector<256x4xf32>
    %27 = tpu.concatenate %10, %12, %14, %16, %18, %20, %22, %24, %26 in 1 : vector<256x4xf32>, vector<256x4xf32>, vector<256x4xf32>, vector<256x4xf32>, vector<256x4xf32>, vector<256x4xf32>, vector<256x4xf32>, vector<256x4xf32>, vector<256x4xf32> -> vector<256x36xf32>
    %28 = arith.truncf %27 : vector<256x36xf32> to vector<256x36xbf16>
    %c0_43 = arith.constant 0 : index
    %c0_44 = arith.constant 0 : index
    %29 = vector.load %arg2[%c0_43, %c0_44] : memref<36x16xbf16, #tpu.memory_space<vmem>>, vector<36x16xbf16>
    %cst_45 = arith.constant dense<0.000000e+00> : vector<256x16xf32>
    %30 = tpu.matmul %28, %29, %cst_45 {dimension_numbers = #tpu.dot_dimension_numbers<[1], [0], [0], [1], [0, 0, 1, 1], [], []>} : vector<256x36xbf16>, vector<36x16xbf16>, vector<256x16xf32> -> vector<256x16xf32>
    %c0_46 = arith.constant 0 : index
    %c0_47 = arith.constant 0 : index
    %31 = vector.load %arg3[%c0_46, %c0_47] : memref<1x16xf32, #tpu.memory_space<vmem>>, vector<1x16xf32>
    %32 = vector.broadcast %31 : vector<1x16xf32> to vector<256x16xf32>
    %33 = arith.addf %30, %32 : vector<256x16xf32>
    %cst_48 = arith.constant 0.000000e+00 : f32
    %34 = vector.broadcast %cst_48 : f32 to vector<256x16xf32>
    %35 = arith.maximumf %33, %34 : vector<256x16xf32>
    %cst_49 = arith.constant 0.000000e+00 : f32
    %36 = vector.broadcast %cst_49 : f32 to vector<1x18x16xf32>
    %cst_50 = arith.constant 0.000000e+00 : f32
    %37 = vector.broadcast %cst_50 : f32 to vector<18x1x16xf32>
    %c0_51 = arith.constant 0 : index
    %c0_52 = arith.constant 0 : index
    %c0_53 = arith.constant 0 : index
    %38 = vector.load %arg8[%c0_51, %c0_52, %c0_53] : memref<18x18x16xf32, #tpu.memory_space<vmem>>, vector<1x18x16xf32>
    tpu.vector_store %arg8[%c0_51, %c0_52, %c0_53], %36 {strides = array<i32>} : memref<18x18x16xf32, #tpu.memory_space<vmem>>, vector<1x18x16xf32>,
    %c17_54 = arith.constant 17 : index
    %c0_55 = arith.constant 0 : index
    %c0_56 = arith.constant 0 : index
    %39 = vector.load %arg8[%c17_54, %c0_55, %c0_56] : memref<18x18x16xf32, #tpu.memory_space<vmem>>, vector<1x18x16xf32>
    tpu.vector_store %arg8[%c17_54, %c0_55, %c0_56], %36 {strides = array<i32>} : memref<18x18x16xf32, #tpu.memory_space<vmem>>, vector<1x18x16xf32>,
    %c0_57 = arith.constant 0 : index
    %c0_58 = arith.constant 0 : index
    %c0_59 = arith.constant 0 : index
    %40 = vector.load %arg8[%c0_57, %c0_58, %c0_59] : memref<18x18x16xf32, #tpu.memory_space<vmem>>, vector<18x1x16xf32>
    tpu.vector_store %arg8[%c0_57, %c0_58, %c0_59], %37 {strides = array<i32>} : memref<18x18x16xf32, #tpu.memory_space<vmem>>, vector<18x1x16xf32>,
    %c0_60 = arith.constant 0 : index
    %c17_61 = arith.constant 17 : index
    %c0_62 = arith.constant 0 : index
    %41 = vector.load %arg8[%c0_60, %c17_61, %c0_62] : memref<18x18x16xf32, #tpu.memory_space<vmem>>, vector<18x1x16xf32>
    tpu.vector_store %arg8[%c0_60, %c17_61, %c0_62], %37 {strides = array<i32>} : memref<18x18x16xf32, #tpu.memory_space<vmem>>, vector<18x1x16xf32>,
    %42 = vector.shape_cast %35 : vector<256x16xf32> to vector<16x16x16xf32>
    %c1_63 = arith.constant 1 : index
    %c1_64 = arith.constant 1 : index
    %c0_65 = arith.constant 0 : index
    %43 = vector.load %arg8[%c1_63, %c1_64, %c0_65] : memref<18x18x16xf32, #tpu.memory_space<vmem>>, vector<16x16x16xf32>
    tpu.vector_store %arg8[%c1_63, %c1_64, %c0_65], %42 {strides = array<i32>} : memref<18x18x16xf32, #tpu.memory_space<vmem>>, vector<16x16x16xf32>,
    %c0_66 = arith.constant 0 : index
    %c0_67 = arith.constant 0 : index
    %c0_68 = arith.constant 0 : index
    %44 = vector.load %arg8[%c0_66, %c0_67, %c0_68] : memref<18x18x16xf32, #tpu.memory_space<vmem>>, vector<16x16x16xf32>
    %45 = vector.shape_cast %44 : vector<16x16x16xf32> to vector<256x16xf32>
    %c0_69 = arith.constant 0 : index
    %c1_70 = arith.constant 1 : index
    %c0_71 = arith.constant 0 : index
    %46 = vector.load %arg8[%c0_69, %c1_70, %c0_71] : memref<18x18x16xf32, #tpu.memory_space<vmem>>, vector<16x16x16xf32>
    %47 = vector.shape_cast %46 : vector<16x16x16xf32> to vector<256x16xf32>
    %c0_72 = arith.constant 0 : index
    %c2_73 = arith.constant 2 : index
    %c0_74 = arith.constant 0 : index
    %48 = vector.load %arg8[%c0_72, %c2_73, %c0_74] : memref<18x18x16xf32, #tpu.memory_space<vmem>>, vector<16x16x16xf32>
    %49 = vector.shape_cast %48 : vector<16x16x16xf32> to vector<256x16xf32>
    %c1_75 = arith.constant 1 : index
    %c0_76 = arith.constant 0 : index
    %c0_77 = arith.constant 0 : index
    %50 = vector.load %arg8[%c1_75, %c0_76, %c0_77] : memref<18x18x16xf32, #tpu.memory_space<vmem>>, vector<16x16x16xf32>
    %51 = vector.shape_cast %50 : vector<16x16x16xf32> to vector<256x16xf32>
    %c1_78 = arith.constant 1 : index
    %c1_79 = arith.constant 1 : index
    %c0_80 = arith.constant 0 : index
    %52 = vector.load %arg8[%c1_78, %c1_79, %c0_80] : memref<18x18x16xf32, #tpu.memory_space<vmem>>, vector<16x16x16xf32>
    %53 = vector.shape_cast %52 : vector<16x16x16xf32> to vector<256x16xf32>
    %c1_81 = arith.constant 1 : index
    %c2_82 = arith.constant 2 : index
    %c0_83 = arith.constant 0 : index
    %54 = vector.load %arg8[%c1_81, %c2_82, %c0_83] : memref<18x18x16xf32, #tpu.memory_space<vmem>>, vector<16x16x16xf32>
    %55 = vector.shape_cast %54 : vector<16x16x16xf32> to vector<256x16xf32>
    %c2_84 = arith.constant 2 : index
    %c0_85 = arith.constant 0 : index
    %c0_86 = arith.constant 0 : index
    %56 = vector.load %arg8[%c2_84, %c0_85, %c0_86] : memref<18x18x16xf32, #tpu.memory_space<vmem>>, vector<16x16x16xf32>
    %57 = vector.shape_cast %56 : vector<16x16x16xf32> to vector<256x16xf32>
    %c2_87 = arith.constant 2 : index
    %c1_88 = arith.constant 1 : index
    %c0_89 = arith.constant 0 : index
    %58 = vector.load %arg8[%c2_87, %c1_88, %c0_89] : memref<18x18x16xf32, #tpu.memory_space<vmem>>, vector<16x16x16xf32>
    %59 = vector.shape_cast %58 : vector<16x16x16xf32> to vector<256x16xf32>
    %c2_90 = arith.constant 2 : index
    %c2_91 = arith.constant 2 : index
    %c0_92 = arith.constant 0 : index
    %60 = vector.load %arg8[%c2_90, %c2_91, %c0_92] : memref<18x18x16xf32, #tpu.memory_space<vmem>>, vector<16x16x16xf32>
    %61 = vector.shape_cast %60 : vector<16x16x16xf32> to vector<256x16xf32>
    %62 = tpu.concatenate %45, %47, %49, %51, %53, %55, %57, %59, %61 in 1 : vector<256x16xf32>, vector<256x16xf32>, vector<256x16xf32>, vector<256x16xf32>, vector<256x16xf32>, vector<256x16xf32>, vector<256x16xf32>, vector<256x16xf32>, vector<256x16xf32> -> vector<256x144xf32>
    %63 = arith.truncf %62 : vector<256x144xf32> to vector<256x144xbf16>
    %c0_93 = arith.constant 0 : index
    %c0_94 = arith.constant 0 : index
    %64 = vector.load %arg4[%c0_93, %c0_94] : memref<144x64xbf16, #tpu.memory_space<vmem>>, vector<144x64xbf16>
    %cst_95 = arith.constant dense<0.000000e+00> : vector<256x64xf32>
    %65 = tpu.matmul %63, %64, %cst_95 {dimension_numbers = #tpu.dot_dimension_numbers<[1], [0], [0], [1], [0, 0, 1, 1], [], []>} : vector<256x144xbf16>, vector<144x64xbf16>, vector<256x64xf32> -> vector<256x64xf32>
    %c0_96 = arith.constant 0 : index
    %c0_97 = arith.constant 0 : index
    %66 = vector.load %arg5[%c0_96, %c0_97] : memref<1x64xf32, #tpu.memory_space<vmem>>, vector<1x64xf32>
    %67 = vector.broadcast %66 : vector<1x64xf32> to vector<256x64xf32>
    %68 = arith.addf %65, %67 : vector<256x64xf32>
    %cst_98 = arith.constant 0.000000e+00 : f32
    %69 = vector.broadcast %cst_98 : f32 to vector<256x64xf32>
    %70 = arith.maximumf %68, %69 : vector<256x64xf32>
    %cst_99 = arith.constant dense<0.000000e+00> : vector<64xf32>
    %71 = vector.multi_reduction <add>, %70, %cst_99 [0] : vector<256x64xf32> to vector<64xf32>
    %72 = vector.shape_cast %71 : vector<64xf32> to vector<1x64xf32>
    %cst_100 = arith.constant 3.906250e-03 : f32
    %73 = vector.broadcast %cst_100 : f32 to vector<1x64xf32>
    %74 = arith.mulf %72, %73 : vector<1x64xf32>
    %c0_101 = arith.constant 0 : index
    %c0_102 = arith.constant 0 : index
    %c0_103 = arith.constant 0 : index
    %75 = vector.load %arg6[%c0_101, %c0_102, %c0_103] : memref<1x1x64xf32, #tpu.memory_space<vmem>>, vector<1x1x64xf32>
    %76 = vector.shape_cast %75 : vector<1x1x64xf32> to vector<1x64xf32>
    %77 = vector.shape_cast %74 : vector<1x64xf32> to vector<1x1x64xf32>
    tpu.vector_store %arg6[%c0_101, %c0_102, %c0_103], %77 {strides = array<i32>} : memref<1x1x64xf32, #tpu.memory_space<vmem>>, vector<1x1x64xf32>,
    return
  }
  func.func @transform_0(%arg0: i32) -> (i32, i32, i32, i32) {
    %c0_i32 = arith.constant 0 : i32
    %c0_i32_0 = arith.constant 0 : i32
    %c0_i32_1 = arith.constant 0 : i32
    %c0_i32_2 = arith.constant 0 : i32
    return %arg0, %c0_i32, %c0_i32_0, %c0_i32_1 : i32, i32, i32, i32
  }
  func.func @transform_1(%arg0: i32) -> (i32, i32) {
    %c0_i32 = arith.constant 0 : i32
    %c0_i32_0 = arith.constant 0 : i32
    %c0_i32_1 = arith.constant 0 : i32
    return %c0_i32, %c0_i32_0 : i32, i32
  }
  func.func @transform_2(%arg0: i32) -> (i32, i32) {
    %c0_i32 = arith.constant 0 : i32
    %c0_i32_0 = arith.constant 0 : i32
    %c0_i32_1 = arith.constant 0 : i32
    return %c0_i32, %c0_i32_0 : i32, i32
  }
  func.func @transform_3(%arg0: i32) -> (i32, i32) {
    %c0_i32 = arith.constant 0 : i32
    %c0_i32_0 = arith.constant 0 : i32
    %c0_i32_1 = arith.constant 0 : i32
    return %c0_i32, %c0_i32_0 : i32, i32
  }
  func.func @transform_4(%arg0: i32) -> (i32, i32) {
    %c0_i32 = arith.constant 0 : i32
    %c0_i32_0 = arith.constant 0 : i32
    %c0_i32_1 = arith.constant 0 : i32
    return %c0_i32, %c0_i32_0 : i32, i32
  }
  func.func @transform_5(%arg0: i32) -> (i32, i32, i32) {
    %c0_i32 = arith.constant 0 : i32
    %c0_i32_0 = arith.constant 0 : i32
    %c0_i32_1 = arith.constant 0 : i32
    return %arg0, %c0_i32, %c0_i32_0 : i32, i32, i32
  }
}

</mosaic_0001>

<llo_original>
// kernel: wrapper_inception_v3.1
$region0: #{wrapper_inception_v3.1}
  #allocation0 [shape = 'u32[]', space=smem, size = 0x4, offset = 0x4, fixed_abs, tag = 'smem constant byte address 0x4 - core index']
  #allocation1 [shape = 'u32[144,128]{1,0:T(1,128)}', space=vmem, size = 0x12000, scoped, tag = 'internal scratch']
  #allocation2 [shape = 'f32[18,18,4]{2,1,0:T(8,128)}', space=vmem, size = 0x36000, scoped, tag = 'scratch operand']
  #allocation3 [shape = 'f32[18,18,16]{2,1,0:T(8,128)}', space=vmem, size = 0x36000, scoped, tag = 'scratch operand']
  %s0 = inlined_call_operand.vmem [shape: f32[2,16,16,4], index: 0, kind: input, shape index: {}]
  %s1 = inlined_call_operand.vmem [shape: bf16[36,16], index: 1, kind: input, shape index: {}]
  %s2 = inlined_call_operand.vmem [shape: f32[1,16], index: 2, kind: input, shape index: {}]
  %s3 = inlined_call_operand.vmem [shape: bf16[144,64], index: 3, kind: input, shape index: {}]
  %s4 = inlined_call_operand.vmem [shape: f32[1,64], index: 4, kind: input, shape index: {}]
  %s5 = inlined_call_operand.hbm [shape: f32[2,1,64], index: 5, kind: output, shape index: {}]
  %s6 = sld [smem:[#allocation0]]
  $region53: #{wrapper_inception_v3.1} parent=0
    _
  %s8 = ssub.s32 1, %s6
  %s9 = scalar_select 0, %s8, %s6
  $region1: #{wrapper_inception_v3.1} parent=0
    #allocation4 [shape = 'u8[1024]{0}', space=vmem, size = 0x400, scoped, tag = 'output window, operand 0']
    #allocation5 [shape = 's32[2]{0}', space=sflag, size = 0x8, scoped, tag = 'scoped memory for wrapper_inception_v3.1']
    %10 = vsyncpa [#allocation5], 0
    %s11 = scalar_lea.sflag [#allocation5], 1
    %12 = vsyncpa %s11, 0
    loop: start=0, step=1, limit=4
    $region2: #{wrapper_inception_v3.1} parent=1 // loop_pre_header
      _
    $region3: #{wrapper_inception_v3.1} parent=1 // loop_header
      %s14 = sphi 0, %s18
      %p15 = scmp.ge.s32.totalorder %s14, 4
      %s24 = sphi 0, %s26
      %s27 = sphi 0, %s24
      %s28 = sphi 0, %s27
      %s44 = sphi 0, %s28
      %s48 = sphi 0, %s48
      %s50 = sphi 0, %s48
      %s51 = sphi 0, %s50
      %s65 = sphi 0, %s51
      %s69 = sphi 0, %s69
      %s71 = sphi 0, %s69
      %s72 = sphi 0, %s71
      %s86 = sphi 0, %s72
      %s90 = sphi 0, %s90
      %s92 = sphi 0, %s90
      %s93 = sphi 0, %s92
      %s107 = sphi 0, %s93
      %s111 = sphi 0, %s111
      %s113 = sphi 0, %s111
      %s114 = sphi 0, %s113
      %s128 = sphi 0, %s114
      %s134 = sphi 0, %s136
      %s137 = sphi 0, %s134
      %s138 = sphi 0, %s137
      %s154 = sphi 0, %s138
    $region4: #{wrapper_inception_v3.1} parent=1 // loop_header_branch
      %17 = sbr.rel (%p15) target = $region8
    $region5: #{wrapper_inception_v3.1} parent=1 // loop_body
      %s19 = ssub.s32 %s14, 1
      %s20 = ssub.s32 %s14, 2
      %s21 = sadd.s32 %s14, 1
      %s22 = ssub.s32 %s14, %s21
      %p23 = scmp.eq.s32.totalorder %s22, 0
      %s25 = sadd.s32 %s24, 1
      %s26 = scalar_select %p23, %s24, %s25
      %p29 = pneg %p23
      %p30 = scmp.eq.s32.totalorder %s14, 1
      %p31 = por %p29, %p30
      %p32 = scmp.ne.s32.totalorder %s24, %s27
      %p33 = scmp.eq.s32.totalorder %s14, 0
      %p34 = por %p32, %p33
      %p35 = scmp.ne.s32.totalorder %s24, %s27
      %p36 = scmp.eq.s32.totalorder %s19, 1
      %p37 = por %p35, %p36
      %p38 = scmp.ne.s32.totalorder %s27, %s28
      %p39 = scmp.eq.s32.totalorder %s19, 0
      %p40 = por %p38, %p39
      %p41 = scmp.ne.s32.totalorder %s27, %s28
      %p42 = scmp.eq.s32.totalorder %s20, 1
      %p43 = por %p41, %p42
      %p45 = scmp.ne.s32.totalorder %s28, %s44
      %p46 = scmp.eq.s32.totalorder %s20, 0
      %p47 = por %p45, %p46
      %s49 = sadd.s32 %s48, 1
      %p52 = scmp.eq.s32.totalorder %s14, 1
      %p53 = scmp.ne.s32.totalorder %s48, %s50
      %p54 = scmp.eq.s32.totalorder %s14, 0
      %p55 = por %p53, %p54
      %p56 = scmp.ne.s32.totalorder %s48, %s50
      %p57 = scmp.eq.s32.totalorder %s19, 1
      %p58 = por %p56, %p57
      %p59 = scmp.ne.s32.totalorder %s50, %s51
      %p60 = scmp.eq.s32.totalorder %s19, 0
      %p61 = por %p59, %p60
      %p62 = scmp.ne.s32.totalorder %s50, %s51
      %p63 = scmp.eq.s32.totalorder %s20, 1
      %p64 = por %p62, %p63
      %p66 = scmp.ne.s32.totalorder %s51, %s65
      %p67 = scmp.eq.s32.totalorder %s20, 0
      %p68 = por %p66, %p67
      %s70 = sadd.s32 %s69, 1
      %p73 = scmp.eq.s32.totalorder %s14, 1
      %p74 = scmp.ne.s32.totalorder %s69, %s71
      %p75 = scmp.eq.s32.totalorder %s14, 0
      %p76 = por %p74, %p75
      %p77 = scmp.ne.s32.totalorder %s69, %s71
      %p78 = scmp.eq.s32.totalorder %s19, 1
      %p79 = por %p77, %p78
      %p80 = scmp.ne.s32.totalorder %s71, %s72
      %p81 = scmp.eq.s32.totalorder %s19, 0
      %p82 = por %p80, %p81
      %p83 = scmp.ne.s32.totalorder %s71, %s72
      %p84 = scmp.eq.s32.totalorder %s20, 1
      %p85 = por %p83, %p84
      %p87 = scmp.ne.s32.totalorder %s72, %s86
      %p88 = scmp.eq.s32.totalorder %s20, 0
      %p89 = por %p87, %p88
      %s91 = sadd.s32 %s90, 1
      %p94 = scmp.eq.s32.totalorder %s14, 1
      %p95 = scmp.ne.s32.totalorder %s90, %s92
      %p96 = scmp.eq.s32.totalorder %s14, 0
      %p97 = por %p95, %p96
      %p98 = scmp.ne.s32.totalorder %s90, %s92
      %p99 = scmp.eq.s32.totalorder %s19, 1
      %p100 = por %p98, %p99
      %p101 = scmp.ne.s32.totalorder %s92, %s93
      %p102 = scmp.eq.s32.totalorder %s19, 0
      %p103 = por %p101, %p102
      %p104 = scmp.ne.s32.totalorder %s92, %s93
      %p105 = scmp.eq.s32.totalorder %s20, 1
      %p106 = por %p104, %p105
      %p108 = scmp.ne.s32.totalorder %s93, %s107
      %p109 = scmp.eq.s32.totalorder %s20, 0
      %p110 = por %p108, %p109
      %s112 = sadd.s32 %s111, 1
      %p115 = scmp.eq.s32.totalorder %s14, 1
      %p116 = scmp.ne.s32.totalorder %s111, %s113
      %p117 = scmp.eq.s32.totalorder %s14, 0
      %p118 = por %p116, %p117
      %p119 = scmp.ne.s32.totalorder %s111, %s113
      %p120 = scmp.eq.s32.totalorder %s19, 1
      %p121 = por %p119, %p120
      %p122 = scmp.ne.s32.totalorder %s113, %s114
      %p123 = scmp.eq.s32.totalorder %s19, 0
      %p124 = por %p122, %p123
      %p125 = scmp.ne.s32.totalorder %s113, %s114
      %p126 = scmp.eq.s32.totalorder %s20, 1
      %p127 = por %p125, %p126
      %p129 = scmp.ne.s32.totalorder %s114, %s128
      %p130 = scmp.eq.s32.totalorder %s20, 0
      %p131 = por %p129, %p130
      %s132 = ssub.s32 %s14, %s21
      %p133 = scmp.eq.s32.totalorder %s132, 0
      %s135 = sadd.s32 %s134, 1
      %s136 = scalar_select %p133, %s134, %s135
      %p139 = pneg %p133
      %p140 = scmp.eq.s32.totalorder %s14, 1
      %p141 = por %p139, %p140
      %p142 = scmp.ne.s32.totalorder %s134, %s137
      %p143 = scmp.eq.s32.totalorder %s14, 0
      %p144 = por %p142, %p143
      %p145 = scmp.ne.s32.totalorder %s134, %s137
      %p146 = scmp.eq.s32.totalorder %s19, 1
      %p147 = por %p145, %p146
      %p148 = scmp.ne.s32.totalorder %s137, %s138
      %p149 = scmp.eq.s32.totalorder %s19, 0
      %p150 = por %p148, %p149
      %p151 = scmp.ne.s32.totalorder %s137, %s138
      %p152 = scmp.eq.s32.totalorder %s20, 1
      %p153 = por %p151, %p152
      %p155 = scmp.ne.s32.totalorder %s138, %s154
      %p156 = scmp.eq.s32.totalorder %s20, 0
      %p157 = por %p155, %p156
      %p158 = scmp.le.s32.totalorder 1, %s14
      %p159 = scmp.lt.s32.totalorder %s14, 3
      %p160 = pnand %p158, %p159
      %p161 = pneg %p160
      // Predicated region
      $region9: #{wrapper_inception_v3.1} parent=5 // pred_check
        _
      $region10: #{wrapper_inception_v3.1} parent=5 // pred_check_branch
        %163 = sbr.rel (%p160) target = $region12
      $region11: #{wrapper_inception_v3.1} parent=5 // pred_region
        %s164 = ssub.s32 %s14, 1
        // Predicated region
        $region13: #{wrapper_inception_v3.1} parent=11 // pred_check
          %p165 = pneg %p61
        $region14: #{wrapper_inception_v3.1} parent=11 // pred_check_branch
          %167 = sbr.rel (%p165) target = $region16
        $region15: #{wrapper_inception_v3.1} parent=11 // pred_region
          _
        $region16: #{wrapper_inception_v3.1} parent=11 // pred_fallthru
          _
        // Predicated region
        $region17: #{wrapper_inception_v3.1} parent=11 // pred_check
          %p168 = pneg %p82
        $region18: #{wrapper_inception_v3.1} parent=11 // pred_check_branch
          %170 = sbr.rel (%p168) target = $region20
        $region19: #{wrapper_inception_v3.1} parent=11 // pred_region
          _
        $region20: #{wrapper_inception_v3.1} parent=11 // pred_fallthru
          _
        // Predicated region
        $region21: #{wrapper_inception_v3.1} parent=11 // pred_check
          %p171 = pneg %p103
        $region22: #{wrapper_inception_v3.1} parent=11 // pred_check_branch
          %173 = sbr.rel (%p171) target = $region24
        $region23: #{wrapper_inception_v3.1} parent=11 // pred_region
          _
        $region24: #{wrapper_inception_v3.1} parent=11 // pred_fallthru
          _
        // Predicated region
        $region25: #{wrapper_inception_v3.1} parent=11 // pred_check
          %p174 = pneg %p124
        $region26: #{wrapper_inception_v3.1} parent=11 // pred_check_branch
          %176 = sbr.rel (%p174) target = $region28
        $region27: #{wrapper_inception_v3.1} parent=11 // pred_region
          _
        $region28: #{wrapper_inception_v3.1} parent=11 // pred_fallthru
          _
      $region12: #{wrapper_inception_v3.1} parent=5 // pred_fallthru
        _
      %p177 = scmp.lt.s32.totalorder %s14, 2
      // Predicated region
      $region29: #{wrapper_inception_v3.1} parent=5 // pred_check
        %p178 = pneg %p177
      $region30: #{wrapper_inception_v3.1} parent=5 // pred_check_branch
        %180 = sbr.rel (%p178) target = $region32
      $region31: #{wrapper_inception_v3.1} parent=5 // pred_region
        // Predicated region
        $region33: #{wrapper_inception_v3.1} parent=31 // pred_check
          %p181 = pneg %p34
        $region34: #{wrapper_inception_v3.1} parent=31 // pred_check_branch
          %183 = sbr.rel (%p181) target = $region36
        $region35: #{wrapper_inception_v3.1} parent=31 // pred_region
          %p184 = scmp.lt.s32.totalorder %s14, 1
          %s185 = scalar_select %p184, %s14, 1
          %s186 = smul.addr %s185, 32
          %s187 = smul.addr %s186, 8
          %s188 = scalar_lea.vmem %s0, %s187
        $region36: #{wrapper_inception_v3.1} parent=31 // pred_fallthru
          _
      $region32: #{wrapper_inception_v3.1} parent=5 // pred_fallthru
        _
      %p189 = scmp.le.s32.totalorder 1, %s14
      %p190 = scmp.lt.s32.totalorder %s14, 3
      %p191 = pnand %p189, %p190
      %p192 = pneg %p191
      // Predicated region
      $region37: #{wrapper_inception_v3.1} parent=5 // pred_check
        _
      $region38: #{wrapper_inception_v3.1} parent=5 // pred_check_branch
        %194 = sbr.rel (%p191) target = $region40
      $region39: #{wrapper_inception_v3.1} parent=5 // pred_region
        %s195 = ssub.s32 %s14, 1
        %p196 = scmp.lt.s32.totalorder %s19, 1
        %s197 = scalar_select %p196, %s19, 1
        %s198 = smul.addr %s197, 32
        %s199 = smul.addr %s198, 8
        %s200 = scalar_lea.vmem %s0, %s199
        %p201 = pneg %p40
        %p202 = pneg %p37
        %p203 = pneg %p61
        %p204 = pneg %p58
        %p205 = pneg %p82
        %p206 = pneg %p79
        %p207 = pneg %p103
        %p208 = pneg %p100
        %p209 = pneg %p124
        %p210 = pneg %p121
        %p211 = pneg %p150
        %p212 = pneg %p147
        %s213 = sand.u32 %s137, 1
        %s214 = scalar_lea.sflag [#allocation5], %s213
        %s215 = sand.u32 %s137, 1
        %s216 = scalar_lea.vmem [#allocation4], %s215
        %p217 = scmp.lt.s32.totalorder %s19, 1
        %s218 = scalar_select %p217, %s19, 1
        %s219 = smul.addr %s218, 32
        %s220 = smul.addr %s219, 8
        %s221 = scalar_lea.vmem %s0, %s220
        %vm223 = vcmask 31744
        %224 = vst.msk [vmem:[#allocation2] sm:$0xff] %vm223, 0.0
        %225 = vst.msk [vmem:[#allocation2 + $0x8] sm:$0xff] %vm223, 0.0
        %vm226 = vcmask 25600
        %227 = vst.msk [vmem:[#allocation2 + $0x10] sm:$0x3] %vm226, 0.0
        %s228 = scalar_lea.vmem [#allocation2], 408
        %229 = vst.msk [vmem:[%s228] sm:$0xff] %vm223, 0.0
        %230 = vst.msk [vmem:[%s228 + $0x8] sm:$0xff] %vm223, 0.0
        %231 = vst.msk [vmem:[%s228 + $0x10] sm:$0x3] %vm226, 0.0
        %vm232 = vcmask 24576
        %233 = vst.msk [vmem:[#allocation2] sm:$0x1] %vm232, 0.0
        %234 = vst.msk [vmem:[#allocation2 + $0x18] sm:$0x1] %vm232, 0.0
        %235 = vst.msk [vmem:[#allocation2 + $0x30] sm:$0x1] %vm232, 0.0
        %236 = vst.msk [vmem:[#allocation2 + $0x48] sm:$0x1] %vm232, 0.0
        %237 = vst.msk [vmem:[#allocation2 + $0x60] sm:$0x1] %vm232, 0.0
        %238 = vst.msk [vmem:[#allocation2 + $0x78] sm:$0x1] %vm232, 0.0
        %239 = vst.msk [vmem:[#allocation2 + $0x90] sm:$0x1] %vm232, 0.0
        %240 = vst.msk [vmem:[#allocation2 + $0xa8] sm:$0x1] %vm232, 0.0
        %241 = vst.msk [vmem:[#allocation2 + $0xc0] sm:$0x1] %vm232, 0.0
        %242 = vst.msk [vmem:[#allocation2 + $0xd8] sm:$0x1] %vm232, 0.0
        %243 = vst.msk [vmem:[#allocation2 + $0xf0] sm:$0x1] %vm232, 0.0
        %244 = vst.msk [vmem:[#allocation2 + $0x108] sm:$0x1] %vm232, 0.0
        %245 = vst.msk [vmem:[#allocation2 + $0x120] sm:$0x1] %vm232, 0.0
        %246 = vst.msk [vmem:[#allocation2 + $0x138] sm:$0x1] %vm232, 0.0
        %247 = vst.msk [vmem:[#allocation2 + $0x150] sm:$0x1] %vm232, 0.0
        %248 = vst.msk [vmem:[#allocation2 + $0x168] sm:$0x1] %vm232, 0.0
        %249 = vst.msk [vmem:[#allocation2 + $0x180] sm:$0x1] %vm232, 0.0
        %250 = vst.msk [vmem:[#allocation2 + $0x198] sm:$0x1] %vm232, 0.0
        %251 = vst.msk [vmem:[#allocation2 + $0x11] sm:$0x1] %vm232, 0.0
        %252 = vst.msk [vmem:[#allocation2 + $0x29] sm:$0x1] %vm232, 0.0
        %253 = vst.msk [vmem:[#allocation2 + $0x41] sm:$0x1] %vm232, 0.0
        %254 = vst.msk [vmem:[#allocation2 + $0x59] sm:$0x1] %vm232, 0.0
        %255 = vst.msk [vmem:[#allocation2 + $0x71] sm:$0x1] %vm232, 0.0
        %256 = vst.msk [vmem:[#allocation2 + $0x89] sm:$0x1] %vm232, 0.0
        %257 = vst.msk [vmem:[#allocation2 + $0xa1] sm:$0x1] %vm232, 0.0
        %258 = vst.msk [vmem:[#allocation2 + $0xb9] sm:$0x1] %vm232, 0.0
        %259 = vst.msk [vmem:[#allocation2 + $0xd1] sm:$0x1] %vm232, 0.0
        %260 = vst.msk [vmem:[#allocation2 + $0xe9] sm:$0x1] %vm232, 0.0
        %261 = vst.msk [vmem:[#allocation2 + $0x101] sm:$0x1] %vm232, 0.0
        %262 = vst.msk [vmem:[#allocation2 + $0x119] sm:$0x1] %vm232, 0.0
        %263 = vst.msk [vmem:[#allocation2 + $0x131] sm:$0x1] %vm232, 0.0
        %264 = vst.msk [vmem:[#allocation2 + $0x149] sm:$0x1] %vm232, 0.0
        %265 = vst.msk [vmem:[#allocation2 + $0x161] sm:$0x1] %vm232, 0.0
        %266 = vst.msk [vmem:[#allocation2 + $0x179] sm:$0x1] %vm232, 0.0
        %267 = vst.msk [vmem:[#allocation2 + $0x191] sm:$0x1] %vm232, 0.0
        %268 = vst.msk [vmem:[#allocation2 + $0x1a9] sm:$0x1] %vm232, 0.0
        %v269 = vld [vmem:[%s221] sm:$0xff]
        %v270 = vld [vmem:[%s221 + $0x8] sm:$0xff]
        %v271 = vld [vmem:[%s221 + $0x10] sm:$0xff]
        %v272 = vld [vmem:[%s221 + $0x18] sm:$0xff]
        %v273 = vld [vmem:[%s221 + $0x20] sm:$0xff]
        %v274 = vld [vmem:[%s221 + $0x28] sm:$0xff]
        %v275 = vld [vmem:[%s221 + $0x30] sm:$0xff]
        %v276 = vld [vmem:[%s221 + $0x38] sm:$0xff]
        %v277 = vld [vmem:[%s221 + $0x40] sm:$0xff]
        %v278 = vld [vmem:[%s221 + $0x48] sm:$0xff]
        %v279 = vld [vmem:[%s221 + $0x50] sm:$0xff]
        %v280 = vld [vmem:[%s221 + $0x58] sm:$0xff]
        %v281 = vld [vmem:[%s221 + $0x60] sm:$0xff]
        %v282 = vld [vmem:[%s221 + $0x68] sm:$0xff]
        %v283 = vld [vmem:[%s221 + $0x70] sm:$0xff]
        %v284 = vld [vmem:[%s221 + $0x78] sm:$0xff]
        %v285 = vld [vmem:[%s221 + $0x80] sm:$0xff]
        %v286 = vld [vmem:[%s221 + $0x88] sm:$0xff]
        %v287 = vld [vmem:[%s221 + $0x90] sm:$0xff]
        %v288 = vld [vmem:[%s221 + $0x98] sm:$0xff]
        %v289 = vld [vmem:[%s221 + $0xa0] sm:$0xff]
        %v290 = vld [vmem:[%s221 + $0xa8] sm:$0xff]
        %v291 = vld [vmem:[%s221 + $0xb0] sm:$0xff]
        %v292 = vld [vmem:[%s221 + $0xb8] sm:$0xff]
        %v293 = vld [vmem:[%s221 + $0xc0] sm:$0xff]
        %v294 = vld [vmem:[%s221 + $0xc8] sm:$0xff]
        %v295 = vld [vmem:[%s221 + $0xd0] sm:$0xff]
        %v296 = vld [vmem:[%s221 + $0xd8] sm:$0xff]
        %v297 = vld [vmem:[%s221 + $0xe0] sm:$0xff]
        %v298 = vld [vmem:[%s221 + $0xe8] sm:$0xff]
        %v299 = vld [vmem:[%s221 + $0xf0] sm:$0xff]
        %v300 = vld [vmem:[%s221 + $0xf8] sm:$0xff]
        %s301 = scalar_lea.vmem [#allocation2], 24
        %302 = vst.msk [vmem:[%s301 + $0x1] sm:$0xff] %vm223, %v269
        %303 = vst.msk [vmem:[%s301 + $0x9] sm:$0xff] %vm223, %v270
        %304 = vst.msk [vmem:[%s301 + $0x19] sm:$0xff] %vm223, %v271
        %305 = vst.msk [vmem:[%s301 + $0x21] sm:$0xff] %vm223, %v272
        %306 = vst.msk [vmem:[%s301 + $0x31] sm:$0xff] %vm223, %v273
        %307 = vst.msk [vmem:[%s301 + $0x39] sm:$0xff] %vm223, %v274
        %308 = vst.msk [vmem:[%s301 + $0x49] sm:$0xff] %vm223, %v275
        %309 = vst.msk [vmem:[%s301 + $0x51] sm:$0xff] %vm223, %v276
        %310 = vst.msk [vmem:[%s301 + $0x61] sm:$0xff] %vm223, %v277
        %311 = vst.msk [vmem:[%s301 + $0x69] sm:$0xff] %vm223, %v278
        %312 = vst.msk [vmem:[%s301 + $0x79] sm:$0xff] %vm223, %v279
        %313 = vst.msk [vmem:[%s301 + $0x81] sm:$0xff] %vm223, %v280
        %314 = vst.msk [vmem:[%s301 + $0x91] sm:$0xff] %vm223, %v281
        %315 = vst.msk [vmem:[%s301 + $0x99] sm:$0xff] %vm223, %v282
        %316 = vst.msk [vmem:[%s301 + $0xa9] sm:$0xff] %vm223, %v283
        %317 = vst.msk [vmem:[%s301 + $0xb1] sm:$0xff] %vm223, %v284
        %318 = vst.msk [vmem:[%s301 + $0xc1] sm:$0xff] %vm223, %v285
        %319 = vst.msk [vmem:[%s301 + $0xc9] sm:$0xff] %vm223, %v286
        %320 = vst.msk [vmem:[%s301 + $0xd9] sm:$0xff] %vm223, %v287
        %321 = vst.msk [vmem:[%s301 + $0xe1] sm:$0xff] %vm223, %v288
        %322 = vst.msk [vmem:[%s301 + $0xf1] sm:$0xff] %vm223, %v289
        %323 = vst.msk [vmem:[%s301 + $0xf9] sm:$0xff] %vm223, %v290
        %324 = vst.msk [vmem:[%s301 + $0x109] sm:$0xff] %vm223, %v291
        %325 = vst.msk [vmem:[%s301 + $0x111] sm:$0xff] %vm223, %v292
        %326 = vst.msk [vmem:[%s301 + $0x121] sm:$0xff] %vm223, %v293
        %327 = vst.msk [vmem:[%s301 + $0x129] sm:$0xff] %vm223, %v294
        %328 = vst.msk [vmem:[%s301 + $0x139] sm:$0xff] %vm223, %v295
        %329 = vst.msk [vmem:[%s301 + $0x141] sm:$0xff] %vm223, %v296
        %330 = vst.msk [vmem:[%s301 + $0x151] sm:$0xff] %vm223, %v297
        %331 = vst.msk [vmem:[%s301 + $0x159] sm:$0xff] %vm223, %v298
        %332 = vst.msk [vmem:[%s301 + $0x169] sm:$0xff] %vm223, %v299
        %333 = vst.msk [vmem:[%s301 + $0x171] sm:$0xff] %vm223, %v300
        %v334 = vld [vmem:[#allocation2] sm:$0xff]
        %v335 = vld [vmem:[#allocation2 + $0x8] sm:$0xff]
        %v336 = vld [vmem:[#allocation2 + $0x18] sm:$0xff]
        %v337 = vld [vmem:[#allocation2 + $0x20] sm:$0xff]
        %v338 = vld [vmem:[#allocation2 + $0x30] sm:$0xff]
        %v339 = vld [vmem:[#allocation2 + $0x38] sm:$0xff]
        %v340 = vld [vmem:[#allocation2 + $0x48] sm:$0xff]
        %v341 = vld [vmem:[#allocation2 + $0x50] sm:$0xff]
        %v342 = vld [vmem:[#allocation2 + $0x60] sm:$0xff]
        %v343 = vld [vmem:[#allocation2 + $0x68] sm:$0xff]
        %v344 = vld [vmem:[#allocation2 + $0x78] sm:$0xff]
        %v345 = vld [vmem:[#allocation2 + $0x80] sm:$0xff]
        %v346 = vld [vmem:[#allocation2 + $0x90] sm:$0xff]
        %v347 = vld [vmem:[#allocation2 + $0x98] sm:$0xff]
        %v348 = vld [vmem:[#allocation2 + $0xa8] sm:$0xff]
        %v349 = vld [vmem:[#allocation2 + $0xb0] sm:$0xff]
        %v350 = vld [vmem:[#allocation2 + $0xc0] sm:$0xff]
        %v351 = vld [vmem:[#allocation2 + $0xc8] sm:$0xff]
        %v352 = vld [vmem:[#allocation2 + $0xd8] sm:$0xff]
        %v353 = vld [vmem:[#allocation2 + $0xe0] sm:$0xff]
        %v354 = vld [vmem:[#allocation2 + $0xf0] sm:$0xff]
        %v355 = vld [vmem:[#allocation2 + $0xf8] sm:$0xff]
        %v356 = vld [vmem:[#allocation2 + $0x108] sm:$0xff]
        %v357 = vld [vmem:[#allocation2 + $0x110] sm:$0xff]
        %v358 = vld [vmem:[#allocation2 + $0x120] sm:$0xff]
        %v359 = vld [vmem:[#allocation2 + $0x128] sm:$0xff]
        %v360 = vld [vmem:[#allocation2 + $0x138] sm:$0xff]
        %v361 = vld [vmem:[#allocation2 + $0x140] sm:$0xff]
        %v362 = vld [vmem:[#allocation2 + $0x150] sm:$0xff]
        %v363 = vld [vmem:[#allocation2 + $0x158] sm:$0xff]
        %v364 = vld [vmem:[#allocation2 + $0x168] sm:$0xff]
        %v365 = vld [vmem:[#allocation2 + $0x170] sm:$0xff]
        %v366 = vld [vmem:[#allocation2 + $0x1] sm:$0xff]
        %v367 = vld [vmem:[#allocation2 + $0x9] sm:$0xff]
        %v368 = vld [vmem:[#allocation2 + $0x19] sm:$0xff]
        %v369 = vld [vmem:[#allocation2 + $0x21] sm:$0xff]
        %v370 = vld [vmem:[#allocation2 + $0x31] sm:$0xff]
        %v371 = vld [vmem:[#allocation2 + $0x39] sm:$0xff]
        %v372 = vld [vmem:[#allocation2 + $0x49] sm:$0xff]
        %v373 = vld [vmem:[#allocation2 + $0x51] sm:$0xff]
        %v374 = vld [vmem:[#allocation2 + $0x61] sm:$0xff]
        %v375 = vld [vmem:[#allocation2 + $0x69] sm:$0xff]
        %v376 = vld [vmem:[#allocation2 + $0x79] sm:$0xff]
        %v377 = vld [vmem:[#allocation2 + $0x81] sm:$0xff]
        %v378 = vld [vmem:[#allocation2 + $0x91] sm:$0xff]
        %v379 = vld [vmem:[#allocation2 + $0x99] sm:$0xff]
        %v380 = vld [vmem:[#allocation2 + $0xa9] sm:$0xff]
        %v381 = vld [vmem:[#allocation2 + $0xb1] sm:$0xff]
        %v382 = vld [vmem:[#allocation2 + $0xc1] sm:$0xff]
        %v383 = vld [vmem:[#allocation2 + $0xc9] sm:$0xff]
        %v384 = vld [vmem:[#allocation2 + $0xd9] sm:$0xff]
        %v385 = vld [vmem:[#allocation2 + $0xe1] sm:$0xff]
        %v386 = vld [vmem:[#allocation2 + $0xf1] sm:$0xff]
        %v387 = vld [vmem:[#allocation2 + $0xf9] sm:$0xff]
        %v388 = vld [vmem:[#allocation2 + $0x109] sm:$0xff]
        %v389 = vld [vmem:[#allocation2 + $0x111] sm:$0xff]
        %v390 = vld [vmem:[#allocation2 + $0x121] sm:$0xff]
        %v391 = vld [vmem:[#allocation2 + $0x129] sm:$0xff]
        %v392 = vld [vmem:[#allocation2 + $0x139] sm:$0xff]
        %v393 = vld [vmem:[#allocation2 + $0x141] sm:$0xff]
        %v394 = vld [vmem:[#allocation2 + $0x151] sm:$0xff]
        %v395 = vld [vmem:[#allocation2 + $0x159] sm:$0xff]
        %v396 = vld [vmem:[#allocation2 + $0x169] sm:$0xff]
        %v397 = vld [vmem:[#allocation2 + $0x171] sm:$0xff]
        %v398 = vld [vmem:[#allocation2 + $0x2] sm:$0xff]
        %v399 = vld [vmem:[#allocation2 + $0xa] sm:$0xff]
        %v400 = vld [vmem:[#allocation2 + $0x1a] sm:$0xff]
        %v401 = vld [vmem:[#allocation2 + $0x22] sm:$0xff]
        %v402 = vld [vmem:[#allocation2 + $0x32] sm:$0xff]
        %v403 = vld [vmem:[#allocation2 + $0x3a] sm:$0xff]
        %v404 = vld [vmem:[#allocation2 + $0x4a] sm:$0xff]
        %v405 = vld [vmem:[#allocation2 + $0x52] sm:$0xff]
        %v406 = vld [vmem:[#allocation2 + $0x62] sm:$0xff]
        %v407 = vld [vmem:[#allocation2 + $0x6a] sm:$0xff]
        %v408 = vld [vmem:[#allocation2 + $0x7a] sm:$0xff]
        %v409 = vld [vmem:[#allocation2 + $0x82] sm:$0xff]
        %v410 = vld [vmem:[#allocation2 + $0x92] sm:$0xff]
        %v411 = vld [vmem:[#allocation2 + $0x9a] sm:$0xff]
        %v412 = vld [vmem:[#allocation2 + $0xaa] sm:$0xff]
        %v413 = vld [vmem:[#allocation2 + $0xb2] sm:$0xff]
        %v414 = vld [vmem:[#allocation2 + $0xc2] sm:$0xff]
        %v415 = vld [vmem:[#allocation2 + $0xca] sm:$0xff]
        %v416 = vld [vmem:[#allocation2 + $0xda] sm:$0xff]
        %v417 = vld [vmem:[#allocation2 + $0xe2] sm:$0xff]
        %v418 = vld [vmem:[#allocation2 + $0xf2] sm:$0xff]
        %v419 = vld [vmem:[#allocation2 + $0xfa] sm:$0xff]
        %v420 = vld [vmem:[#allocation2 + $0x10a] sm:$0xff]
        %v421 = vld [vmem:[#allocation2 + $0x112] sm:$0xff]
        %v422 = vld [vmem:[#allocation2 + $0x122] sm:$0xff]
        %v423 = vld [vmem:[#allocation2 + $0x12a] sm:$0xff]
        %v424 = vld [vmem:[#allocation2 + $0x13a] sm:$0xff]
        %v425 = vld [vmem:[#allocation2 + $0x142] sm:$0xff]
        %v426 = vld [vmem:[#allocation2 + $0x152] sm:$0xff]
        %v427 = vld [vmem:[#allocation2 + $0x15a] sm:$0xff]
        %v428 = vld [vmem:[#allocation2 + $0x16a] sm:$0xff]
        %v429 = vld [vmem:[#allocation2 + $0x172] sm:$0xff]
        %v430 = vld [vmem:[%s301] sm:$0xff]
        %v431 = vld [vmem:[%s301 + $0x8] sm:$0xff]
        %v432 = vld [vmem:[%s301 + $0x18] sm:$0xff]
        %v433 = vld [vmem:[%s301 + $0x20] sm:$0xff]
        %v434 = vld [vmem:[%s301 + $0x30] sm:$0xff]
        %v435 = vld [vmem:[%s301 + $0x38] sm:$0xff]
        %v436 = vld [vmem:[%s301 + $0x48] sm:$0xff]
        %v437 = vld [vmem:[%s301 + $0x50] sm:$0xff]
        %v438 = vld [vmem:[%s301 + $0x60] sm:$0xff]
        %v439 = vld [vmem:[%s301 + $0x68] sm:$0xff]
        %v440 = vld [vmem:[%s301 + $0x78] sm:$0xff]
        %v441 = vld [vmem:[%s301 + $0x80] sm:$0xff]
        %v442 = vld [vmem:[%s301 + $0x90] sm:$0xff]
        %v443 = vld [vmem:[%s301 + $0x98] sm:$0xff]
        %v444 = vld [vmem:[%s301 + $0xa8] sm:$0xff]
        %v445 = vld [vmem:[%s301 + $0xb0] sm:$0xff]
        %v446 = vld [vmem:[%s301 + $0xc0] sm:$0xff]
        %v447 = vld [vmem:[%s301 + $0xc8] sm:$0xff]
        %v448 = vld [vmem:[%s301 + $0xd8] sm:$0xff]
        %v449 = vld [vmem:[%s301 + $0xe0] sm:$0xff]
        %v450 = vld [vmem:[%s301 + $0xf0] sm:$0xff]
        %v451 = vld [vmem:[%s301 + $0xf8] sm:$0xff]
        %v452 = vld [vmem:[%s301 + $0x108] sm:$0xff]
        %v453 = vld [vmem:[%s301 + $0x110] sm:$0xff]
        %v454 = vld [vmem:[%s301 + $0x120] sm:$0xff]
        %v455 = vld [vmem:[%s301 + $0x128] sm:$0xff]
        %v456 = vld [vmem:[%s301 + $0x138] sm:$0xff]
        %v457 = vld [vmem:[%s301 + $0x140] sm:$0xff]
        %v458 = vld [vmem:[%s301 + $0x150] sm:$0xff]
        %v459 = vld [vmem:[%s301 + $0x158] sm:$0xff]
        %v460 = vld [vmem:[%s301 + $0x168] sm:$0xff]
        %v461 = vld [vmem:[%s301 + $0x170] sm:$0xff]
        %v462 = vld [vmem:[%s301 + $0x1] sm:$0xff]
        %v463 = vld [vmem:[%s301 + $0x9] sm:$0xff]
        %v464 = vld [vmem:[%s301 + $0x19] sm:$0xff]
        %v465 = vld [vmem:[%s301 + $0x21] sm:$0xff]
        %v466 = vld [vmem:[%s301 + $0x31] sm:$0xff]
        %v467 = vld [vmem:[%s301 + $0x39] sm:$0xff]
        %v468 = vld [vmem:[%s301 + $0x49] sm:$0xff]
        %v469 = vld [vmem:[%s301 + $0x51] sm:$0xff]
        %v470 = vld [vmem:[%s301 + $0x61] sm:$0xff]
        %v471 = vld [vmem:[%s301 + $0x69] sm:$0xff]
        %v472 = vld [vmem:[%s301 + $0x79] sm:$0xff]
        %v473 = vld [vmem:[%s301 + $0x81] sm:$0xff]
        %v474 = vld [vmem:[%s301 + $0x91] sm:$0xff]
        %v475 = vld [vmem:[%s301 + $0x99] sm:$0xff]
        %v476 = vld [vmem:[%s301 + $0xa9] sm:$0xff]
        %v477 = vld [vmem:[%s301 + $0xb1] sm:$0xff]
        %v478 = vld [vmem:[%s301 + $0xc1] sm:$0xff]
        %v479 = vld [vmem:[%s301 + $0xc9] sm:$0xff]
        %v480 = vld [vmem:[%s301 + $0xd9] sm:$0xff]
        %v481 = vld [vmem:[%s301 + $0xe1] sm:$0xff]
        %v482 = vld [vmem:[%s301 + $0xf1] sm:$0xff]
        %v483 = vld [vmem:[%s301 + $0xf9] sm:$0xff]
        %v484 = vld [vmem:[%s301 + $0x109] sm:$0xff]
        %v485 = vld [vmem:[%s301 + $0x111] sm:$0xff]
        %v486 = vld [vmem:[%s301 + $0x121] sm:$0xff]
        %v487 = vld [vmem:[%s301 + $0x129] sm:$0xff]
        %v488 = vld [vmem:[%s301 + $0x139] sm:$0xff]
        %v489 = vld [vmem:[%s301 + $0x141] sm:$0xff]
        %v490 = vld [vmem:[%s301 + $0x151] sm:$0xff]
        %v491 = vld [vmem:[%s301 + $0x159] sm:$0xff]
        %v492 = vld [vmem:[%s301 + $0x169] sm:$0xff]
        %v493 = vld [vmem:[%s301 + $0x171] sm:$0xff]
        %v494 = vld [vmem:[%s301 + $0x2] sm:$0xff]
        %v495 = vld [vmem:[%s301 + $0xa] sm:$0xff]
        %v496 = vld [vmem:[%s301 + $0x1a] sm:$0xff]
        %v497 = vld [vmem:[%s301 + $0x22] sm:$0xff]
        %v498 = vld [vmem:[%s301 + $0x32] sm:$0xff]
        %v499 = vld [vmem:[%s301 + $0x3a] sm:$0xff]
        %v500 = vld [vmem:[%s301 + $0x4a] sm:$0xff]
        %v501 = vld [vmem:[%s301 + $0x52] sm:$0xff]
        %v502 = vld [vmem:[%s301 + $0x62] sm:$0xff]
        %v503 = vld [vmem:[%s301 + $0x6a] sm:$0xff]
        %v504 = vld [vmem:[%s301 + $0x7a] sm:$0xff]
        %v505 = vld [vmem:[%s301 + $0x82] sm:$0xff]
        %v506 = vld [vmem:[%s301 + $0x92] sm:$0xff]
        %v507 = vld [vmem:[%s301 + $0x9a] sm:$0xff]
        %v508 = vld [vmem:[%s301 + $0xaa] sm:$0xff]
        %v509 = vld [vmem:[%s301 + $0xb2] sm:$0xff]
        %v510 = vld [vmem:[%s301 + $0xc2] sm:$0xff]
        %v511 = vld [vmem:[%s301 + $0xca] sm:$0xff]
        %v512 = vld [vmem:[%s301 + $0xda] sm:$0xff]
        %v513 = vld [vmem:[%s301 + $0xe2] sm:$0xff]
        %v514 = vld [vmem:[%s301 + $0xf2] sm:$0xff]
        %v515 = vld [vmem:[%s301 + $0xfa] sm:$0xff]
        %v516 = vld [vmem:[%s301 + $0x10a] sm:$0xff]
        %v517 = vld [vmem:[%s301 + $0x112] sm:$0xff]
        %v518 = vld [vmem:[%s301 + $0x122] sm:$0xff]
        %v519 = vld [vmem:[%s301 + $0x12a] sm:$0xff]
        %v520 = vld [vmem:[%s301 + $0x13a] sm:$0xff]
        %v521 = vld [vmem:[%s301 + $0x142] sm:$0xff]
        %v522 = vld [vmem:[%s301 + $0x152] sm:$0xff]
        %v523 = vld [vmem:[%s301 + $0x15a] sm:$0xff]
        %v524 = vld [vmem:[%s301 + $0x16a] sm:$0xff]
        %v525 = vld [vmem:[%s301 + $0x172] sm:$0xff]
        %s526 = scalar_lea.vmem [#allocation2], 48
        %v527 = vld [vmem:[%s526] sm:$0xff]
        %v528 = vld [vmem:[%s526 + $0x8] sm:$0xff]
        %v529 = vld [vmem:[%s526 + $0x18] sm:$0xff]
        %v530 = vld [vmem:[%s526 + $0x20] sm:$0xff]
        %v531 = vld [vmem:[%s526 + $0x30] sm:$0xff]
        %v532 = vld [vmem:[%s526 + $0x38] sm:$0xff]
        %v533 = vld [vmem:[%s526 + $0x48] sm:$0xff]
        %v534 = vld [vmem:[%s526 + $0x50] sm:$0xff]
        %v535 = vld [vmem:[%s526 + $0x60] sm:$0xff]
        %v536 = vld [vmem:[%s526 + $0x68] sm:$0xff]
        %v537 = vld [vmem:[%s526 + $0x78] sm:$0xff]
        %v538 = vld [vmem:[%s526 + $0x80] sm:$0xff]
        %v539 = vld [vmem:[%s526 + $0x90] sm:$0xff]
        %v540 = vld [vmem:[%s526 + $0x98] sm:$0xff]
        %v541 = vld [vmem:[%s526 + $0xa8] sm:$0xff]
        %v542 = vld [vmem:[%s526 + $0xb0] sm:$0xff]
        %v543 = vld [vmem:[%s526 + $0xc0] sm:$0xff]
        %v544 = vld [vmem:[%s526 + $0xc8] sm:$0xff]
        %v545 = vld [vmem:[%s526 + $0xd8] sm:$0xff]
        %v546 = vld [vmem:[%s526 + $0xe0] sm:$0xff]
        %v547 = vld [vmem:[%s526 + $0xf0] sm:$0xff]
        %v548 = vld [vmem:[%s526 + $0xf8] sm:$0xff]
        %v549 = vld [vmem:[%s526 + $0x108] sm:$0xff]
        %v550 = vld [vmem:[%s526 + $0x110] sm:$0xff]
        %v551 = vld [vmem:[%s526 + $0x120] sm:$0xff]
        %v552 = vld [vmem:[%s526 + $0x128] sm:$0xff]
        %v553 = vld [vmem:[%s526 + $0x138] sm:$0xff]
        %v554 = vld [vmem:[%s526 + $0x140] sm:$0xff]
        %v555 = vld [vmem:[%s526 + $0x150] sm:$0xff]
        %v556 = vld [vmem:[%s526 + $0x158] sm:$0xff]
        %v557 = vld [vmem:[%s526 + $0x168] sm:$0xff]
        %v558 = vld [vmem:[%s526 + $0x170] sm:$0xff]
        %v559 = vld [vmem:[%s526 + $0x1] sm:$0xff]
        %v560 = vld [vmem:[%s526 + $0x9] sm:$0xff]
        %v561 = vld [vmem:[%s526 + $0x19] sm:$0xff]
        %v562 = vld [vmem:[%s526 + $0x21] sm:$0xff]
        %v563 = vld [vmem:[%s526 + $0x31] sm:$0xff]
        %v564 = vld [vmem:[%s526 + $0x39] sm:$0xff]
        %v565 = vld [vmem:[%s526 + $0x49] sm:$0xff]
        %v566 = vld [vmem:[%s526 + $0x51] sm:$0xff]
        %v567 = vld [vmem:[%s526 + $0x61] sm:$0xff]
        %v568 = vld [vmem:[%s526 + $0x69] sm:$0xff]
        %v569 = vld [vmem:[%s526 + $0x79] sm:$0xff]
        %v570 = vld [vmem:[%s526 + $0x81] sm:$0xff]
        %v571 = vld [vmem:[%s526 + $0x91] sm:$0xff]
        %v572 = vld [vmem:[%s526 + $0x99] sm:$0xff]
        %v573 = vld [vmem:[%s526 + $0xa9] sm:$0xff]
        %v574 = vld [vmem:[%s526 + $0xb1] sm:$0xff]
        %v575 = vld [vmem:[%s526 + $0xc1] sm:$0xff]
        %v576 = vld [vmem:[%s526 + $0xc9] sm:$0xff]
        %v577 = vld [vmem:[%s526 + $0xd9] sm:$0xff]
        %v578 = vld [vmem:[%s526 + $0xe1] sm:$0xff]
        %v579 = vld [vmem:[%s526 + $0xf1] sm:$0xff]
        %v580 = vld [vmem:[%s526 + $0xf9] sm:$0xff]
        %v581 = vld [vmem:[%s526 + $0x109] sm:$0xff]
        %v582 = vld [vmem:[%s526 + $0x111] sm:$0xff]
        %v583 = vld [vmem:[%s526 + $0x121] sm:$0xff]
        %v584 = vld [vmem:[%s526 + $0x129] sm:$0xff]
        %v585 = vld [vmem:[%s526 + $0x139] sm:$0xff]
        %v586 = vld [vmem:[%s526 + $0x141] sm:$0xff]
        %v587 = vld [vmem:[%s526 + $0x151] sm:$0xff]
        %v588 = vld [vmem:[%s526 + $0x159] sm:$0xff]
        %v589 = vld [vmem:[%s526 + $0x169] sm:$0xff]
        %v590 = vld [vmem:[%s526 + $0x171] sm:$0xff]
        %v591 = vld [vmem:[%s526 + $0x2] sm:$0xff]
        %v592 = vld [vmem:[%s526 + $0xa] sm:$0xff]
        %v593 = vld [vmem:[%s526 + $0x1a] sm:$0xff]
        %v594 = vld [vmem:[%s526 + $0x22] sm:$0xff]
        %v595 = vld [vmem:[%s526 + $0x32] sm:$0xff]
        %v596 = vld [vmem:[%s526 + $0x3a] sm:$0xff]
        %v597 = vld [vmem:[%s526 + $0x4a] sm:$0xff]
        %v598 = vld [vmem:[%s526 + $0x52] sm:$0xff]
        %v599 = vld [vmem:[%s526 + $0x62] sm:$0xff]
        %v600 = vld [vmem:[%s526 + $0x6a] sm:$0xff]
        %v601 = vld [vmem:[%s526 + $0x7a] sm:$0xff]
        %v602 = vld [vmem:[%s526 + $0x82] sm:$0xff]
        %v603 = vld [vmem:[%s526 + $0x92] sm:$0xff]
        %v604 = vld [vmem:[%s526 + $0x9a] sm:$0xff]
        %v605 = vld [vmem:[%s526 + $0xaa] sm:$0xff]
        %v606 = vld [vmem:[%s526 + $0xb2] sm:$0xff]
        %v607 = vld [vmem:[%s526 + $0xc2] sm:$0xff]
        %v608 = vld [vmem:[%s526 + $0xca] sm:$0xff]
        %v609 = vld [vmem:[%s526 + $0xda] sm:$0xff]
        %v610 = vld [vmem:[%s526 + $0xe2] sm:$0xff]
        %v611 = vld [vmem:[%s526 + $0xf2] sm:$0xff]
        %v612 = vld [vmem:[%s526 + $0xfa] sm:$0xff]
        %v613 = vld [vmem:[%s526 + $0x10a] sm:$0xff]
        %v614 = vld [vmem:[%s526 + $0x112] sm:$0xff]
        %v615 = vld [vmem:[%s526 + $0x122] sm:$0xff]
        %v616 = vld [vmem:[%s526 + $0x12a] sm:$0xff]
        %v617 = vld [vmem:[%s526 + $0x13a] sm:$0xff]
        %v618 = vld [vmem:[%s526 + $0x142] sm:$0xff]
        %v619 = vld [vmem:[%s526 + $0x152] sm:$0xff]
        %v620 = vld [vmem:[%s526 + $0x15a] sm:$0xff]
        %v621 = vld [vmem:[%s526 + $0x16a] sm:$0xff]
        %v622 = vld [vmem:[%s526 + $0x172] sm:$0xff]
        %655 = vrot.lane.b32.xlu0 %v366, 4
        %v656 = vpop.permute.xlu0 %655
        %657 = vrot.lane.b32.xlu0 %v367, 4
        %v658 = vpop.permute.xlu0 %657
        %659 = vrot.lane.b32.xlu0 %v368, 4
        %v660 = vpop.permute.xlu0 %659
        %661 = vrot.lane.b32.xlu0 %v369, 4
        %v662 = vpop.permute.xlu0 %661
        %663 = vrot.lane.b32.xlu0 %v370, 4
        %v664 = vpop.permute.xlu0 %663
        %665 = vrot.lane.b32.xlu0 %v371, 4
        %v666 = vpop.permute.xlu0 %665
        %667 = vrot.lane.b32.xlu0 %v372, 4
        %v668 = vpop.permute.xlu0 %667
        %669 = vrot.lane.b32.xlu0 %v373, 4
        %v670 = vpop.permute.xlu0 %669
        %671 = vrot.lane.b32.xlu0 %v374, 4
        %v672 = vpop.permute.xlu0 %671
        %673 = vrot.lane.b32.xlu0 %v375, 4
        %v674 = vpop.permute.xlu0 %673
        %675 = vrot.lane.b32.xlu0 %v376, 4
        %v676 = vpop.permute.xlu0 %675
        %677 = vrot.lane.b32.xlu0 %v377, 4
        %v678 = vpop.permute.xlu0 %677
        %679 = vrot.lane.b32.xlu0 %v378, 4
        %v680 = vpop.permute.xlu0 %679
        %681 = vrot.lane.b32.xlu0 %v379, 4
        %v682 = vpop.permute.xlu0 %681
        %683 = vrot.lane.b32.xlu0 %v380, 4
        %v684 = vpop.permute.xlu0 %683
        %685 = vrot.lane.b32.xlu0 %v381, 4
        %v686 = vpop.permute.xlu0 %685
        %687 = vrot.lane.b32.xlu0 %v382, 4
        %v688 = vpop.permute.xlu0 %687
        %689 = vrot.lane.b32.xlu0 %v383, 4
        %v690 = vpop.permute.xlu0 %689
        %691 = vrot.lane.b32.xlu0 %v384, 4
        %v692 = vpop.permute.xlu0 %691
        %693 = vrot.lane.b32.xlu0 %v385, 4
        %v694 = vpop.permute.xlu0 %693
        %695 = vrot.lane.b32.xlu0 %v386, 4
        %v696 = vpop.permute.xlu0 %695
        %697 = vrot.lane.b32.xlu0 %v387, 4
        %v698 = vpop.permute.xlu0 %697
        %699 = vrot.lane.b32.xlu0 %v388, 4
        %v700 = vpop.permute.xlu0 %699
        %701 = vrot.lane.b32.xlu0 %v389, 4
        %v702 = vpop.permute.xlu0 %701
        %703 = vrot.lane.b32.xlu0 %v390, 4
        %v704 = vpop.permute.xlu0 %703
        %705 = vrot.lane.b32.xlu0 %v391, 4
        %v706 = vpop.permute.xlu0 %705
        %707 = vrot.lane.b32.xlu0 %v392, 4
        %v708 = vpop.permute.xlu0 %707
        %709 = vrot.lane.b32.xlu0 %v393, 4
        %v710 = vpop.permute.xlu0 %709
        %711 = vrot.lane.b32.xlu0 %v394, 4
        %v712 = vpop.permute.xlu0 %711
        %713 = vrot.lane.b32.xlu0 %v395, 4
        %v714 = vpop.permute.xlu0 %713
        %715 = vrot.lane.b32.xlu0 %v396, 4
        %v716 = vpop.permute.xlu0 %715
        %717 = vrot.lane.b32.xlu0 %v397, 4
        %v718 = vpop.permute.xlu0 %717
        %783 = vrot.lane.b32.xlu0 %v398, 8
        %v784 = vpop.permute.xlu0 %783
        %785 = vrot.lane.b32.xlu0 %v399, 8
        %v786 = vpop.permute.xlu0 %785
        %787 = vrot.lane.b32.xlu0 %v400, 8
        %v788 = vpop.permute.xlu0 %787
        %789 = vrot.lane.b32.xlu0 %v401, 8
        %v790 = vpop.permute.xlu0 %789
        %791 = vrot.lane.b32.xlu0 %v402, 8
        %v792 = vpop.permute.xlu0 %791
        %793 = vrot.lane.b32.xlu0 %v403, 8
        %v794 = vpop.permute.xlu0 %793
        %795 = vrot.lane.b32.xlu0 %v404, 8
        %v796 = vpop.permute.xlu0 %795
        %797 = vrot.lane.b32.xlu0 %v405, 8
        %v798 = vpop.permute.xlu0 %797
        %799 = vrot.lane.b32.xlu0 %v406, 8
        %v800 = vpop.permute.xlu0 %799
        %801 = vrot.lane.b32.xlu0 %v407, 8
        %v802 = vpop.permute.xlu0 %801
        %803 = vrot.lane.b32.xlu0 %v408, 8
        %v804 = vpop.permute.xlu0 %803
        %805 = vrot.lane.b32.xlu0 %v409, 8
        %v806 = vpop.permute.xlu0 %805
        %807 = vrot.lane.b32.xlu0 %v410, 8
        %v808 = vpop.permute.xlu0 %807
        %809 = vrot.lane.b32.xlu0 %v411, 8
        %v810 = vpop.permute.xlu0 %809
        %811 = vrot.lane.b32.xlu0 %v412, 8
        %v812 = vpop.permute.xlu0 %811
        %813 = vrot.lane.b32.xlu0 %v413, 8
        %v814 = vpop.permute.xlu0 %813
        %815 = vrot.lane.b32.xlu0 %v414, 8
        %v816 = vpop.permute.xlu0 %815
        %817 = vrot.lane.b32.xlu0 %v415, 8
        %v818 = vpop.permute.xlu0 %817
        %819 = vrot.lane.b32.xlu0 %v416, 8
        %v820 = vpop.permute.xlu0 %819
        %821 = vrot.lane.b32.xlu0 %v417, 8
        %v822 = vpop.permute.xlu0 %821
        %823 = vrot.lane.b32.xlu0 %v418, 8
        %v824 = vpop.permute.xlu0 %823
        %825 = vrot.lane.b32.xlu0 %v419, 8
        %v826 = vpop.permute.xlu0 %825
        %827 = vrot.lane.b32.xlu0 %v420, 8
        %v828 = vpop.permute.xlu0 %827
        %829 = vrot.lane.b32.xlu0 %v421, 8
        %v830 = vpop.permute.xlu0 %829
        %831 = vrot.lane.b32.xlu0 %v422, 8
        %v832 = vpop.permute.xlu0 %831
        %833 = vrot.lane.b32.xlu0 %v423, 8
        %v834 = vpop.permute.xlu0 %833
        %835 = vrot.lane.b32.xlu0 %v424, 8
        %v836 = vpop.permute.xlu0 %835
        %837 = vrot.lane.b32.xlu0 %v425, 8
        %v838 = vpop.permute.xlu0 %837
        %839 = vrot.lane.b32.xlu0 %v426, 8
        %v840 = vpop.permute.xlu0 %839
        %841 = vrot.lane.b32.xlu0 %v427, 8
        %v842 = vpop.permute.xlu0 %841
        %843 = vrot.lane.b32.xlu0 %v428, 8
        %v844 = vpop.permute.xlu0 %843
        %845 = vrot.lane.b32.xlu0 %v429, 8
        %v846 = vpop.permute.xlu0 %845
        %911 = vrot.lane.b32.xlu0 %v430, 12
        %v912 = vpop.permute.xlu0 %911
        %913 = vrot.lane.b32.xlu0 %v431, 12
        %v914 = vpop.permute.xlu0 %913
        %915 = vrot.lane.b32.xlu0 %v432, 12
        %v916 = vpop.permute.xlu0 %915
        %917 = vrot.lane.b32.xlu0 %v433, 12
        %v918 = vpop.permute.xlu0 %917
        %919 = vrot.lane.b32.xlu0 %v434, 12
        %v920 = vpop.permute.xlu0 %919
        %921 = vrot.lane.b32.xlu0 %v435, 12
        %v922 = vpop.permute.xlu0 %921
        %923 = vrot.lane.b32.xlu0 %v436, 12
        %v924 = vpop.permute.xlu0 %923
        %925 = vrot.lane.b32.xlu0 %v437, 12
        %v926 = vpop.permute.xlu0 %925
        %927 = vrot.lane.b32.xlu0 %v438, 12
        %v928 = vpop.permute.xlu0 %927
        %929 = vrot.lane.b32.xlu0 %v439, 12
        %v930 = vpop.permute.xlu0 %929
        %931 = vrot.lane.b32.xlu0 %v440, 12
        %v932 = vpop.permute.xlu0 %931
        %933 = vrot.lane.b32.xlu0 %v441, 12
        %v934 = vpop.permute.xlu0 %933
        %935 = vrot.lane.b32.xlu0 %v442, 12
        %v936 = vpop.permute.xlu0 %935
        %937 = vrot.lane.b32.xlu0 %v443, 12
        %v938 = vpop.permute.xlu0 %937
        %939 = vrot.lane.b32.xlu0 %v444, 12
        %v940 = vpop.permute.xlu0 %939
        %941 = vrot.lane.b32.xlu0 %v445, 12
        %v942 = vpop.permute.xlu0 %941
        %943 = vrot.lane.b32.xlu0 %v446, 12
        %v944 = vpop.permute.xlu0 %943
        %945 = vrot.lane.b32.xlu0 %v447, 12
        %v946 = vpop.permute.xlu0 %945
        %947 = vrot.lane.b32.xlu0 %v448, 12
        %v948 = vpop.permute.xlu0 %947
        %949 = vrot.lane.b32.xlu0 %v449, 12
        %v950 = vpop.permute.xlu0 %949
        %951 = vrot.lane.b32.xlu0 %v450, 12
        %v952 = vpop.permute.xlu0 %951
        %953 = vrot.lane.b32.xlu0 %v451, 12
        %v954 = vpop.permute.xlu0 %953
        %955 = vrot.lane.b32.xlu0 %v452, 12
        %v956 = vpop.permute.xlu0 %955
        %957 = vrot.lane.b32.xlu0 %v453, 12
        %v958 = vpop.permute.xlu0 %957
        %959 = vrot.lane.b32.xlu0 %v454, 12
        %v960 = vpop.permute.xlu0 %959
        %961 = vrot.lane.b32.xlu0 %v455, 12
        %v962 = vpop.permute.xlu0 %961
        %963 = vrot.lane.b32.xlu0 %v456, 12
        %v964 = vpop.permute.xlu0 %963
        %965 = vrot.lane.b32.xlu0 %v457, 12
        %v966 = vpop.permute.xlu0 %965
        %967 = vrot.lane.b32.xlu0 %v458, 12
        %v968 = vpop.permute.xlu0 %967
        %969 = vrot.lane.b32.xlu0 %v459, 12
        %v970 = vpop.permute.xlu0 %969
        %971 = vrot.lane.b32.xlu0 %v460, 12
        %v972 = vpop.permute.xlu0 %971
        %973 = vrot.lane.b32.xlu0 %v461, 12
        %v974 = vpop.permute.xlu0 %973
        %1039 = vrot.lane.b32.xlu0 %v462, 16
        %v1040 = vpop.permute.xlu0 %1039
        %1041 = vrot.lane.b32.xlu0 %v463, 16
        %v1042 = vpop.permute.xlu0 %1041
        %1043 = vrot.lane.b32.xlu0 %v464, 16
        %v1044 = vpop.permute.xlu0 %1043
        %1045 = vrot.lane.b32.xlu0 %v465, 16
        %v1046 = vpop.permute.xlu0 %1045
        %1047 = vrot.lane.b32.xlu0 %v466, 16
        %v1048 = vpop.permute.xlu0 %1047
        %1049 = vrot.lane.b32.xlu0 %v467, 16
        %v1050 = vpop.permute.xlu0 %1049
        %1051 = vrot.lane.b32.xlu0 %v468, 16
        %v1052 = vpop.permute.xlu0 %1051
        %1053 = vrot.lane.b32.xlu0 %v469, 16
        %v1054 = vpop.permute.xlu0 %1053
        %1055 = vrot.lane.b32.xlu0 %v470, 16
        %v1056 = vpop.permute.xlu0 %1055
        %1057 = vrot.lane.b32.xlu0 %v471, 16
        %v1058 = vpop.permute.xlu0 %1057
        %1059 = vrot.lane.b32.xlu0 %v472, 16
        %v1060 = vpop.permute.xlu0 %1059
        %1061 = vrot.lane.b32.xlu0 %v473, 16
        %v1062 = vpop.permute.xlu0 %1061
        %1063 = vrot.lane.b32.xlu0 %v474, 16
        %v1064 = vpop.permute.xlu0 %1063
        %1065 = vrot.lane.b32.xlu0 %v475, 16
        %v1066 = vpop.permute.xlu0 %1065
        %1067 = vrot.lane.b32.xlu0 %v476, 16
        %v1068 = vpop.permute.xlu0 %1067
        %1069 = vrot.lane.b32.xlu0 %v477, 16
        %v1070 = vpop.permute.xlu0 %1069
        %1071 = vrot.lane.b32.xlu0 %v478, 16
        %v1072 = vpop.permute.xlu0 %1071
        %1073 = vrot.lane.b32.xlu0 %v479, 16
        %v1074 = vpop.permute.xlu0 %1073
        %1075 = vrot.lane.b32.xlu0 %v480, 16
        %v1076 = vpop.permute.xlu0 %1075
        %1077 = vrot.lane.b32.xlu0 %v481, 16
        %v1078 = vpop.permute.xlu0 %1077
        %1079 = vrot.lane.b32.xlu0 %v482, 16
        %v1080 = vpop.permute.xlu0 %1079
        %1081 = vrot.lane.b32.xlu0 %v483, 16
        %v1082 = vpop.permute.xlu0 %1081
        %1083 = vrot.lane.b32.xlu0 %v484, 16
        %v1084 = vpop.permute.xlu0 %1083
        %1085 = vrot.lane.b32.xlu0 %v485, 16
        %v1086 = vpop.permute.xlu0 %1085
        %1087 = vrot.lane.b32.xlu0 %v486, 16
        %v1088 = vpop.permute.xlu0 %1087
        %1089 = vrot.lane.b32.xlu0 %v487, 16
        %v1090 = vpop.permute.xlu0 %1089
        %1091 = vrot.lane.b32.xlu0 %v488, 16
        %v1092 = vpop.permute.xlu0 %1091
        %1093 = vrot.lane.b32.xlu0 %v489, 16
        %v1094 = vpop.permute.xlu0 %1093
        %1095 = vrot.lane.b32.xlu0 %v490, 16
        %v1096 = vpop.permute.xlu0 %1095
        %1097 = vrot.lane.b32.xlu0 %v491, 16
        %v1098 = vpop.permute.xlu0 %1097
        %1099 = vrot.lane.b32.xlu0 %v492, 16
        %v1100 = vpop.permute.xlu0 %1099
        %1101 = vrot.lane.b32.xlu0 %v493, 16
        %v1102 = vpop.permute.xlu0 %1101
        %1167 = vrot.lane.b32.xlu0 %v494, 20
        %v1168 = vpop.permute.xlu0 %1167
        %1169 = vrot.lane.b32.xlu0 %v495, 20
        %v1170 = vpop.permute.xlu0 %1169
        %1171 = vrot.lane.b32.xlu0 %v496, 20
        %v1172 = vpop.permute.xlu0 %1171
        %1173 = vrot.lane.b32.xlu0 %v497, 20
        %v1174 = vpop.permute.xlu0 %1173
        %1175 = vrot.lane.b32.xlu0 %v498, 20
        %v1176 = vpop.permute.xlu0 %1175
        %1177 = vrot.lane.b32.xlu0 %v499, 20
        %v1178 = vpop.permute.xlu0 %1177
        %1179 = vrot.lane.b32.xlu0 %v500, 20
        %v1180 = vpop.permute.xlu0 %1179
        %1181 = vrot.lane.b32.xlu0 %v501, 20
        %v1182 = vpop.permute.xlu0 %1181
        %1183 = vrot.lane.b32.xlu0 %v502, 20
        %v1184 = vpop.permute.xlu0 %1183
        %1185 = vrot.lane.b32.xlu0 %v503, 20
        %v1186 = vpop.permute.xlu0 %1185
        %1187 = vrot.lane.b32.xlu0 %v504, 20
        %v1188 = vpop.permute.xlu0 %1187
        %1189 = vrot.lane.b32.xlu0 %v505, 20
        %v1190 = vpop.permute.xlu0 %1189
        %1191 = vrot.lane.b32.xlu0 %v506, 20
        %v1192 = vpop.permute.xlu0 %1191
        %1193 = vrot.lane.b32.xlu0 %v507, 20
        %v1194 = vpop.permute.xlu0 %1193
        %1195 = vrot.lane.b32.xlu0 %v508, 20
        %v1196 = vpop.permute.xlu0 %1195
        %1197 = vrot.lane.b32.xlu0 %v509, 20
        %v1198 = vpop.permute.xlu0 %1197
        %1199 = vrot.lane.b32.xlu0 %v510, 20
        %v1200 = vpop.permute.xlu0 %1199
        %1201 = vrot.lane.b32.xlu0 %v511, 20
        %v1202 = vpop.permute.xlu0 %1201
        %1203 = vrot.lane.b32.xlu0 %v512, 20
        %v1204 = vpop.permute.xlu0 %1203
        %1205 = vrot.lane.b32.xlu0 %v513, 20
        %v1206 = vpop.permute.xlu0 %1205
        %1207 = vrot.lane.b32.xlu0 %v514, 20
        %v1208 = vpop.permute.xlu0 %1207
        %1209 = vrot.lane.b32.xlu0 %v515, 20
        %v1210 = vpop.permute.xlu0 %1209
        %1211 = vrot.lane.b32.xlu0 %v516, 20
        %v1212 = vpop.permute.xlu0 %1211
        %1213 = vrot.lane.b32.xlu0 %v517, 20
        %v1214 = vpop.permute.xlu0 %1213
        %1215 = vrot.lane.b32.xlu0 %v518, 20
        %v1216 = vpop.permute.xlu0 %1215
        %1217 = vrot.lane.b32.xlu0 %v519, 20
        %v1218 = vpop.permute.xlu0 %1217
        %1219 = vrot.lane.b32.xlu0 %v520, 20
        %v1220 = vpop.permute.xlu0 %1219
        %1221 = vrot.lane.b32.xlu0 %v521, 20
        %v1222 = vpop.permute.xlu0 %1221
        %1223 = vrot.lane.b32.xlu0 %v522, 20
        %v1224 = vpop.permute.xlu0 %1223
        %1225 = vrot.lane.b32.xlu0 %v523, 20
        %v1226 = vpop.permute.xlu0 %1225
        %1227 = vrot.lane.b32.xlu0 %v524, 20
        %v1228 = vpop.permute.xlu0 %1227
        %1229 = vrot.lane.b32.xlu0 %v525, 20
        %v1230 = vpop.permute.xlu0 %1229
        %1295 = vrot.lane.b32.xlu0 %v527, 24
        %v1296 = vpop.permute.xlu0 %1295
        %1297 = vrot.lane.b32.xlu0 %v528, 24
        %v1298 = vpop.permute.xlu0 %1297
        %1299 = vrot.lane.b32.xlu0 %v529, 24
        %v1300 = vpop.permute.xlu0 %1299
        %1301 = vrot.lane.b32.xlu0 %v530, 24
        %v1302 = vpop.permute.xlu0 %1301
        %1303 = vrot.lane.b32.xlu0 %v531, 24
        %v1304 = vpop.permute.xlu0 %1303
        %1305 = vrot.lane.b32.xlu0 %v532, 24
        %v1306 = vpop.permute.xlu0 %1305
        %1307 = vrot.lane.b32.xlu0 %v533, 24
        %v1308 = vpop.permute.xlu0 %1307
        %1309 = vrot.lane.b32.xlu0 %v534, 24
        %v1310 = vpop.permute.xlu0 %1309
        %1311 = vrot.lane.b32.xlu0 %v535, 24
        %v1312 = vpop.permute.xlu0 %1311
        %1313 = vrot.lane.b32.xlu0 %v536, 24
        %v1314 = vpop.permute.xlu0 %1313
        %1315 = vrot.lane.b32.xlu0 %v537, 24
        %v1316 = vpop.permute.xlu0 %1315
        %1317 = vrot.lane.b32.xlu0 %v538, 24
        %v1318 = vpop.permute.xlu0 %1317
        %1319 = vrot.lane.b32.xlu0 %v539, 24
        %v1320 = vpop.permute.xlu0 %1319
        %1321 = vrot.lane.b32.xlu0 %v540, 24
        %v1322 = vpop.permute.xlu0 %1321
        %1323 = vrot.lane.b32.xlu0 %v541, 24
        %v1324 = vpop.permute.xlu0 %1323
        %1325 = vrot.lane.b32.xlu0 %v542, 24
        %v1326 = vpop.permute.xlu0 %1325
        %1327 = vrot.lane.b32.xlu0 %v543, 24
        %v1328 = vpop.permute.xlu0 %1327
        %1329 = vrot.lane.b32.xlu0 %v544, 24
        %v1330 = vpop.permute.xlu0 %1329
        %1331 = vrot.lane.b32.xlu0 %v545, 24
        %v1332 = vpop.permute.xlu0 %1331
        %1333 = vrot.lane.b32.xlu0 %v546, 24
        %v1334 = vpop.permute.xlu0 %1333
        %1335 = vrot.lane.b32.xlu0 %v547, 24
        %v1336 = vpop.permute.xlu0 %1335
        %1337 = vrot.lane.b32.xlu0 %v548, 24
        %v1338 = vpop.permute.xlu0 %1337
        %1339 = vrot.lane.b32.xlu0 %v549, 24
        %v1340 = vpop.permute.xlu0 %1339
        %1341 = vrot.lane.b32.xlu0 %v550, 24
        %v1342 = vpop.permute.xlu0 %1341
        %1343 = vrot.lane.b32.xlu0 %v551, 24
        %v1344 = vpop.permute.xlu0 %1343
        %1345 = vrot.lane.b32.xlu0 %v552, 24
        %v1346 = vpop.permute.xlu0 %1345
        %1347 = vrot.lane.b32.xlu0 %v553, 24
        %v1348 = vpop.permute.xlu0 %1347
        %1349 = vrot.lane.b32.xlu0 %v554, 24
        %v1350 = vpop.permute.xlu0 %1349
        %1351 = vrot.lane.b32.xlu0 %v555, 24
        %v1352 = vpop.permute.xlu0 %1351
        %1353 = vrot.lane.b32.xlu0 %v556, 24
        %v1354 = vpop.permute.xlu0 %1353
        %1355 = vrot.lane.b32.xlu0 %v557, 24
        %v1356 = vpop.permute.xlu0 %1355
        %1357 = vrot.lane.b32.xlu0 %v558, 24
        %v1358 = vpop.permute.xlu0 %1357
        %1423 = vrot.lane.b32.xlu0 %v559, 28
        %v1424 = vpop.permute.xlu0 %1423
        %1425 = vrot.lane.b32.xlu0 %v560, 28
        %v1426 = vpop.permute.xlu0 %1425
        %1427 = vrot.lane.b32.xlu0 %v561, 28
        %v1428 = vpop.permute.xlu0 %1427
        %1429 = vrot.lane.b32.xlu0 %v562, 28
        %v1430 = vpop.permute.xlu0 %1429
        %1431 = vrot.lane.b32.xlu0 %v563, 28
        %v1432 = vpop.permute.xlu0 %1431
        %1433 = vrot.lane.b32.xlu0 %v564, 28
        %v1434 = vpop.permute.xlu0 %1433
        %1435 = vrot.lane.b32.xlu0 %v565, 28
        %v1436 = vpop.permute.xlu0 %1435
        %1437 = vrot.lane.b32.xlu0 %v566, 28
        %v1438 = vpop.permute.xlu0 %1437
        %1439 = vrot.lane.b32.xlu0 %v567, 28
        %v1440 = vpop.permute.xlu0 %1439
        %1441 = vrot.lane.b32.xlu0 %v568, 28
        %v1442 = vpop.permute.xlu0 %1441
        %1443 = vrot.lane.b32.xlu0 %v569, 28
        %v1444 = vpop.permute.xlu0 %1443
        %1445 = vrot.lane.b32.xlu0 %v570, 28
        %v1446 = vpop.permute.xlu0 %1445
        %1447 = vrot.lane.b32.xlu0 %v571, 28
        %v1448 = vpop.permute.xlu0 %1447
        %1449 = vrot.lane.b32.xlu0 %v572, 28
        %v1450 = vpop.permute.xlu0 %1449
        %1451 = vrot.lane.b32.xlu0 %v573, 28
        %v1452 = vpop.permute.xlu0 %1451
        %1453 = vrot.lane.b32.xlu0 %v574, 28
        %v1454 = vpop.permute.xlu0 %1453
        %1455 = vrot.lane.b32.xlu0 %v575, 28
        %v1456 = vpop.permute.xlu0 %1455
        %1457 = vrot.lane.b32.xlu0 %v576, 28
        %v1458 = vpop.permute.xlu0 %1457
        %1459 = vrot.lane.b32.xlu0 %v577, 28
        %v1460 = vpop.permute.xlu0 %1459
        %1461 = vrot.lane.b32.xlu0 %v578, 28
        %v1462 = vpop.permute.xlu0 %1461
        %1463 = vrot.lane.b32.xlu0 %v579, 28
        %v1464 = vpop.permute.xlu0 %1463
        %1465 = vrot.lane.b32.xlu0 %v580, 28
        %v1466 = vpop.permute.xlu0 %1465
        %1467 = vrot.lane.b32.xlu0 %v581, 28
        %v1468 = vpop.permute.xlu0 %1467
        %1469 = vrot.lane.b32.xlu0 %v582, 28
        %v1470 = vpop.permute.xlu0 %1469
        %1471 = vrot.lane.b32.xlu0 %v583, 28
        %v1472 = vpop.permute.xlu0 %1471
        %1473 = vrot.lane.b32.xlu0 %v584, 28
        %v1474 = vpop.permute.xlu0 %1473
        %1475 = vrot.lane.b32.xlu0 %v585, 28
        %v1476 = vpop.permute.xlu0 %1475
        %1477 = vrot.lane.b32.xlu0 %v586, 28
        %v1478 = vpop.permute.xlu0 %1477
        %1479 = vrot.lane.b32.xlu0 %v587, 28
        %v1480 = vpop.permute.xlu0 %1479
        %1481 = vrot.lane.b32.xlu0 %v588, 28
        %v1482 = vpop.permute.xlu0 %1481
        %1483 = vrot.lane.b32.xlu0 %v589, 28
        %v1484 = vpop.permute.xlu0 %1483
        %1485 = vrot.lane.b32.xlu0 %v590, 28
        %v1486 = vpop.permute.xlu0 %1485
        %1551 = vrot.lane.b32.xlu0 %v591, 32
        %v1552 = vpop.permute.xlu0 %1551
        %1553 = vrot.lane.b32.xlu0 %v592, 32
        %v1554 = vpop.permute.xlu0 %1553
        %1555 = vrot.lane.b32.xlu0 %v593, 32
        %v1556 = vpop.permute.xlu0 %1555
        %1557 = vrot.lane.b32.xlu0 %v594, 32
        %v1558 = vpop.permute.xlu0 %1557
        %1559 = vrot.lane.b32.xlu0 %v595, 32
        %v1560 = vpop.permute.xlu0 %1559
        %1561 = vrot.lane.b32.xlu0 %v596, 32
        %v1562 = vpop.permute.xlu0 %1561
        %1563 = vrot.lane.b32.xlu0 %v597, 32
        %v1564 = vpop.permute.xlu0 %1563
        %1565 = vrot.lane.b32.xlu0 %v598, 32
        %v1566 = vpop.permute.xlu0 %1565
        %1567 = vrot.lane.b32.xlu0 %v599, 32
        %v1568 = vpop.permute.xlu0 %1567
        %1569 = vrot.lane.b32.xlu0 %v600, 32
        %v1570 = vpop.permute.xlu0 %1569
        %1571 = vrot.lane.b32.xlu0 %v601, 32
        %v1572 = vpop.permute.xlu0 %1571
        %1573 = vrot.lane.b32.xlu0 %v602, 32
        %v1574 = vpop.permute.xlu0 %1573
        %1575 = vrot.lane.b32.xlu0 %v603, 32
        %v1576 = vpop.permute.xlu0 %1575
        %1577 = vrot.lane.b32.xlu0 %v604, 32
        %v1578 = vpop.permute.xlu0 %1577
        %1579 = vrot.lane.b32.xlu0 %v605, 32
        %v1580 = vpop.permute.xlu0 %1579
        %1581 = vrot.lane.b32.xlu0 %v606, 32
        %v1582 = vpop.permute.xlu0 %1581
        %1583 = vrot.lane.b32.xlu0 %v607, 32
        %v1584 = vpop.permute.xlu0 %1583
        %1585 = vrot.lane.b32.xlu0 %v608, 32
        %v1586 = vpop.permute.xlu0 %1585
        %1587 = vrot.lane.b32.xlu0 %v609, 32
        %v1588 = vpop.permute.xlu0 %1587
        %1589 = vrot.lane.b32.xlu0 %v610, 32
        %v1590 = vpop.permute.xlu0 %1589
        %1591 = vrot.lane.b32.xlu0 %v611, 32
        %v1592 = vpop.permute.xlu0 %1591
        %1593 = vrot.lane.b32.xlu0 %v612, 32
        %v1594 = vpop.permute.xlu0 %1593
        %1595 = vrot.lane.b32.xlu0 %v613, 32
        %v1596 = vpop.permute.xlu0 %1595
        %1597 = vrot.lane.b32.xlu0 %v614, 32
        %v1598 = vpop.permute.xlu0 %1597
        %1599 = vrot.lane.b32.xlu0 %v615, 32
        %v1600 = vpop.permute.xlu0 %1599
        %1601 = vrot.lane.b32.xlu0 %v616, 32
        %v1602 = vpop.permute.xlu0 %1601
        %1603 = vrot.lane.b32.xlu0 %v617, 32
        %v1604 = vpop.permute.xlu0 %1603
        %1605 = vrot.lane.b32.xlu0 %v618, 32
        %v1606 = vpop.permute.xlu0 %1605
        %1607 = vrot.lane.b32.xlu0 %v619, 32
        %v1608 = vpop.permute.xlu0 %1607
        %1609 = vrot.lane.b32.xlu0 %v620, 32
        %v1610 = vpop.permute.xlu0 %1609
        %1611 = vrot.lane.b32.xlu0 %v621, 32
        %v1612 = vpop.permute.xlu0 %1611
        %1613 = vrot.lane.b32.xlu0 %v622, 32
        %v1614 = vpop.permute.xlu0 %1613
        %v1647 = vsel %vm223, %v334, %v656
        %v1648 = vsel %vm223, %v335, %v658
        %v1649 = vsel %vm223, %v336, %v660
        %v1650 = vsel %vm223, %v337, %v662
        %v1651 = vsel %vm223, %v338, %v664
        %v1652 = vsel %vm223, %v339, %v666
        %v1653 = vsel %vm223, %v340, %v668
        %v1654 = vsel %vm223, %v341, %v670
        %v1655 = vsel %vm223, %v342, %v672
        %v1656 = vsel %vm223, %v343, %v674
        %v1657 = vsel %vm223, %v344, %v676
        %v1658 = vsel %vm223, %v345, %v678
        %v1659 = vsel %vm223, %v346, %v680
        %v1660 = vsel %vm223, %v347, %v682
        %v1661 = vsel %vm223, %v348, %v684
        %v1662 = vsel %vm223, %v349, %v686
        %v1663 = vsel %vm223, %v350, %v688
        %v1664 = vsel %vm223, %v351, %v690
        %v1665 = vsel %vm223, %v352, %v692
        %v1666 = vsel %vm223, %v353, %v694
        %v1667 = vsel %vm223, %v354, %v696
        %v1668 = vsel %vm223, %v355, %v698
        %v1669 = vsel %vm223, %v356, %v700
        %v1670 = vsel %vm223, %v357, %v702
        %v1671 = vsel %vm223, %v358, %v704
        %v1672 = vsel %vm223, %v359, %v706
        %v1673 = vsel %vm223, %v360, %v708
        %v1674 = vsel %vm223, %v361, %v710
        %v1675 = vsel %vm223, %v362, %v712
        %v1676 = vsel %vm223, %v363, %v714
        %v1677 = vsel %vm223, %v364, %v716
        %v1678 = vsel %vm223, %v365, %v718
        %vm1679 = vcmask 64512
        %v1680 = vsel %vm1679, %v1647, %v784
        %v1681 = vsel %vm1679, %v1648, %v786
        %v1682 = vsel %vm1679, %v1649, %v788
        %v1683 = vsel %vm1679, %v1650, %v790
        %v1684 = vsel %vm1679, %v1651, %v792
        %v1685 = vsel %vm1679, %v1652, %v794
        %v1686 = vsel %vm1679, %v1653, %v796
        %v1687 = vsel %vm1679, %v1654, %v798
        %v1688 = vsel %vm1679, %v1655, %v800
        %v1689 = vsel %vm1679, %v1656, %v802
        %v1690 = vsel %vm1679, %v1657, %v804
        %v1691 = vsel %vm1679, %v1658, %v806
        %v1692 = vsel %vm1679, %v1659, %v808
        %v1693 = vsel %vm1679, %v1660, %v810
        %v1694 = vsel %vm1679, %v1661, %v812
        %v1695 = vsel %vm1679, %v1662, %v814
        %v1696 = vsel %vm1679, %v1663, %v816
        %v1697 = vsel %vm1679, %v1664, %v818
        %v1698 = vsel %vm1679, %v1665, %v820
        %v1699 = vsel %vm1679, %v1666, %v822
        %v1700 = vsel %vm1679, %v1667, %v824
        %v1701 = vsel %vm1679, %v1668, %v826
        %v1702 = vsel %vm1679, %v1669, %v828
        %v1703 = vsel %vm1679, %v1670, %v830
        %v1704 = vsel %vm1679, %v1671, %v832
        %v1705 = vsel %vm1679, %v1672, %v834
        %v1706 = vsel %vm1679, %v1673, %v836
        %v1707 = vsel %vm1679, %v1674, %v838
        %v1708 = vsel %vm1679, %v1675, %v840
        %v1709 = vsel %vm1679, %v1676, %v842
        %v1710 = vsel %vm1679, %v1677, %v844
        %v1711 = vsel %vm1679, %v1678, %v846
        %vm1712 = vcmask 97280
        %v1713 = vsel %vm1712, %v1680, %v912
        %v1714 = vsel %vm1712, %v1681, %v914
        %v1715 = vsel %vm1712, %v1682, %v916
        %v1716 = vsel %vm1712, %v1683, %v918
        %v1717 = vsel %vm1712, %v1684, %v920
        %v1718 = vsel %vm1712, %v1685, %v922
        %v1719 = vsel %vm1712, %v1686, %v924
        %v1720 = vsel %vm1712, %v1687, %v926
        %v1721 = vsel %vm1712, %v1688, %v928
        %v1722 = vsel %vm1712, %v1689, %v930
        %v1723 = vsel %vm1712, %v1690, %v932
        %v1724 = vsel %vm1712, %v1691, %v934
        %v1725 = vsel %vm1712, %v1692, %v936
        %v1726 = vsel %vm1712, %v1693, %v938
        %v1727 = vsel %vm1712, %v1694, %v940
        %v1728 = vsel %vm1712, %v1695, %v942
        %v1729 = vsel %vm1712, %v1696, %v944
        %v1730 = vsel %vm1712, %v1697, %v946
        %v1731 = vsel %vm1712, %v1698, %v948
        %v1732 = vsel %vm1712, %v1699, %v950
        %v1733 = vsel %vm1712, %v1700, %v952
        %v1734 = vsel %vm1712, %v1701, %v954
        %v1735 = vsel %vm1712, %v1702, %v956
        %v1736 = vsel %vm1712, %v1703, %v958
        %v1737 = vsel %vm1712, %v1704, %v960
        %v1738 = vsel %vm1712, %v1705, %v962
        %v1739 = vsel %vm1712, %v1706, %v964
        %v1740 = vsel %vm1712, %v1707, %v966
        %v1741 = vsel %vm1712, %v1708, %v968
        %v1742 = vsel %vm1712, %v1709, %v970
        %v1743 = vsel %vm1712, %v1710, %v972
        %v1744 = vsel %vm1712, %v1711, %v974
        %vm1745 = vcmask 130048
        %v1746 = vsel %vm1745, %v1713, %v1040
        %v1747 = vsel %vm1745, %v1714, %v1042
        %v1748 = vsel %vm1745, %v1715, %v1044
        %v1749 = vsel %vm1745, %v1716, %v1046
        %v1750 = vsel %vm1745, %v1717, %v1048
        %v1751 = vsel %vm1745, %v1718, %v1050
        %v1752 = vsel %vm1745, %v1719, %v1052
        %v1753 = vsel %vm1745, %v1720, %v1054
        %v1754 = vsel %vm1745, %v1721, %v1056
        %v1755 = vsel %vm1745, %v1722, %v1058
        %v1756 = vsel %vm1745, %v1723, %v1060
        %v1757 = vsel %vm1745, %v1724, %v1062
        %v1758 = vsel %vm1745, %v1725, %v1064
        %v1759 = vsel %vm1745, %v1726, %v1066
        %v1760 = vsel %vm1745, %v1727, %v1068
        %v1761 = vsel %vm1745, %v1728, %v1070
        %v1762 = vsel %vm1745, %v1729, %v1072
        %v1763 = vsel %vm1745, %v1730, %v1074
        %v1764 = vsel %vm1745, %v1731, %v1076
        %v1765 = vsel %vm1745, %v1732, %v1078
        %v1766 = vsel %vm1745, %v1733, %v1080
        %v1767 = vsel %vm1745, %v1734, %v1082
        %v1768 = vsel %vm1745, %v1735, %v1084
        %v1769 = vsel %vm1745, %v1736, %v1086
        %v1770 = vsel %vm1745, %v1737, %v1088
        %v1771 = vsel %vm1745, %v1738, %v1090
        %v1772 = vsel %vm1745, %v1739, %v1092
        %v1773 = vsel %vm1745, %v1740, %v1094
        %v1774 = vsel %vm1745, %v1741, %v1096
        %v1775 = vsel %vm1745, %v1742, %v1098
        %v1776 = vsel %vm1745, %v1743, %v1100
        %v1777 = vsel %vm1745, %v1744, %v1102
        %vm1778 = vcmask 162816
        %v1779 = vsel %vm1778, %v1746, %v1168
        %v1780 = vsel %vm1778, %v1747, %v1170
        %v1781 = vsel %vm1778, %v1748, %v1172
        %v1782 = vsel %vm1778, %v1749, %v1174
        %v1783 = vsel %vm1778, %v1750, %v1176
        %v1784 = vsel %vm1778, %v1751, %v1178
        %v1785 = vsel %vm1778, %v1752, %v1180
        %v1786 = vsel %vm1778, %v1753, %v1182
        %v1787 = vsel %vm1778, %v1754, %v1184
        %v1788 = vsel %vm1778, %v1755, %v1186
        %v1789 = vsel %vm1778, %v1756, %v1188
        %v1790 = vsel %vm1778, %v1757, %v1190
        %v1791 = vsel %vm1778, %v1758, %v1192
        %v1792 = vsel %vm1778, %v1759, %v1194
        %v1793 = vsel %vm1778, %v1760, %v1196
        %v1794 = vsel %vm1778, %v1761, %v1198
        %v1795 = vsel %vm1778, %v1762, %v1200
        %v1796 = vsel %vm1778, %v1763, %v1202
        %v1797 = vsel %vm1778, %v1764, %v1204
        %v1798 = vsel %vm1778, %v1765, %v1206
        %v1799 = vsel %vm1778, %v1766, %v1208
        %v1800 = vsel %vm1778, %v1767, %v1210
        %v1801 = vsel %vm1778, %v1768, %v1212
        %v1802 = vsel %vm1778, %v1769, %v1214
        %v1803 = vsel %vm1778, %v1770, %v1216
        %v1804 = vsel %vm1778, %v1771, %v1218
        %v1805 = vsel %vm1778, %v1772, %v1220
        %v1806 = vsel %vm1778, %v1773, %v1222
        %v1807 = vsel %vm1778, %v1774, %v1224
        %v1808 = vsel %vm1778, %v1775, %v1226
        %v1809 = vsel %vm1778, %v1776, %v1228
        %v1810 = vsel %vm1778, %v1777, %v1230
        %vm1811 = vcmask 195584
        %v1812 = vsel %vm1811, %v1779, %v1296
        %v1813 = vsel %vm1811, %v1780, %v1298
        %v1814 = vsel %vm1811, %v1781, %v1300
        %v1815 = vsel %vm1811, %v1782, %v1302
        %v1816 = vsel %vm1811, %v1783, %v1304
        %v1817 = vsel %vm1811, %v1784, %v1306
        %v1818 = vsel %vm1811, %v1785, %v1308
        %v1819 = vsel %vm1811, %v1786, %v1310
        %v1820 = vsel %vm1811, %v1787, %v1312
        %v1821 = vsel %vm1811, %v1788, %v1314
        %v1822 = vsel %vm1811, %v1789, %v1316
        %v1823 = vsel %vm1811, %v1790, %v1318
        %v1824 = vsel %vm1811, %v1791, %v1320
        %v1825 = vsel %vm1811, %v1792, %v1322
        %v1826 = vsel %vm1811, %v1793, %v1324
        %v1827 = vsel %vm1811, %v1794, %v1326
        %v1828 = vsel %vm1811, %v1795, %v1328
        %v1829 = vsel %vm1811, %v1796, %v1330
        %v1830 = vsel %vm1811, %v1797, %v1332
        %v1831 = vsel %vm1811, %v1798, %v1334
        %v1832 = vsel %vm1811, %v1799, %v1336
        %v1833 = vsel %vm1811, %v1800, %v1338
        %v1834 = vsel %vm1811, %v1801, %v1340
        %v1835 = vsel %vm1811, %v1802, %v1342
        %v1836 = vsel %vm1811, %v1803, %v1344
        %v1837 = vsel %vm1811, %v1804, %v1346
        %v1838 = vsel %vm1811, %v1805, %v1348
        %v1839 = vsel %vm1811, %v1806, %v1350
        %v1840 = vsel %vm1811, %v1807, %v1352
        %v1841 = vsel %vm1811, %v1808, %v1354
        %v1842 = vsel %vm1811, %v1809, %v1356
        %v1843 = vsel %vm1811, %v1810, %v1358
        %vm1844 = vcmask 228352
        %v1845 = vsel %vm1844, %v1812, %v1424
        %v1846 = vsel %vm1844, %v1813, %v1426
        %v1847 = vsel %vm1844, %v1814, %v1428
        %v1848 = vsel %vm1844, %v1815, %v1430
        %v1849 = vsel %vm1844, %v1816, %v1432
        %v1850 = vsel %vm1844, %v1817, %v1434
        %v1851 = vsel %vm1844, %v1818, %v1436
        %v1852 = vsel %vm1844, %v1819, %v1438
        %v1853 = vsel %vm1844, %v1820, %v1440
        %v1854 = vsel %vm1844, %v1821, %v1442
        %v1855 = vsel %vm1844, %v1822, %v1444
        %v1856 = vsel %vm1844, %v1823, %v1446
        %v1857 = vsel %vm1844, %v1824, %v1448
        %v1858 = vsel %vm1844, %v1825, %v1450
        %v1859 = vsel %vm1844, %v1826, %v1452
        %v1860 = vsel %vm1844, %v1827, %v1454
        %v1861 = vsel %vm1844, %v1828, %v1456
        %v1862 = vsel %vm1844, %v1829, %v1458
        %v1863 = vsel %vm1844, %v1830, %v1460
        %v1864 = vsel %vm1844, %v1831, %v1462
        %v1865 = vsel %vm1844, %v1832, %v1464
        %v1866 = vsel %vm1844, %v1833, %v1466
        %v1867 = vsel %vm1844, %v1834, %v1468
        %v1868 = vsel %vm1844, %v1835, %v1470
        %v1869 = vsel %vm1844, %v1836, %v1472
        %v1870 = vsel %vm1844, %v1837, %v1474
        %v1871 = vsel %vm1844, %v1838, %v1476
        %v1872 = vsel %vm1844, %v1839, %v1478
        %v1873 = vsel %vm1844, %v1840, %v1480
        %v1874 = vsel %vm1844, %v1841, %v1482
        %v1875 = vsel %vm1844, %v1842, %v1484
        %v1876 = vsel %vm1844, %v1843, %v1486
        %vm1877 = vcmask 261120
        %v1878 = vsel %vm1877, %v1845, %v1552
        %v1879 = vsel %vm1877, %v1846, %v1554
        %v1880 = vsel %vm1877, %v1847, %v1556
        %v1881 = vsel %vm1877, %v1848, %v1558
        %v1882 = vsel %vm1877, %v1849, %v1560
        %v1883 = vsel %vm1877, %v1850, %v1562
        %v1884 = vsel %vm1877, %v1851, %v1564
        %v1885 = vsel %vm1877, %v1852, %v1566
        %v1886 = vsel %vm1877, %v1853, %v1568
        %v1887 = vsel %vm1877, %v1854, %v1570
        %v1888 = vsel %vm1877, %v1855, %v1572
        %v1889 = vsel %vm1877, %v1856, %v1574
        %v1890 = vsel %vm1877, %v1857, %v1576
        %v1891 = vsel %vm1877, %v1858, %v1578
        %v1892 = vsel %vm1877, %v1859, %v1580
        %v1893 = vsel %vm1877, %v1860, %v1582
        %v1894 = vsel %vm1877, %v1861, %v1584
        %v1895 = vsel %vm1877, %v1862, %v1586
        %v1896 = vsel %vm1877, %v1863, %v1588
        %v1897 = vsel %vm1877, %v1864, %v1590
        %v1898 = vsel %vm1877, %v1865, %v1592
        %v1899 = vsel %vm1877, %v1866, %v1594
        %v1900 = vsel %vm1877, %v1867, %v1596
        %v1901 = vsel %vm1877, %v1868, %v1598
        %v1902 = vsel %vm1877, %v1869, %v1600
        %v1903 = vsel %vm1877, %v1870, %v1602
        %v1904 = vsel %vm1877, %v1871, %v1604
        %v1905 = vsel %vm1877, %v1872, %v1606
        %v1906 = vsel %vm1877, %v1873, %v1608
        %v1907 = vsel %vm1877, %v1874, %v1610
        %v1908 = vsel %vm1877, %v1875, %v1612
        %v1909 = vsel %vm1877, %v1876, %v1614
        %v1910 = vpack.c.bf16 %v1879, %v1878
        %v1911 = vpack.c.bf16 %v1881, %v1880
        %v1912 = vpack.c.bf16 %v1883, %v1882
        %v1913 = vpack.c.bf16 %v1885, %v1884
        %v1914 = vpack.c.bf16 %v1887, %v1886
        %v1915 = vpack.c.bf16 %v1889, %v1888
        %v1916 = vpack.c.bf16 %v1891, %v1890
        %v1917 = vpack.c.bf16 %v1893, %v1892
        %v1918 = vpack.c.bf16 %v1895, %v1894
        %v1919 = vpack.c.bf16 %v1897, %v1896
        %v1920 = vpack.c.bf16 %v1899, %v1898
        %v1921 = vpack.c.bf16 %v1901, %v1900
        %v1922 = vpack.c.bf16 %v1903, %v1902
        %v1923 = vpack.c.bf16 %v1905, %v1904
        %v1924 = vpack.c.bf16 %v1907, %v1906
        %v1925 = vpack.c.bf16 %v1909, %v1908
        %v1926 = vld [vmem:[%s1] sm:$0xf]
        %v1927 = vld [vmem:[%s1 + $0x4] sm:$0xf]
        %v1928 = vld [vmem:[%s1 + $0x8] sm:$0xf]
        %v1929 = vld [vmem:[%s1 + $0xc] sm:$0xf]
        %v1930 = vld [vmem:[%s1 + $0x10] sm:$0x3]
        %v1931 = vld [vmem:[%s2] sm:$0x1]
        %v1933 = vlaneseq
        %v1934 = vshrl.u32 %v1933, 7
        %v1935 = vsub.s32 0, %v1934
        %v1936 = vrot.slane %v1931, %v1935
        %v1943 = vunpack.c.l.b16 %v1926
        %v1944 = vunpack.c.l.b16 %v1927
        %v1945 = vunpack.c.l.b16 %v1928
        %v1946 = vunpack.c.l.b16 %v1929
        %v1947 = vunpack.c.l.b16 %v1930
        %v1948 = vpack.c.b16 %v1944, %v1943
        %v1949 = vpack.c.b16 %v1946, %v1945
        %v1950 = vpack.c.b16 %v1947, %v1947
        %vm1953 = vcmask 293888
        %v1955 = vsel %vm1953, %v1910, 0
        %v1958 = vsel %vm1953, %v1911, 0
        %v1961 = vsel %vm1953, %v1912, 0
        %v1964 = vsel %vm1953, %v1913, 0
        %v1967 = vsel %vm1953, %v1914, 0
        %v1970 = vsel %vm1953, %v1915, 0
        %v1973 = vsel %vm1953, %v1916, 0
        %v1976 = vsel %vm1953, %v1917, 0
        %v1979 = vsel %vm1953, %v1918, 0
        %v1982 = vsel %vm1953, %v1919, 0
        %v1985 = vsel %vm1953, %v1920, 0
        %v1988 = vsel %vm1953, %v1921, 0
        %v1991 = vsel %vm1953, %v1922, 0
        %v1994 = vsel %vm1953, %v1923, 0
        %v1997 = vsel %vm1953, %v1924, 0
        %v2000 = vsel %vm1953, %v1925, 0
        %vm2002 = vcmask 1041408
        %v2004 = vsel %vm2002, %v1950, 0
        %2006 = vmatprep.subr.bf16.mxu0 0
        %2007 = vmatpush1.bf16.msra.mxu0 %v1948
        %2008 = vmatprep.subr.bf16.mxu0 0
        %2009 = vmatpush1.bf16.msra.mxu0 %v1949
        %2010 = vmatprep.subr.bf16.mxu0 0
        %2011 = vmatpush1.bf16.msra.mxu0 %v2004
        %2012 = vmatprep.subr.bf16.mxu0 0
        %2013 = vmatpush1.bf16.msra.mxu0 0
        %2014 = vmatprep.subr.bf16.mxu0 0
        %2015 = vmatpush1.bf16.msra.mxu0 0
        %2016 = vmatprep.subr.bf16.mxu0 0
        %2017 = vmatpush1.bf16.msra.mxu0 0
        %2018 = vmatprep.subr.bf16.mxu0 0
        %2019 = vmatpush1.bf16.msra.mxu0 0
        %2020 = vmatprep.subr.bf16.mxu0 0
        %2021 = vmatpush1.bf16.msra.mxu0 0
        %2022 = vmatprep.subr.bf16.mxu0 0
        %2023 = vmatpush1.bf16.msra.mxu0 0
        %2024 = vmatprep.subr.bf16.mxu0 0
        %2025 = vmatpush1.bf16.msra.mxu0 0
        %2026 = vmatprep.subr.bf16.mxu0 0
        %2027 = vmatpush1.bf16.msra.mxu0 0
        %2028 = vmatprep.subr.bf16.mxu0 0
        %2029 = vmatpush1.bf16.msra.mxu0 0
        %2030 = vmatprep.subr.bf16.mxu0 0
        %2031 = vmatpush1.bf16.msra.mxu0 0
        %2032 = vmatprep.subr.bf16.mxu0 0
        %2033 = vmatpush1.bf16.msra.mxu0 0
        %2034 = vmatprep.subr.bf16.mxu0 0
        %2035 = vmatpush1.bf16.msra.mxu0 0
        %2036 = vmatprep.subr.bf16.mxu0 0
        %2037 = vmatpush1.bf16.msra.mxu0 0
        %2038 = vmatprep.mubr.bf16.mxu0 0
        %2039 = vmatmul.mubr.bf16.gmra.mrb[0].mxu0 %v1955
        %v2040 = vpop.f32.mrb[0].mxu0
        %v2041 = vadd.f32 %v1936, %v2040
        %v2042 = vpop.f32.mrb[0].mxu0
        %v2043 = vpop.f32.mrb[0].mxu0
        %v2044 = vadd.f32 %v1936, %v2043
        %v2045 = vpop.f32.mrb[0].mxu0
        %2046 = vmatprep.mubr.bf16.mxu0 0
        %2047 = vmatmul.mubr.bf16.gmra.mrb[0].mxu0 %v1958
        %v2048 = vpop.f32.mrb[0].mxu0
        %v2049 = vadd.f32 %v1936, %v2048
        %v2050 = vpop.f32.mrb[0].mxu0
        %v2051 = vpop.f32.mrb[0].mxu0
        %v2052 = vadd.f32 %v1936, %v2051
        %v2053 = vpop.f32.mrb[0].mxu0
        %2054 = vmatprep.mubr.bf16.mxu0 0
        %2055 = vmatmul.mubr.bf16.gmra.mrb[0].mxu0 %v1961
        %v2056 = vpop.f32.mrb[0].mxu0
        %v2057 = vadd.f32 %v1936, %v2056
        %v2058 = vpop.f32.mrb[0].mxu0
        %v2059 = vpop.f32.mrb[0].mxu0
        %v2060 = vadd.f32 %v1936, %v2059
        %v2061 = vpop.f32.mrb[0].mxu0
        %2062 = vmatprep.mubr.bf16.mxu0 0
        %2063 = vmatmul.mubr.bf16.gmra.mrb[0].mxu0 %v1964
        %v2064 = vpop.f32.mrb[0].mxu0
        %v2065 = vadd.f32 %v1936, %v2064
        %v2066 = vpop.f32.mrb[0].mxu0
        %v2067 = vpop.f32.mrb[0].mxu0
        %v2068 = vadd.f32 %v1936, %v2067
        %v2069 = vpop.f32.mrb[0].mxu0
        %2070 = vmatprep.mubr.bf16.mxu0 0
        %2071 = vmatmul.mubr.bf16.gmra.mrb[0].mxu0 %v1967
        %v2072 = vpop.f32.mrb[0].mxu0
        %v2073 = vadd.f32 %v1936, %v2072
        %v2074 = vpop.f32.mrb[0].mxu0
        %v2075 = vpop.f32.mrb[0].mxu0
        %v2076 = vadd.f32 %v1936, %v2075
        %v2077 = vpop.f32.mrb[0].mxu0
        %2078 = vmatprep.mubr.bf16.mxu0 0
        %2079 = vmatmul.mubr.bf16.gmra.mrb[0].mxu0 %v1970
        %v2080 = vpop.f32.mrb[0].mxu0
        %v2081 = vadd.f32 %v1936, %v2080
        %v2082 = vpop.f32.mrb[0].mxu0
        %v2083 = vpop.f32.mrb[0].mxu0
        %v2084 = vadd.f32 %v1936, %v2083
        %v2085 = vpop.f32.mrb[0].mxu0
        %2086 = vmatprep.mubr.bf16.mxu0 0
        %2087 = vmatmul.mubr.bf16.gmra.mrb[0].mxu0 %v1973
        %v2088 = vpop.f32.mrb[0].mxu0
        %v2089 = vadd.f32 %v1936, %v2088
        %v2090 = vpop.f32.mrb[0].mxu0
        %v2091 = vpop.f32.mrb[0].mxu0
        %v2092 = vadd.f32 %v1936, %v2091
        %v2093 = vpop.f32.mrb[0].mxu0
        %2094 = vmatprep.mubr.bf16.mxu0 0
        %2095 = vmatmul.mubr.bf16.gmra.mrb[0].mxu0 %v1976
        %v2096 = vpop.f32.mrb[0].mxu0
        %v2097 = vadd.f32 %v1936, %v2096
        %v2098 = vpop.f32.mrb[0].mxu0
        %v2099 = vpop.f32.mrb[0].mxu0
        %v2100 = vadd.f32 %v1936, %v2099
        %v2101 = vpop.f32.mrb[0].mxu0
        %2102 = vmatprep.mubr.bf16.mxu0 0
        %2103 = vmatmul.mubr.bf16.gmra.mrb[0].mxu0 %v1979
        %v2104 = vpop.f32.mrb[0].mxu0
        %v2105 = vadd.f32 %v1936, %v2104
        %v2106 = vpop.f32.mrb[0].mxu0
        %v2107 = vpop.f32.mrb[0].mxu0
        %v2108 = vadd.f32 %v1936, %v2107
        %v2109 = vpop.f32.mrb[0].mxu0
        %2110 = vmatprep.mubr.bf16.mxu0 0
        %2111 = vmatmul.mubr.bf16.gmra.mrb[0].mxu0 %v1982
        %v2112 = vpop.f32.mrb[0].mxu0
        %v2113 = vadd.f32 %v1936, %v2112
        %v2114 = vpop.f32.mrb[0].mxu0
        %v2115 = vpop.f32.mrb[0].mxu0
        %v2116 = vadd.f32 %v1936, %v2115
        %v2117 = vpop.f32.mrb[0].mxu0
        %2118 = vmatprep.mubr.bf16.mxu0 0
        %2119 = vmatmul.mubr.bf16.gmra.mrb[0].mxu0 %v1985
        %v2120 = vpop.f32.mrb[0].mxu0
        %v2121 = vadd.f32 %v1936, %v2120
        %v2122 = vpop.f32.mrb[0].mxu0
        %v2123 = vpop.f32.mrb[0].mxu0
        %v2124 = vadd.f32 %v1936, %v2123
        %v2125 = vpop.f32.mrb[0].mxu0
        %2126 = vmatprep.mubr.bf16.mxu0 0
        %2127 = vmatmul.mubr.bf16.gmra.mrb[0].mxu0 %v1988
        %v2128 = vpop.f32.mrb[0].mxu0
        %v2129 = vadd.f32 %v1936, %v2128
        %v2130 = vpop.f32.mrb[0].mxu0
        %v2131 = vpop.f32.mrb[0].mxu0
        %v2132 = vadd.f32 %v1936, %v2131
        %v2133 = vpop.f32.mrb[0].mxu0
        %2134 = vmatprep.mubr.bf16.mxu0 0
        %2135 = vmatmul.mubr.bf16.gmra.mrb[0].mxu0 %v1991
        %v2136 = vpop.f32.mrb[0].mxu0
        %v2137 = vadd.f32 %v1936, %v2136
        %v2138 = vpop.f32.mrb[0].mxu0
        %v2139 = vpop.f32.mrb[0].mxu0
        %v2140 = vadd.f32 %v1936, %v2139
        %v2141 = vpop.f32.mrb[0].mxu0
        %2142 = vmatprep.mubr.bf16.mxu0 0
        %2143 = vmatmul.mubr.bf16.gmra.mrb[0].mxu0 %v1994
        %v2144 = vpop.f32.mrb[0].mxu0
        %v2145 = vadd.f32 %v1936, %v2144
        %v2146 = vpop.f32.mrb[0].mxu0
        %v2147 = vpop.f32.mrb[0].mxu0
        %v2148 = vadd.f32 %v1936, %v2147
        %v2149 = vpop.f32.mrb[0].mxu0
        %2150 = vmatprep.mubr.bf16.mxu0 0
        %2151 = vmatmul.mubr.bf16.gmra.mrb[0].mxu0 %v1997
        %v2152 = vpop.f32.mrb[0].mxu0
        %v2153 = vadd.f32 %v1936, %v2152
        %v2154 = vpop.f32.mrb[0].mxu0
        %v2155 = vpop.f32.mrb[0].mxu0
        %v2156 = vadd.f32 %v1936, %v2155
        %v2157 = vpop.f32.mrb[0].mxu0
        %2158 = vmatprep.mubr.bf16.mxu0 0
        %2159 = vmatmul.mubr.bf16.gmra.mrb[0].mxu0 %v2000
        %v2160 = vpop.f32.mrb[0].mxu0
        %v2161 = vadd.f32 %v1936, %v2160
        %v2162 = vpop.f32.mrb[0].mxu0
        %v2163 = vpop.f32.mrb[0].mxu0
        %v2164 = vadd.f32 %v1936, %v2163
        %v2165 = vpop.f32.mrb[0].mxu0
        %2166 = vdwg.mxu0
        %v2167 = vmax.f32 %v2041, 0.0
        %v2168 = vmax.f32 %v2044, 0.0
        %v2169 = vmax.f32 %v2049, 0.0
        %v2170 = vmax.f32 %v2052, 0.0
        %v2171 = vmax.f32 %v2057, 0.0
        %v2172 = vmax.f32 %v2060, 0.0
        %v2173 = vmax.f32 %v2065, 0.0
        %v2174 = vmax.f32 %v2068, 0.0
        %v2175 = vmax.f32 %v2073, 0.0
        %v2176 = vmax.f32 %v2076, 0.0
        %v2177 = vmax.f32 %v2081, 0.0
        %v2178 = vmax.f32 %v2084, 0.0
        %v2179 = vmax.f32 %v2089, 0.0
        %v2180 = vmax.f32 %v2092, 0.0
        %v2181 = vmax.f32 %v2097, 0.0
        %v2182 = vmax.f32 %v2100, 0.0
        %v2183 = vmax.f32 %v2105, 0.0
        %v2184 = vmax.f32 %v2108, 0.0
        %v2185 = vmax.f32 %v2113, 0.0
        %v2186 = vmax.f32 %v2116, 0.0
        %v2187 = vmax.f32 %v2121, 0.0
        %v2188 = vmax.f32 %v2124, 0.0
        %v2189 = vmax.f32 %v2129, 0.0
        %v2190 = vmax.f32 %v2132, 0.0
        %v2191 = vmax.f32 %v2137, 0.0
        %v2192 = vmax.f32 %v2140, 0.0
        %v2193 = vmax.f32 %v2145, 0.0
        %v2194 = vmax.f32 %v2148, 0.0
        %v2195 = vmax.f32 %v2153, 0.0
        %v2196 = vmax.f32 %v2156, 0.0
        %v2197 = vmax.f32 %v2161, 0.0
        %v2198 = vmax.f32 %v2164, 0.0
        %2199 = vst.msk [vmem:[#allocation3] sm:$0xff] %vm1745, 0.0
        %2200 = vst.msk [vmem:[#allocation3 + $0x8] sm:$0xff] %vm1745, 0.0
        %vm2201 = vcmask 123904
        %2202 = vst.msk [vmem:[#allocation3 + $0x10] sm:$0x3] %vm2201, 0.0
        %s2203 = scalar_lea.vmem [#allocation3], 408
        %2204 = vst.msk [vmem:[%s2203] sm:$0xff] %vm1745, 0.0
        %2205 = vst.msk [vmem:[%s2203 + $0x8] sm:$0xff] %vm1745, 0.0
        %2206 = vst.msk [vmem:[%s2203 + $0x10] sm:$0x3] %vm2201, 0.0
        %vm2207 = vcmask 122880
        %2208 = vst.msk [vmem:[#allocation3] sm:$0x1] %vm2207, 0.0
        %2209 = vst.msk [vmem:[#allocation3 + $0x18] sm:$0x1] %vm2207, 0.0
        %2210 = vst.msk [vmem:[#allocation3 + $0x30] sm:$0x1] %vm2207, 0.0
        %2211 = vst.msk [vmem:[#allocation3 + $0x48] sm:$0x1] %vm2207, 0.0
        %2212 = vst.msk [vmem:[#allocation3 + $0x60] sm:$0x1] %vm2207, 0.0
        %2213 = vst.msk [vmem:[#allocation3 + $0x78] sm:$0x1] %vm2207, 0.0
        %2214 = vst.msk [vmem:[#allocation3 + $0x90] sm:$0x1] %vm2207, 0.0
        %2215 = vst.msk [vmem:[#allocation3 + $0xa8] sm:$0x1] %vm2207, 0.0
        %2216 = vst.msk [vmem:[#allocation3 + $0xc0] sm:$0x1] %vm2207, 0.0
        %2217 = vst.msk [vmem:[#allocation3 + $0xd8] sm:$0x1] %vm2207, 0.0
        %2218 = vst.msk [vmem:[#allocation3 + $0xf0] sm:$0x1] %vm2207, 0.0
        %2219 = vst.msk [vmem:[#allocation3 + $0x108] sm:$0x1] %vm2207, 0.0
        %2220 = vst.msk [vmem:[#allocation3 + $0x120] sm:$0x1] %vm2207, 0.0
        %2221 = vst.msk [vmem:[#allocation3 + $0x138] sm:$0x1] %vm2207, 0.0
        %2222 = vst.msk [vmem:[#allocation3 + $0x150] sm:$0x1] %vm2207, 0.0
        %2223 = vst.msk [vmem:[#allocation3 + $0x168] sm:$0x1] %vm2207, 0.0
        %2224 = vst.msk [vmem:[#allocation3 + $0x180] sm:$0x1] %vm2207, 0.0
        %2225 = vst.msk [vmem:[#allocation3 + $0x198] sm:$0x1] %vm2207, 0.0
        %2226 = vst.msk [vmem:[#allocation3 + $0x11] sm:$0x1] %vm2207, 0.0
        %2227 = vst.msk [vmem:[#allocation3 + $0x29] sm:$0x1] %vm2207, 0.0
        %2228 = vst.msk [vmem:[#allocation3 + $0x41] sm:$0x1] %vm2207, 0.0
        %2229 = vst.msk [vmem:[#allocation3 + $0x59] sm:$0x1] %vm2207, 0.0
        %2230 = vst.msk [vmem:[#allocation3 + $0x71] sm:$0x1] %vm2207, 0.0
        %2231 = vst.msk [vmem:[#allocation3 + $0x89] sm:$0x1] %vm2207, 0.0
        %2232 = vst.msk [vmem:[#allocation3 + $0xa1] sm:$0x1] %vm2207, 0.0
        %2233 = vst.msk [vmem:[#allocation3 + $0xb9] sm:$0x1] %vm2207, 0.0
        %2234 = vst.msk [vmem:[#allocation3 + $0xd1] sm:$0x1] %vm2207, 0.0
        %2235 = vst.msk [vmem:[#allocation3 + $0xe9] sm:$0x1] %vm2207, 0.0
        %2236 = vst.msk [vmem:[#allocation3 + $0x101] sm:$0x1] %vm2207, 0.0
        %2237 = vst.msk [vmem:[#allocation3 + $0x119] sm:$0x1] %vm2207, 0.0
        %2238 = vst.msk [vmem:[#allocation3 + $0x131] sm:$0x1] %vm2207, 0.0
        %2239 = vst.msk [vmem:[#allocation3 + $0x149] sm:$0x1] %vm2207, 0.0
        %2240 = vst.msk [vmem:[#allocation3 + $0x161] sm:$0x1] %vm2207, 0.0
        %2241 = vst.msk [vmem:[#allocation3 + $0x179] sm:$0x1] %vm2207, 0.0
        %2242 = vst.msk [vmem:[#allocation3 + $0x191] sm:$0x1] %vm2207, 0.0
        %2243 = vst.msk [vmem:[#allocation3 + $0x1a9] sm:$0x1] %vm2207, 0.0
        %s2244 = scalar_lea.vmem [#allocation3], 24
        %2245 = vst.msk [vmem:[%s2244 + $0x1] sm:$0xff] %vm1745, %v2167
        %2246 = vst.msk [vmem:[%s2244 + $0x9] sm:$0xff] %vm1745, %v2168
        %2247 = vst.msk [vmem:[%s2244 + $0x19] sm:$0xff] %vm1745, %v2169
        %2248 = vst.msk [vmem:[%s2244 + $0x21] sm:$0xff] %vm1745, %v2170
        %2249 = vst.msk [vmem:[%s2244 + $0x31] sm:$0xff] %vm1745, %v2171
        %2250 = vst.msk [vmem:[%s2244 + $0x39] sm:$0xff] %vm1745, %v2172
        %2251 = vst.msk [vmem:[%s2244 + $0x49] sm:$0xff] %vm1745, %v2173
        %2252 = vst.msk [vmem:[%s2244 + $0x51] sm:$0xff] %vm1745, %v2174
        %2253 = vst.msk [vmem:[%s2244 + $0x61] sm:$0xff] %vm1745, %v2175
        %2254 = vst.msk [vmem:[%s2244 + $0x69] sm:$0xff] %vm1745, %v2176
        %2255 = vst.msk [vmem:[%s2244 + $0x79] sm:$0xff] %vm1745, %v2177
        %2256 = vst.msk [vmem:[%s2244 + $0x81] sm:$0xff] %vm1745, %v2178
        %2257 = vst.msk [vmem:[%s2244 + $0x91] sm:$0xff] %vm1745, %v2179
        %2258 = vst.msk [vmem:[%s2244 + $0x99] sm:$0xff] %vm1745, %v2180
        %2259 = vst.msk [vmem:[%s2244 + $0xa9] sm:$0xff] %vm1745, %v2181
        %2260 = vst.msk [vmem:[%s2244 + $0xb1] sm:$0xff] %vm1745, %v2182
        %2261 = vst.msk [vmem:[%s2244 + $0xc1] sm:$0xff] %vm1745, %v2183
        %2262 = vst.msk [vmem:[%s2244 + $0xc9] sm:$0xff] %vm1745, %v2184
        %2263 = vst.msk [vmem:[%s2244 + $0xd9] sm:$0xff] %vm1745, %v2185
        %2264 = vst.msk [vmem:[%s2244 + $0xe1] sm:$0xff] %vm1745, %v2186
        %2265 = vst.msk [vmem:[%s2244 + $0xf1] sm:$0xff] %vm1745, %v2187
        %2266 = vst.msk [vmem:[%s2244 + $0xf9] sm:$0xff] %vm1745, %v2188
        %2267 = vst.msk [vmem:[%s2244 + $0x109] sm:$0xff] %vm1745, %v2189
        %2268 = vst.msk [vmem:[%s2244 + $0x111] sm:$0xff] %vm1745, %v2190
        %2269 = vst.msk [vmem:[%s2244 + $0x121] sm:$0xff] %vm1745, %v2191
        %2270 = vst.msk [vmem:[%s2244 + $0x129] sm:$0xff] %vm1745, %v2192
        %2271 = vst.msk [vmem:[%s2244 + $0x139] sm:$0xff] %vm1745, %v2193
        %2272 = vst.msk [vmem:[%s2244 + $0x141] sm:$0xff] %vm1745, %v2194
        %2273 = vst.msk [vmem:[%s2244 + $0x151] sm:$0xff] %vm1745, %v2195
        %2274 = vst.msk [vmem:[%s2244 + $0x159] sm:$0xff] %vm1745, %v2196
        %2275 = vst.msk [vmem:[%s2244 + $0x169] sm:$0xff] %vm1745, %v2197
        %2276 = vst.msk [vmem:[%s2244 + $0x171] sm:$0xff] %vm1745, %v2198
        %v2277 = vld [vmem:[#allocation3] sm:$0xff]
        %v2278 = vld [vmem:[#allocation3 + $0x8] sm:$0xff]
        %v2279 = vld [vmem:[#allocation3 + $0x18] sm:$0xff]
        %v2280 = vld [vmem:[#allocation3 + $0x20] sm:$0xff]
        %v2281 = vld [vmem:[#allocation3 + $0x30] sm:$0xff]
        %v2282 = vld [vmem:[#allocation3 + $0x38] sm:$0xff]
        %v2283 = vld [vmem:[#allocation3 + $0x48] sm:$0xff]
        %v2284 = vld [vmem:[#allocation3 + $0x50] sm:$0xff]
        %v2285 = vld [vmem:[#allocation3 + $0x60] sm:$0xff]
        %v2286 = vld [vmem:[#allocation3 + $0x68] sm:$0xff]
        %v2287 = vld [vmem:[#allocation3 + $0x78] sm:$0xff]
        %v2288 = vld [vmem:[#allocation3 + $0x80] sm:$0xff]
        %v2289 = vld [vmem:[#allocation3 + $0x90] sm:$0xff]
        %v2290 = vld [vmem:[#allocation3 + $0x98] sm:$0xff]
        %v2291 = vld [vmem:[#allocation3 + $0xa8] sm:$0xff]
        %v2292 = vld [vmem:[#allocation3 + $0xb0] sm:$0xff]
        %v2293 = vld [vmem:[#allocation3 + $0xc0] sm:$0xff]
        %v2294 = vld [vmem:[#allocation3 + $0xc8] sm:$0xff]
        %v2295 = vld [vmem:[#allocation3 + $0xd8] sm:$0xff]
        %v2296 = vld [vmem:[#allocation3 + $0xe0] sm:$0xff]
        %v2297 = vld [vmem:[#allocation3 + $0xf0] sm:$0xff]
        %v2298 = vld [vmem:[#allocation3 + $0xf8] sm:$0xff]
        %v2299 = vld [vmem:[#allocation3 + $0x108] sm:$0xff]
        %v2300 = vld [vmem:[#allocation3 + $0x110] sm:$0xff]
        %v2301 = vld [vmem:[#allocation3 + $0x120] sm:$0xff]
        %v2302 = vld [vmem:[#allocation3 + $0x128] sm:$0xff]
        %v2303 = vld [vmem:[#allocation3 + $0x138] sm:$0xff]
        %v2304 = vld [vmem:[#allocation3 + $0x140] sm:$0xff]
        %v2305 = vld [vmem:[#allocation3 + $0x150] sm:$0xff]
        %v2306 = vld [vmem:[#allocation3 + $0x158] sm:$0xff]
        %v2307 = vld [vmem:[#allocation3 + $0x168] sm:$0xff]
        %v2308 = vld [vmem:[#allocation3 + $0x170] sm:$0xff]
        %v2309 = vld [vmem:[#allocation3 + $0x1] sm:$0xff]
        %v2310 = vld [vmem:[#allocation3 + $0x9] sm:$0xff]
        %v2311 = vld [vmem:[#allocation3 + $0x19] sm:$0xff]
        %v2312 = vld [vmem:[#allocation3 + $0x21] sm:$0xff]
        %v2313 = vld [vmem:[#allocation3 + $0x31] sm:$0xff]
        %v2314 = vld [vmem:[#allocation3 + $0x39] sm:$0xff]
        %v2315 = vld [vmem:[#allocation3 + $0x49] sm:$0xff]
        %v2316 = vld [vmem:[#allocation3 + $0x51] sm:$0xff]
        %v2317 = vld [vmem:[#allocation3 + $0x61] sm:$0xff]
        %v2318 = vld [vmem:[#allocation3 + $0x69] sm:$0xff]
        %v2319 = vld [vmem:[#allocation3 + $0x79] sm:$0xff]
        %v2320 = vld [vmem:[#allocation3 + $0x81] sm:$0xff]
        %v2321 = vld [vmem:[#allocation3 + $0x91] sm:$0xff]
        %v2322 = vld [vmem:[#allocation3 + $0x99] sm:$0xff]
        %v2323 = vld [vmem:[#allocation3 + $0xa9] sm:$0xff]
        %v2324 = vld [vmem:[#allocation3 + $0xb1] sm:$0xff]
        %v2325 = vld [vmem:[#allocation3 + $0xc1] sm:$0xff]
        %v2326 = vld [vmem:[#allocation3 + $0xc9] sm:$0xff]
        %v2327 = vld [vmem:[#allocation3 + $0xd9] sm:$0xff]
        %v2328 = vld [vmem:[#allocation3 + $0xe1] sm:$0xff]
        %v2329 = vld [vmem:[#allocation3 + $0xf1] sm:$0xff]
        %v2330 = vld [vmem:[#allocation3 + $0xf9] sm:$0xff]
        %v2331 = vld [vmem:[#allocation3 + $0x109] sm:$0xff]
        %v2332 = vld [vmem:[#allocation3 + $0x111] sm:$0xff]
        %v2333 = vld [vmem:[#allocation3 + $0x121] sm:$0xff]
        %v2334 = vld [vmem:[#allocation3 + $0x129] sm:$0xff]
        %v2335 = vld [vmem:[#allocation3 + $0x139] sm:$0xff]
        %v2336 = vld [vmem:[#allocation3 + $0x141] sm:$0xff]
        %v2337 = vld [vmem:[#allocation3 + $0x151] sm:$0xff]
        %v2338 = vld [vmem:[#allocation3 + $0x159] sm:$0xff]
        %v2339 = vld [vmem:[#allocation3 + $0x169] sm:$0xff]
        %v2340 = vld [vmem:[#allocation3 + $0x171] sm:$0xff]
        %v2341 = vld [vmem:[#allocation3 + $0x2] sm:$0xff]
        %v2342 = vld [vmem:[#allocation3 + $0xa] sm:$0xff]
        %v2343 = vld [vmem:[#allocation3 + $0x1a] sm:$0xff]
        %v2344 = vld [vmem:[#allocation3 + $0x22] sm:$0xff]
        %v2345 = vld [vmem:[#allocation3 + $0x32] sm:$0xff]
        %v2346 = vld [vmem:[#allocation3 + $0x3a] sm:$0xff]
        %v2347 = vld [vmem:[#allocation3 + $0x4a] sm:$0xff]
        %v2348 = vld [vmem:[#allocation3 + $0x52] sm:$0xff]
        %v2349 = vld [vmem:[#allocation3 + $0x62] sm:$0xff]
        %v2350 = vld [vmem:[#allocation3 + $0x6a] sm:$0xff]
        %v2351 = vld [vmem:[#allocation3 + $0x7a] sm:$0xff]
        %v2352 = vld [vmem:[#allocation3 + $0x82] sm:$0xff]
        %v2353 = vld [vmem:[#allocation3 + $0x92] sm:$0xff]
        %v2354 = vld [vmem:[#allocation3 + $0x9a] sm:$0xff]
        %v2355 = vld [vmem:[#allocation3 + $0xaa] sm:$0xff]
        %v2356 = vld [vmem:[#allocation3 + $0xb2] sm:$0xff]
        %v2357 = vld [vmem:[#allocation3 + $0xc2] sm:$0xff]
        %v2358 = vld [vmem:[#allocation3 + $0xca] sm:$0xff]
        %v2359 = vld [vmem:[#allocation3 + $0xda] sm:$0xff]
        %v2360 = vld [vmem:[#allocation3 + $0xe2] sm:$0xff]
        %v2361 = vld [vmem:[#allocation3 + $0xf2] sm:$0xff]
        %v2362 = vld [vmem:[#allocation3 + $0xfa] sm:$0xff]
        %v2363 = vld [vmem:[#allocation3 + $0x10a] sm:$0xff]
        %v2364 = vld [vmem:[#allocation3 + $0x112] sm:$0xff]
        %v2365 = vld [vmem:[#allocation3 + $0x122] sm:$0xff]
        %v2366 = vld [vmem:[#allocation3 + $0x12a] sm:$0xff]
        %v2367 = vld [vmem:[#allocation3 + $0x13a] sm:$0xff]
        %v2368 = vld [vmem:[#allocation3 + $0x142] sm:$0xff]
        %v2369 = vld [vmem:[#allocation3 + $0x152] sm:$0xff]
        %v2370 = vld [vmem:[#allocation3 + $0x15a] sm:$0xff]
        %v2371 = vld [vmem:[#allocation3 + $0x16a] sm:$0xff]
        %v2372 = vld [vmem:[#allocation3 + $0x172] sm:$0xff]
        %v2373 = vld [vmem:[%s2244] sm:$0xff]
        %v2374 = vld [vmem:[%s2244 + $0x8] sm:$0xff]
        %v2375 = vld [vmem:[%s2244 + $0x18] sm:$0xff]
        %v2376 = vld [vmem:[%s2244 + $0x20] sm:$0xff]
        %v2377 = vld [vmem:[%s2244 + $0x30] sm:$0xff]
        %v2378 = vld [vmem:[%s2244 + $0x38] sm:$0xff]
        %v2379 = vld [vmem:[%s2244 + $0x48] sm:$0xff]
        %v2380 = vld [vmem:[%s2244 + $0x50] sm:$0xff]
        %v2381 = vld [vmem:[%s2244 + $0x60] sm:$0xff]
        %v2382 = vld [vmem:[%s2244 + $0x68] sm:$0xff]
        %v2383 = vld [vmem:[%s2244 + $0x78] sm:$0xff]
        %v2384 = vld [vmem:[%s2244 + $0x80] sm:$0xff]
        %v2385 = vld [vmem:[%s2244 + $0x90] sm:$0xff]
        %v2386 = vld [vmem:[%s2244 + $0x98] sm:$0xff]
        %v2387 = vld [vmem:[%s2244 + $0xa8] sm:$0xff]
        %v2388 = vld [vmem:[%s2244 + $0xb0] sm:$0xff]
        %v2389 = vld [vmem:[%s2244 + $0xc0] sm:$0xff]
        %v2390 = vld [vmem:[%s2244 + $0xc8] sm:$0xff]
        %v2391 = vld [vmem:[%s2244 + $0xd8] sm:$0xff]
        %v2392 = vld [vmem:[%s2244 + $0xe0] sm:$0xff]
        %v2393 = vld [vmem:[%s2244 + $0xf0] sm:$0xff]
        %v2394 = vld [vmem:[%s2244 + $0xf8] sm:$0xff]
        %v2395 = vld [vmem:[%s2244 + $0x108] sm:$0xff]
        %v2396 = vld [vmem:[%s2244 + $0x110] sm:$0xff]
        %v2397 = vld [vmem:[%s2244 + $0x120] sm:$0xff]
        %v2398 = vld [vmem:[%s2244 + $0x128] sm:$0xff]
        %v2399 = vld [vmem:[%s2244 + $0x138] sm:$0xff]
        %v2400 = vld [vmem:[%s2244 + $0x140] sm:$0xff]
        %v2401 = vld [vmem:[%s2244 + $0x150] sm:$0xff]
        %v2402 = vld [vmem:[%s2244 + $0x158] sm:$0xff]
        %v2403 = vld [vmem:[%s2244 + $0x168] sm:$0xff]
        %v2404 = vld [vmem:[%s2244 + $0x170] sm:$0xff]
        %v2405 = vld [vmem:[%s2244 + $0x1] sm:$0xff]
        %v2406 = vld [vmem:[%s2244 + $0x9] sm:$0xff]
        %v2407 = vld [vmem:[%s2244 + $0x19] sm:$0xff]
        %v2408 = vld [vmem:[%s2244 + $0x21] sm:$0xff]
        %v2409 = vld [vmem:[%s2244 + $0x31] sm:$0xff]
        %v2410 = vld [vmem:[%s2244 + $0x39] sm:$0xff]
        %v2411 = vld [vmem:[%s2244 + $0x49] sm:$0xff]
        %v2412 = vld [vmem:[%s2244 + $0x51] sm:$0xff]
        %v2413 = vld [vmem:[%s2244 + $0x61] sm:$0xff]
        %v2414 = vld [vmem:[%s2244 + $0x69] sm:$0xff]
        %v2415 = vld [vmem:[%s2244 + $0x79] sm:$0xff]
        %v2416 = vld [vmem:[%s2244 + $0x81] sm:$0xff]
        %v2417 = vld [vmem:[%s2244 + $0x91] sm:$0xff]
        %v2418 = vld [vmem:[%s2244 + $0x99] sm:$0xff]
        %v2419 = vld [vmem:[%s2244 + $0xa9] sm:$0xff]
        %v2420 = vld [vmem:[%s2244 + $0xb1] sm:$0xff]
        %v2421 = vld [vmem:[%s2244 + $0xc1] sm:$0xff]
        %v2422 = vld [vmem:[%s2244 + $0xc9] sm:$0xff]
        %v2423 = vld [vmem:[%s2244 + $0xd9] sm:$0xff]
        %v2424 = vld [vmem:[%s2244 + $0xe1] sm:$0xff]
        %v2425 = vld [vmem:[%s2244 + $0xf1] sm:$0xff]
        %v2426 = vld [vmem:[%s2244 + $0xf9] sm:$0xff]
        %v2427 = vld [vmem:[%s2244 + $0x109] sm:$0xff]
        %v2428 = vld [vmem:[%s2244 + $0x111] sm:$0xff]
        %v2429 = vld [vmem:[%s2244 + $0x121] sm:$0xff]
        %v2430 = vld [vmem:[%s2244 + $0x129] sm:$0xff]
        %v2431 = vld [vmem:[%s2244 + $0x139] sm:$0xff]
        %v2432 = vld [vmem:[%s2244 + $0x141] sm:$0xff]
        %v2433 = vld [vmem:[%s2244 + $0x151] sm:$0xff]
        %v2434 = vld [vmem:[%s2244 + $0x159] sm:$0xff]
        %v2435 = vld [vmem:[%s2244 + $0x169] sm:$0xff]
        %v2436 = vld [vmem:[%s2244 + $0x171] sm:$0xff]
        %v2437 = vld [vmem:[%s2244 + $0x2] sm:$0xff]
        %v2438 = vld [vmem:[%s2244 + $0xa] sm:$0xff]
        %v2439 = vld [vmem:[%s2244 + $0x1a] sm:$0xff]
        %v2440 = vld [vmem:[%s2244 + $0x22] sm:$0xff]
        %v2441 = vld [vmem:[%s2244 + $0x32] sm:$0xff]
        %v2442 = vld [vmem:[%s2244 + $0x3a] sm:$0xff]
        %v2443 = vld [vmem:[%s2244 + $0x4a] sm:$0xff]
        %v2444 = vld [vmem:[%s2244 + $0x52] sm:$0xff]
        %v2445 = vld [vmem:[%s2244 + $0x62] sm:$0xff]
        %v2446 = vld [vmem:[%s2244 + $0x6a] sm:$0xff]
        %v2447 = vld [vmem:[%s2244 + $0x7a] sm:$0xff]
        %v2448 = vld [vmem:[%s2244 + $0x82] sm:$0xff]
        %v2449 = vld [vmem:[%s2244 + $0x92] sm:$0xff]
        %v2450 = vld [vmem:[%s2244 + $0x9a] sm:$0xff]
        %v2451 = vld [vmem:[%s2244 + $0xaa] sm:$0xff]
        %v2452 = vld [vmem:[%s2244 + $0xb2] sm:$0xff]
        %v2453 = vld [vmem:[%s2244 + $0xc2] sm:$0xff]
        %v2454 = vld [vmem:[%s2244 + $0xca] sm:$0xff]
        %v2455 = vld [vmem:[%s2244 + $0xda] sm:$0xff]
        %v2456 = vld [vmem:[%s2244 + $0xe2] sm:$0xff]
        %v2457 = vld [vmem:[%s2244 + $0xf2] sm:$0xff]
        %v2458 = vld [vmem:[%s2244 + $0xfa] sm:$0xff]
        %v2459 = vld [vmem:[%s2244 + $0x10a] sm:$0xff]
        %v2460 = vld [vmem:[%s2244 + $0x112] sm:$0xff]
        %v2461 = vld [vmem:[%s2244 + $0x122] sm:$0xff]
        %v2462 = vld [vmem:[%s2244 + $0x12a] sm:$0xff]
        %v2463 = vld [vmem:[%s2244 + $0x13a] sm:$0xff]
        %v2464 = vld [vmem:[%s2244 + $0x142] sm:$0xff]
        %v2465 = vld [vmem:[%s2244 + $0x152] sm:$0xff]
        %v2466 = vld [vmem:[%s2244 + $0x15a] sm:$0xff]
        %v2467 = vld [vmem:[%s2244 + $0x16a] sm:$0xff]
        %v2468 = vld [vmem:[%s2244 + $0x172] sm:$0xff]
        %s2469 = scalar_lea.vmem [#allocation3], 48
        %v2470 = vld [vmem:[%s2469] sm:$0xff]
        %v2471 = vld [vmem:[%s2469 + $0x8] sm:$0xff]
        %v2472 = vld [vmem:[%s2469 + $0x18] sm:$0xff]
        %v2473 = vld [vmem:[%s2469 + $0x20] sm:$0xff]
        %v2474 = vld [vmem:[%s2469 + $0x30] sm:$0xff]
        %v2475 = vld [vmem:[%s2469 + $0x38] sm:$0xff]
        %v2476 = vld [vmem:[%s2469 + $0x48] sm:$0xff]
        %v2477 = vld [vmem:[%s2469 + $0x50] sm:$0xff]
        %v2478 = vld [vmem:[%s2469 + $0x60] sm:$0xff]
        %v2479 = vld [vmem:[%s2469 + $0x68] sm:$0xff]
        %v2480 = vld [vmem:[%s2469 + $0x78] sm:$0xff]
        %v2481 = vld [vmem:[%s2469 + $0x80] sm:$0xff]
        %v2482 = vld [vmem:[%s2469 + $0x90] sm:$0xff]
        %v2483 = vld [vmem:[%s2469 + $0x98] sm:$0xff]
        %v2484 = vld [vmem:[%s2469 + $0xa8] sm:$0xff]
        %v2485 = vld [vmem:[%s2469 + $0xb0] sm:$0xff]
        %v2486 = vld [vmem:[%s2469 + $0xc0] sm:$0xff]
        %v2487 = vld [vmem:[%s2469 + $0xc8] sm:$0xff]
        %v2488 = vld [vmem:[%s2469 + $0xd8] sm:$0xff]
        %v2489 = vld [vmem:[%s2469 + $0xe0] sm:$0xff]
        %v2490 = vld [vmem:[%s2469 + $0xf0] sm:$0xff]
        %v2491 = vld [vmem:[%s2469 + $0xf8] sm:$0xff]
        %v2492 = vld [vmem:[%s2469 + $0x108] sm:$0xff]
        %v2493 = vld [vmem:[%s2469 + $0x110] sm:$0xff]
        %v2494 = vld [vmem:[%s2469 + $0x120] sm:$0xff]
        %v2495 = vld [vmem:[%s2469 + $0x128] sm:$0xff]
        %v2496 = vld [vmem:[%s2469 + $0x138] sm:$0xff]
        %v2497 = vld [vmem:[%s2469 + $0x140] sm:$0xff]
        %v2498 = vld [vmem:[%s2469 + $0x150] sm:$0xff]
        %v2499 = vld [vmem:[%s2469 + $0x158] sm:$0xff]
        %v2500 = vld [vmem:[%s2469 + $0x168] sm:$0xff]
        %v2501 = vld [vmem:[%s2469 + $0x170] sm:$0xff]
        %v2502 = vld [vmem:[%s2469 + $0x1] sm:$0xff]
        %v2503 = vld [vmem:[%s2469 + $0x9] sm:$0xff]
        %v2504 = vld [vmem:[%s2469 + $0x19] sm:$0xff]
        %v2505 = vld [vmem:[%s2469 + $0x21] sm:$0xff]
        %v2506 = vld [vmem:[%s2469 + $0x31] sm:$0xff]
        %v2507 = vld [vmem:[%s2469 + $0x39] sm:$0xff]
        %v2508 = vld [vmem:[%s2469 + $0x49] sm:$0xff]
        %v2509 = vld [vmem:[%s2469 + $0x51] sm:$0xff]
        %v2510 = vld [vmem:[%s2469 + $0x61] sm:$0xff]
        %v2511 = vld [vmem:[%s2469 + $0x69] sm:$0xff]
        %v2512 = vld [vmem:[%s2469 + $0x79] sm:$0xff]
        %v2513 = vld [vmem:[%s2469 + $0x81] sm:$0xff]
        %v2514 = vld [vmem:[%s2469 + $0x91] sm:$0xff]
        %v2515 = vld [vmem:[%s2469 + $0x99] sm:$0xff]
        %v2516 = vld [vmem:[%s2469 + $0xa9] sm:$0xff]
        %v2517 = vld [vmem:[%s2469 + $0xb1] sm:$0xff]
        %v2518 = vld [vmem:[%s2469 + $0xc1] sm:$0xff]
        %v2519 = vld [vmem:[%s2469 + $0xc9] sm:$0xff]
        %v2520 = vld [vmem:[%s2469 + $0xd9] sm:$0xff]
        %v2521 = vld [vmem:[%s2469 + $0xe1] sm:$0xff]
        %v2522 = vld [vmem:[%s2469 + $0xf1] sm:$0xff]
        %v2523 = vld [vmem:[%s2469 + $0xf9] sm:$0xff]
        %v2524 = vld [vmem:[%s2469 + $0x109] sm:$0xff]
        %v2525 = vld [vmem:[%s2469 + $0x111] sm:$0xff]
        %v2526 = vld [vmem:[%s2469 + $0x121] sm:$0xff]
        %v2527 = vld [vmem:[%s2469 + $0x129] sm:$0xff]
        %v2528 = vld [vmem:[%s2469 + $0x139] sm:$0xff]
        %v2529 = vld [vmem:[%s2469 + $0x141] sm:$0xff]
        %v2530 = vld [vmem:[%s2469 + $0x151] sm:$0xff]
        %v2531 = vld [vmem:[%s2469 + $0x159] sm:$0xff]
        %v2532 = vld [vmem:[%s2469 + $0x169] sm:$0xff]
        %v2533 = vld [vmem:[%s2469 + $0x171] sm:$0xff]
        %v2534 = vld [vmem:[%s2469 + $0x2] sm:$0xff]
        %v2535 = vld [vmem:[%s2469 + $0xa] sm:$0xff]
        %v2536 = vld [vmem:[%s2469 + $0x1a] sm:$0xff]
        %v2537 = vld [vmem:[%s2469 + $0x22] sm:$0xff]
        %v2538 = vld [vmem:[%s2469 + $0x32] sm:$0xff]
        %v2539 = vld [vmem:[%s2469 + $0x3a] sm:$0xff]
        %v2540 = vld [vmem:[%s2469 + $0x4a] sm:$0xff]
        %v2541 = vld [vmem:[%s2469 + $0x52] sm:$0xff]
        %v2542 = vld [vmem:[%s2469 + $0x62] sm:$0xff]
        %v2543 = vld [vmem:[%s2469 + $0x6a] sm:$0xff]
        %v2544 = vld [vmem:[%s2469 + $0x7a] sm:$0xff]
        %v2545 = vld [vmem:[%s2469 + $0x82] sm:$0xff]
        %v2546 = vld [vmem:[%s2469 + $0x92] sm:$0xff]
        %v2547 = vld [vmem:[%s2469 + $0x9a] sm:$0xff]
        %v2548 = vld [vmem:[%s2469 + $0xaa] sm:$0xff]
        %v2549 = vld [vmem:[%s2469 + $0xb2] sm:$0xff]
        %v2550 = vld [vmem:[%s2469 + $0xc2] sm:$0xff]
        %v2551 = vld [vmem:[%s2469 + $0xca] sm:$0xff]
        %v2552 = vld [vmem:[%s2469 + $0xda] sm:$0xff]
        %v2553 = vld [vmem:[%s2469 + $0xe2] sm:$0xff]
        %v2554 = vld [vmem:[%s2469 + $0xf2] sm:$0xff]
        %v2555 = vld [vmem:[%s2469 + $0xfa] sm:$0xff]
        %v2556 = vld [vmem:[%s2469 + $0x10a] sm:$0xff]
        %v2557 = vld [vmem:[%s2469 + $0x112] sm:$0xff]
        %v2558 = vld [vmem:[%s2469 + $0x122] sm:$0xff]
        %v2559 = vld [vmem:[%s2469 + $0x12a] sm:$0xff]
        %v2560 = vld [vmem:[%s2469 + $0x13a] sm:$0xff]
        %v2561 = vld [vmem:[%s2469 + $0x142] sm:$0xff]
        %v2562 = vld [vmem:[%s2469 + $0x152] sm:$0xff]
        %v2563 = vld [vmem:[%s2469 + $0x15a] sm:$0xff]
        %v2564 = vld [vmem:[%s2469 + $0x16a] sm:$0xff]
        %v2565 = vld [vmem:[%s2469 + $0x172] sm:$0xff]
        %2598 = vrot.lane.b32.xlu0 %v2309, 16
        %v2599 = vpop.permute.xlu0 %2598
        %2600 = vrot.lane.b32.xlu0 %v2310, 16
        %v2601 = vpop.permute.xlu0 %2600
        %2602 = vrot.lane.b32.xlu0 %v2311, 16
        %v2603 = vpop.permute.xlu0 %2602
        %2604 = vrot.lane.b32.xlu0 %v2312, 16
        %v2605 = vpop.permute.xlu0 %2604
        %2606 = vrot.lane.b32.xlu0 %v2313, 16
        %v2607 = vpop.permute.xlu0 %2606
        %2608 = vrot.lane.b32.xlu0 %v2314, 16
        %v2609 = vpop.permute.xlu0 %2608
        %2610 = vrot.lane.b32.xlu0 %v2315, 16
        %v2611 = vpop.permute.xlu0 %2610
        %2612 = vrot.lane.b32.xlu0 %v2316, 16
        %v2613 = vpop.permute.xlu0 %2612
        %2614 = vrot.lane.b32.xlu0 %v2317, 16
        %v2615 = vpop.permute.xlu0 %2614
        %2616 = vrot.lane.b32.xlu0 %v2318, 16
        %v2617 = vpop.permute.xlu0 %2616
        %2618 = vrot.lane.b32.xlu0 %v2319, 16
        %v2619 = vpop.permute.xlu0 %2618
        %2620 = vrot.lane.b32.xlu0 %v2320, 16
        %v2621 = vpop.permute.xlu0 %2620
        %2622 = vrot.lane.b32.xlu0 %v2321, 16
        %v2623 = vpop.permute.xlu0 %2622
        %2624 = vrot.lane.b32.xlu0 %v2322, 16
        %v2625 = vpop.permute.xlu0 %2624
        %2626 = vrot.lane.b32.xlu0 %v2323, 16
        %v2627 = vpop.permute.xlu0 %2626
        %2628 = vrot.lane.b32.xlu0 %v2324, 16
        %v2629 = vpop.permute.xlu0 %2628
        %2630 = vrot.lane.b32.xlu0 %v2325, 16
        %v2631 = vpop.permute.xlu0 %2630
        %2632 = vrot.lane.b32.xlu0 %v2326, 16
        %v2633 = vpop.permute.xlu0 %2632
        %2634 = vrot.lane.b32.xlu0 %v2327, 16
        %v2635 = vpop.permute.xlu0 %2634
        %2636 = vrot.lane.b32.xlu0 %v2328, 16
        %v2637 = vpop.permute.xlu0 %2636
        %2638 = vrot.lane.b32.xlu0 %v2329, 16
        %v2639 = vpop.permute.xlu0 %2638
        %2640 = vrot.lane.b32.xlu0 %v2330, 16
        %v2641 = vpop.permute.xlu0 %2640
        %2642 = vrot.lane.b32.xlu0 %v2331, 16
        %v2643 = vpop.permute.xlu0 %2642
        %2644 = vrot.lane.b32.xlu0 %v2332, 16
        %v2645 = vpop.permute.xlu0 %2644
        %2646 = vrot.lane.b32.xlu0 %v2333, 16
        %v2647 = vpop.permute.xlu0 %2646
        %2648 = vrot.lane.b32.xlu0 %v2334, 16
        %v2649 = vpop.permute.xlu0 %2648
        %2650 = vrot.lane.b32.xlu0 %v2335, 16
        %v2651 = vpop.permute.xlu0 %2650
        %2652 = vrot.lane.b32.xlu0 %v2336, 16
        %v2653 = vpop.permute.xlu0 %2652
        %2654 = vrot.lane.b32.xlu0 %v2337, 16
        %v2655 = vpop.permute.xlu0 %2654
        %2656 = vrot.lane.b32.xlu0 %v2338, 16
        %v2657 = vpop.permute.xlu0 %2656
        %2658 = vrot.lane.b32.xlu0 %v2339, 16
        %v2659 = vpop.permute.xlu0 %2658
        %2660 = vrot.lane.b32.xlu0 %v2340, 16
        %v2661 = vpop.permute.xlu0 %2660
        %2726 = vrot.lane.b32.xlu0 %v2341, 32
        %v2727 = vpop.permute.xlu0 %2726
        %2728 = vrot.lane.b32.xlu0 %v2342, 32
        %v2729 = vpop.permute.xlu0 %2728
        %2730 = vrot.lane.b32.xlu0 %v2343, 32
        %v2731 = vpop.permute.xlu0 %2730
        %2732 = vrot.lane.b32.xlu0 %v2344, 32
        %v2733 = vpop.permute.xlu0 %2732
        %2734 = vrot.lane.b32.xlu0 %v2345, 32
        %v2735 = vpop.permute.xlu0 %2734
        %2736 = vrot.lane.b32.xlu0 %v2346, 32
        %v2737 = vpop.permute.xlu0 %2736
        %2738 = vrot.lane.b32.xlu0 %v2347, 32
        %v2739 = vpop.permute.xlu0 %2738
        %2740 = vrot.lane.b32.xlu0 %v2348, 32
        %v2741 = vpop.permute.xlu0 %2740
        %2742 = vrot.lane.b32.xlu0 %v2349, 32
        %v2743 = vpop.permute.xlu0 %2742
        %2744 = vrot.lane.b32.xlu0 %v2350, 32
        %v2745 = vpop.permute.xlu0 %2744
        %2746 = vrot.lane.b32.xlu0 %v2351, 32
        %v2747 = vpop.permute.xlu0 %2746
        %2748 = vrot.lane.b32.xlu0 %v2352, 32
        %v2749 = vpop.permute.xlu0 %2748
        %2750 = vrot.lane.b32.xlu0 %v2353, 32
        %v2751 = vpop.permute.xlu0 %2750
        %2752 = vrot.lane.b32.xlu0 %v2354, 32
        %v2753 = vpop.permute.xlu0 %2752
        %2754 = vrot.lane.b32.xlu0 %v2355, 32
        %v2755 = vpop.permute.xlu0 %2754
        %2756 = vrot.lane.b32.xlu0 %v2356, 32
        %v2757 = vpop.permute.xlu0 %2756
        %2758 = vrot.lane.b32.xlu0 %v2357, 32
        %v2759 = vpop.permute.xlu0 %2758
        %2760 = vrot.lane.b32.xlu0 %v2358, 32
        %v2761 = vpop.permute.xlu0 %2760
        %2762 = vrot.lane.b32.xlu0 %v2359, 32
        %v2763 = vpop.permute.xlu0 %2762
        %2764 = vrot.lane.b32.xlu0 %v2360, 32
        %v2765 = vpop.permute.xlu0 %2764
        %2766 = vrot.lane.b32.xlu0 %v2361, 32
        %v2767 = vpop.permute.xlu0 %2766
        %2768 = vrot.lane.b32.xlu0 %v2362, 32
        %v2769 = vpop.permute.xlu0 %2768
        %2770 = vrot.lane.b32.xlu0 %v2363, 32
        %v2771 = vpop.permute.xlu0 %2770
        %2772 = vrot.lane.b32.xlu0 %v2364, 32
        %v2773 = vpop.permute.xlu0 %2772
        %2774 = vrot.lane.b32.xlu0 %v2365, 32
        %v2775 = vpop.permute.xlu0 %2774
        %2776 = vrot.lane.b32.xlu0 %v2366, 32
        %v2777 = vpop.permute.xlu0 %2776
        %2778 = vrot.lane.b32.xlu0 %v2367, 32
        %v2779 = vpop.permute.xlu0 %2778
        %2780 = vrot.lane.b32.xlu0 %v2368, 32
        %v2781 = vpop.permute.xlu0 %2780
        %2782 = vrot.lane.b32.xlu0 %v2369, 32
        %v2783 = vpop.permute.xlu0 %2782
        %2784 = vrot.lane.b32.xlu0 %v2370, 32
        %v2785 = vpop.permute.xlu0 %2784
        %2786 = vrot.lane.b32.xlu0 %v2371, 32
        %v2787 = vpop.permute.xlu0 %2786
        %2788 = vrot.lane.b32.xlu0 %v2372, 32
        %v2789 = vpop.permute.xlu0 %2788
        %2854 = vrot.lane.b32.xlu0 %v2373, 48
        %v2855 = vpop.permute.xlu0 %2854
        %2856 = vrot.lane.b32.xlu0 %v2374, 48
        %v2857 = vpop.permute.xlu0 %2856
        %2858 = vrot.lane.b32.xlu0 %v2375, 48
        %v2859 = vpop.permute.xlu0 %2858
        %2860 = vrot.lane.b32.xlu0 %v2376, 48
        %v2861 = vpop.permute.xlu0 %2860
        %2862 = vrot.lane.b32.xlu0 %v2377, 48
        %v2863 = vpop.permute.xlu0 %2862
        %2864 = vrot.lane.b32.xlu0 %v2378, 48
        %v2865 = vpop.permute.xlu0 %2864
        %2866 = vrot.lane.b32.xlu0 %v2379, 48
        %v2867 = vpop.permute.xlu0 %2866
        %2868 = vrot.lane.b32.xlu0 %v2380, 48
        %v2869 = vpop.permute.xlu0 %2868
        %2870 = vrot.lane.b32.xlu0 %v2381, 48
        %v2871 = vpop.permute.xlu0 %2870
        %2872 = vrot.lane.b32.xlu0 %v2382, 48
        %v2873 = vpop.permute.xlu0 %2872
        %2874 = vrot.lane.b32.xlu0 %v2383, 48
        %v2875 = vpop.permute.xlu0 %2874
        %2876 = vrot.lane.b32.xlu0 %v2384, 48
        %v2877 = vpop.permute.xlu0 %2876
        %2878 = vrot.lane.b32.xlu0 %v2385, 48
        %v2879 = vpop.permute.xlu0 %2878
        %2880 = vrot.lane.b32.xlu0 %v2386, 48
        %v2881 = vpop.permute.xlu0 %2880
        %2882 = vrot.lane.b32.xlu0 %v2387, 48
        %v2883 = vpop.permute.xlu0 %2882
        %2884 = vrot.lane.b32.xlu0 %v2388, 48
        %v2885 = vpop.permute.xlu0 %2884
        %2886 = vrot.lane.b32.xlu0 %v2389, 48
        %v2887 = vpop.permute.xlu0 %2886
        %2888 = vrot.lane.b32.xlu0 %v2390, 48
        %v2889 = vpop.permute.xlu0 %2888
        %2890 = vrot.lane.b32.xlu0 %v2391, 48
        %v2891 = vpop.permute.xlu0 %2890
        %2892 = vrot.lane.b32.xlu0 %v2392, 48
        %v2893 = vpop.permute.xlu0 %2892
        %2894 = vrot.lane.b32.xlu0 %v2393, 48
        %v2895 = vpop.permute.xlu0 %2894
        %2896 = vrot.lane.b32.xlu0 %v2394, 48
        %v2897 = vpop.permute.xlu0 %2896
        %2898 = vrot.lane.b32.xlu0 %v2395, 48
        %v2899 = vpop.permute.xlu0 %2898
        %2900 = vrot.lane.b32.xlu0 %v2396, 48
        %v2901 = vpop.permute.xlu0 %2900
        %2902 = vrot.lane.b32.xlu0 %v2397, 48
        %v2903 = vpop.permute.xlu0 %2902
        %2904 = vrot.lane.b32.xlu0 %v2398, 48
        %v2905 = vpop.permute.xlu0 %2904
        %2906 = vrot.lane.b32.xlu0 %v2399, 48
        %v2907 = vpop.permute.xlu0 %2906
        %2908 = vrot.lane.b32.xlu0 %v2400, 48
        %v2909 = vpop.permute.xlu0 %2908
        %2910 = vrot.lane.b32.xlu0 %v2401, 48
        %v2911 = vpop.permute.xlu0 %2910
        %2912 = vrot.lane.b32.xlu0 %v2402, 48
        %v2913 = vpop.permute.xlu0 %2912
        %2914 = vrot.lane.b32.xlu0 %v2403, 48
        %v2915 = vpop.permute.xlu0 %2914
        %2916 = vrot.lane.b32.xlu0 %v2404, 48
        %v2917 = vpop.permute.xlu0 %2916
        %2982 = vrot.lane.b32.xlu0 %v2405, 64
        %v2983 = vpop.permute.xlu0 %2982
        %2984 = vrot.lane.b32.xlu0 %v2406, 64
        %v2985 = vpop.permute.xlu0 %2984
        %2986 = vrot.lane.b32.xlu0 %v2407, 64
        %v2987 = vpop.permute.xlu0 %2986
        %2988 = vrot.lane.b32.xlu0 %v2408, 64
        %v2989 = vpop.permute.xlu0 %2988
        %2990 = vrot.lane.b32.xlu0 %v2409, 64
        %v2991 = vpop.permute.xlu0 %2990
        %2992 = vrot.lane.b32.xlu0 %v2410, 64
        %v2993 = vpop.permute.xlu0 %2992
        %2994 = vrot.lane.b32.xlu0 %v2411, 64
        %v2995 = vpop.permute.xlu0 %2994
        %2996 = vrot.lane.b32.xlu0 %v2412, 64
        %v2997 = vpop.permute.xlu0 %2996
        %2998 = vrot.lane.b32.xlu0 %v2413, 64
        %v2999 = vpop.permute.xlu0 %2998
        %3000 = vrot.lane.b32.xlu0 %v2414, 64
        %v3001 = vpop.permute.xlu0 %3000
        %3002 = vrot.lane.b32.xlu0 %v2415, 64
        %v3003 = vpop.permute.xlu0 %3002
        %3004 = vrot.lane.b32.xlu0 %v2416, 64
        %v3005 = vpop.permute.xlu0 %3004
        %3006 = vrot.lane.b32.xlu0 %v2417, 64
        %v3007 = vpop.permute.xlu0 %3006
        %3008 = vrot.lane.b32.xlu0 %v2418, 64
        %v3009 = vpop.permute.xlu0 %3008
        %3010 = vrot.lane.b32.xlu0 %v2419, 64
        %v3011 = vpop.permute.xlu0 %3010
        %3012 = vrot.lane.b32.xlu0 %v2420, 64
        %v3013 = vpop.permute.xlu0 %3012
        %3014 = vrot.lane.b32.xlu0 %v2421, 64
        %v3015 = vpop.permute.xlu0 %3014
        %3016 = vrot.lane.b32.xlu0 %v2422, 64
        %v3017 = vpop.permute.xlu0 %3016
        %3018 = vrot.lane.b32.xlu0 %v2423, 64
        %v3019 = vpop.permute.xlu0 %3018
        %3020 = vrot.lane.b32.xlu0 %v2424, 64
        %v3021 = vpop.permute.xlu0 %3020
        %3022 = vrot.lane.b32.xlu0 %v2425, 64
        %v3023 = vpop.permute.xlu0 %3022
        %3024 = vrot.lane.b32.xlu0 %v2426, 64
        %v3025 = vpop.permute.xlu0 %3024
        %3026 = vrot.lane.b32.xlu0 %v2427, 64
        %v3027 = vpop.permute.xlu0 %3026
        %3028 = vrot.lane.b32.xlu0 %v2428, 64
        %v3029 = vpop.permute.xlu0 %3028
        %3030 = vrot.lane.b32.xlu0 %v2429, 64
        %v3031 = vpop.permute.xlu0 %3030
        %3032 = vrot.lane.b32.xlu0 %v2430, 64
        %v3033 = vpop.permute.xlu0 %3032
        %3034 = vrot.lane.b32.xlu0 %v2431, 64
        %v3035 = vpop.permute.xlu0 %3034
        %3036 = vrot.lane.b32.xlu0 %v2432, 64
        %v3037 = vpop.permute.xlu0 %3036
        %3038 = vrot.lane.b32.xlu0 %v2433, 64
        %v3039 = vpop.permute.xlu0 %3038
        %3040 = vrot.lane.b32.xlu0 %v2434, 64
        %v3041 = vpop.permute.xlu0 %3040
        %3042 = vrot.lane.b32.xlu0 %v2435, 64
        %v3043 = vpop.permute.xlu0 %3042
        %3044 = vrot.lane.b32.xlu0 %v2436, 64
        %v3045 = vpop.permute.xlu0 %3044
        %3110 = vrot.lane.b32.xlu0 %v2437, 80
        %v3111 = vpop.permute.xlu0 %3110
        %3112 = vrot.lane.b32.xlu0 %v2438, 80
        %v3113 = vpop.permute.xlu0 %3112
        %3114 = vrot.lane.b32.xlu0 %v2439, 80
        %v3115 = vpop.permute.xlu0 %3114
        %3116 = vrot.lane.b32.xlu0 %v2440, 80
        %v3117 = vpop.permute.xlu0 %3116
        %3118 = vrot.lane.b32.xlu0 %v2441, 80
        %v3119 = vpop.permute.xlu0 %3118
        %3120 = vrot.lane.b32.xlu0 %v2442, 80
        %v3121 = vpop.permute.xlu0 %3120
        %3122 = vrot.lane.b32.xlu0 %v2443, 80
        %v3123 = vpop.permute.xlu0 %3122
        %3124 = vrot.lane.b32.xlu0 %v2444, 80
        %v3125 = vpop.permute.xlu0 %3124
        %3126 = vrot.lane.b32.xlu0 %v2445, 80
        %v3127 = vpop.permute.xlu0 %3126
        %3128 = vrot.lane.b32.xlu0 %v2446, 80
        %v3129 = vpop.permute.xlu0 %3128
        %3130 = vrot.lane.b32.xlu0 %v2447, 80
        %v3131 = vpop.permute.xlu0 %3130
        %3132 = vrot.lane.b32.xlu0 %v2448, 80
        %v3133 = vpop.permute.xlu0 %3132
        %3134 = vrot.lane.b32.xlu0 %v2449, 80
        %v3135 = vpop.permute.xlu0 %3134
        %3136 = vrot.lane.b32.xlu0 %v2450, 80
        %v3137 = vpop.permute.xlu0 %3136
        %3138 = vrot.lane.b32.xlu0 %v2451, 80
        %v3139 = vpop.permute.xlu0 %3138
        %3140 = vrot.lane.b32.xlu0 %v2452, 80
        %v3141 = vpop.permute.xlu0 %3140
        %3142 = vrot.lane.b32.xlu0 %v2453, 80
        %v3143 = vpop.permute.xlu0 %3142
        %3144 = vrot.lane.b32.xlu0 %v2454, 80
        %v3145 = vpop.permute.xlu0 %3144
        %3146 = vrot.lane.b32.xlu0 %v2455, 80
        %v3147 = vpop.permute.xlu0 %3146
        %3148 = vrot.lane.b32.xlu0 %v2456, 80
        %v3149 = vpop.permute.xlu0 %3148
        %3150 = vrot.lane.b32.xlu0 %v2457, 80
        %v3151 = vpop.permute.xlu0 %3150
        %3152 = vrot.lane.b32.xlu0 %v2458, 80
        %v3153 = vpop.permute.xlu0 %3152
        %3154 = vrot.lane.b32.xlu0 %v2459, 80
        %v3155 = vpop.permute.xlu0 %3154
        %3156 = vrot.lane.b32.xlu0 %v2460, 80
        %v3157 = vpop.permute.xlu0 %3156
        %3158 = vrot.lane.b32.xlu0 %v2461, 80
        %v3159 = vpop.permute.xlu0 %3158
        %3160 = vrot.lane.b32.xlu0 %v2462, 80
        %v3161 = vpop.permute.xlu0 %3160
        %3162 = vrot.lane.b32.xlu0 %v2463, 80
        %v3163 = vpop.permute.xlu0 %3162
        %3164 = vrot.lane.b32.xlu0 %v2464, 80
        %v3165 = vpop.permute.xlu0 %3164
        %3166 = vrot.lane.b32.xlu0 %v2465, 80
        %v3167 = vpop.permute.xlu0 %3166
        %3168 = vrot.lane.b32.xlu0 %v2466, 80
        %v3169 = vpop.permute.xlu0 %3168
        %3170 = vrot.lane.b32.xlu0 %v2467, 80
        %v3171 = vpop.permute.xlu0 %3170
        %3172 = vrot.lane.b32.xlu0 %v2468, 80
        %v3173 = vpop.permute.xlu0 %3172
        %3238 = vrot.lane.b32.xlu0 %v2470, 96
        %v3239 = vpop.permute.xlu0 %3238
        %3240 = vrot.lane.b32.xlu0 %v2471, 96
        %v3241 = vpop.permute.xlu0 %3240
        %3242 = vrot.lane.b32.xlu0 %v2472, 96
        %v3243 = vpop.permute.xlu0 %3242
        %3244 = vrot.lane.b32.xlu0 %v2473, 96
        %v3245 = vpop.permute.xlu0 %3244
        %3246 = vrot.lane.b32.xlu0 %v2474, 96
        %v3247 = vpop.permute.xlu0 %3246
        %3248 = vrot.lane.b32.xlu0 %v2475, 96
        %v3249 = vpop.permute.xlu0 %3248
        %3250 = vrot.lane.b32.xlu0 %v2476, 96
        %v3251 = vpop.permute.xlu0 %3250
        %3252 = vrot.lane.b32.xlu0 %v2477, 96
        %v3253 = vpop.permute.xlu0 %3252
        %3254 = vrot.lane.b32.xlu0 %v2478, 96
        %v3255 = vpop.permute.xlu0 %3254
        %3256 = vrot.lane.b32.xlu0 %v2479, 96
        %v3257 = vpop.permute.xlu0 %3256
        %3258 = vrot.lane.b32.xlu0 %v2480, 96
        %v3259 = vpop.permute.xlu0 %3258
        %3260 = vrot.lane.b32.xlu0 %v2481, 96
        %v3261 = vpop.permute.xlu0 %3260
        %3262 = vrot.lane.b32.xlu0 %v2482, 96
        %v3263 = vpop.permute.xlu0 %3262
        %3264 = vrot.lane.b32.xlu0 %v2483, 96
        %v3265 = vpop.permute.xlu0 %3264
        %3266 = vrot.lane.b32.xlu0 %v2484, 96
        %v3267 = vpop.permute.xlu0 %3266
        %3268 = vrot.lane.b32.xlu0 %v2485, 96
        %v3269 = vpop.permute.xlu0 %3268
        %3270 = vrot.lane.b32.xlu0 %v2486, 96
        %v3271 = vpop.permute.xlu0 %3270
        %3272 = vrot.lane.b32.xlu0 %v2487, 96
        %v3273 = vpop.permute.xlu0 %3272
        %3274 = vrot.lane.b32.xlu0 %v2488, 96
        %v3275 = vpop.permute.xlu0 %3274
        %3276 = vrot.lane.b32.xlu0 %v2489, 96
        %v3277 = vpop.permute.xlu0 %3276
        %3278 = vrot.lane.b32.xlu0 %v2490, 96
        %v3279 = vpop.permute.xlu0 %3278
        %3280 = vrot.lane.b32.xlu0 %v2491, 96
        %v3281 = vpop.permute.xlu0 %3280
        %3282 = vrot.lane.b32.xlu0 %v2492, 96
        %v3283 = vpop.permute.xlu0 %3282
        %3284 = vrot.lane.b32.xlu0 %v2493, 96
        %v3285 = vpop.permute.xlu0 %3284
        %3286 = vrot.lane.b32.xlu0 %v2494, 96
        %v3287 = vpop.permute.xlu0 %3286
        %3288 = vrot.lane.b32.xlu0 %v2495, 96
        %v3289 = vpop.permute.xlu0 %3288
        %3290 = vrot.lane.b32.xlu0 %v2496, 96
        %v3291 = vpop.permute.xlu0 %3290
        %3292 = vrot.lane.b32.xlu0 %v2497, 96
        %v3293 = vpop.permute.xlu0 %3292
        %3294 = vrot.lane.b32.xlu0 %v2498, 96
        %v3295 = vpop.permute.xlu0 %3294
        %3296 = vrot.lane.b32.xlu0 %v2499, 96
        %v3297 = vpop.permute.xlu0 %3296
        %3298 = vrot.lane.b32.xlu0 %v2500, 96
        %v3299 = vpop.permute.xlu0 %3298
        %3300 = vrot.lane.b32.xlu0 %v2501, 96
        %v3301 = vpop.permute.xlu0 %3300
        %3366 = vrot.lane.b32.xlu0 %v2502, 112
        %v3367 = vpop.permute.xlu0 %3366
        %3368 = vrot.lane.b32.xlu0 %v2503, 112
        %v3369 = vpop.permute.xlu0 %3368
        %3370 = vrot.lane.b32.xlu0 %v2504, 112
        %v3371 = vpop.permute.xlu0 %3370
        %3372 = vrot.lane.b32.xlu0 %v2505, 112
        %v3373 = vpop.permute.xlu0 %3372
        %3374 = vrot.lane.b32.xlu0 %v2506, 112
        %v3375 = vpop.permute.xlu0 %3374
        %3376 = vrot.lane.b32.xlu0 %v2507, 112
        %v3377 = vpop.permute.xlu0 %3376
        %3378 = vrot.lane.b32.xlu0 %v2508, 112
        %v3379 = vpop.permute.xlu0 %3378
        %3380 = vrot.lane.b32.xlu0 %v2509, 112
        %v3381 = vpop.permute.xlu0 %3380
        %3382 = vrot.lane.b32.xlu0 %v2510, 112
        %v3383 = vpop.permute.xlu0 %3382
        %3384 = vrot.lane.b32.xlu0 %v2511, 112
        %v3385 = vpop.permute.xlu0 %3384
        %3386 = vrot.lane.b32.xlu0 %v2512, 112
        %v3387 = vpop.permute.xlu0 %3386
        %3388 = vrot.lane.b32.xlu0 %v2513, 112
        %v3389 = vpop.permute.xlu0 %3388
        %3390 = vrot.lane.b32.xlu0 %v2514, 112
        %v3391 = vpop.permute.xlu0 %3390
        %3392 = vrot.lane.b32.xlu0 %v2515, 112
        %v3393 = vpop.permute.xlu0 %3392
        %3394 = vrot.lane.b32.xlu0 %v2516, 112
        %v3395 = vpop.permute.xlu0 %3394
        %3396 = vrot.lane.b32.xlu0 %v2517, 112
        %v3397 = vpop.permute.xlu0 %3396
        %3398 = vrot.lane.b32.xlu0 %v2518, 112
        %v3399 = vpop.permute.xlu0 %3398
        %3400 = vrot.lane.b32.xlu0 %v2519, 112
        %v3401 = vpop.permute.xlu0 %3400
        %3402 = vrot.lane.b32.xlu0 %v2520, 112
        %v3403 = vpop.permute.xlu0 %3402
        %3404 = vrot.lane.b32.xlu0 %v2521, 112
        %v3405 = vpop.permute.xlu0 %3404
        %3406 = vrot.lane.b32.xlu0 %v2522, 112
        %v3407 = vpop.permute.xlu0 %3406
        %3408 = vrot.lane.b32.xlu0 %v2523, 112
        %v3409 = vpop.permute.xlu0 %3408
        %3410 = vrot.lane.b32.xlu0 %v2524, 112
        %v3411 = vpop.permute.xlu0 %3410
        %3412 = vrot.lane.b32.xlu0 %v2525, 112
        %v3413 = vpop.permute.xlu0 %3412
        %3414 = vrot.lane.b32.xlu0 %v2526, 112
        %v3415 = vpop.permute.xlu0 %3414
        %3416 = vrot.lane.b32.xlu0 %v2527, 112
        %v3417 = vpop.permute.xlu0 %3416
        %3418 = vrot.lane.b32.xlu0 %v2528, 112
        %v3419 = vpop.permute.xlu0 %3418
        %3420 = vrot.lane.b32.xlu0 %v2529, 112
        %v3421 = vpop.permute.xlu0 %3420
        %3422 = vrot.lane.b32.xlu0 %v2530, 112
        %v3423 = vpop.permute.xlu0 %3422
        %3424 = vrot.lane.b32.xlu0 %v2531, 112
        %v3425 = vpop.permute.xlu0 %3424
        %3426 = vrot.lane.b32.xlu0 %v2532, 112
        %v3427 = vpop.permute.xlu0 %3426
        %3428 = vrot.lane.b32.xlu0 %v2533, 112
        %v3429 = vpop.permute.xlu0 %3428
        %v3462 = vsel %vm1745, %v2277, %v2599
        %v3463 = vsel %vm1745, %v2278, %v2601
        %v3464 = vsel %vm1745, %v2279, %v2603
        %v3465 = vsel %vm1745, %v2280, %v2605
        %v3466 = vsel %vm1745, %v2281, %v2607
        %v3467 = vsel %vm1745, %v2282, %v2609
        %v3468 = vsel %vm1745, %v2283, %v2611
        %v3469 = vsel %vm1745, %v2284, %v2613
        %v3470 = vsel %vm1745, %v2285, %v2615
        %v3471 = vsel %vm1745, %v2286, %v2617
        %v3472 = vsel %vm1745, %v2287, %v2619
        %v3473 = vsel %vm1745, %v2288, %v2621
        %v3474 = vsel %vm1745, %v2289, %v2623
        %v3475 = vsel %vm1745, %v2290, %v2625
        %v3476 = vsel %vm1745, %v2291, %v2627
        %v3477 = vsel %vm1745, %v2292, %v2629
        %v3478 = vsel %vm1745, %v2293, %v2631
        %v3479 = vsel %vm1745, %v2294, %v2633
        %v3480 = vsel %vm1745, %v2295, %v2635
        %v3481 = vsel %vm1745, %v2296, %v2637
        %v3482 = vsel %vm1745, %v2297, %v2639
        %v3483 = vsel %vm1745, %v2298, %v2641
        %v3484 = vsel %vm1745, %v2299, %v2643
        %v3485 = vsel %vm1745, %v2300, %v2645
        %v3486 = vsel %vm1745, %v2301, %v2647
        %v3487 = vsel %vm1745, %v2302, %v2649
        %v3488 = vsel %vm1745, %v2303, %v2651
        %v3489 = vsel %vm1745, %v2304, %v2653
        %v3490 = vsel %vm1745, %v2305, %v2655
        %v3491 = vsel %vm1745, %v2306, %v2657
        %v3492 = vsel %vm1745, %v2307, %v2659
        %v3493 = vsel %vm1745, %v2308, %v2661
        %v3494 = vsel %vm1877, %v3462, %v2727
        %v3495 = vsel %vm1877, %v3463, %v2729
        %v3496 = vsel %vm1877, %v3464, %v2731
        %v3497 = vsel %vm1877, %v3465, %v2733
        %v3498 = vsel %vm1877, %v3466, %v2735
        %v3499 = vsel %vm1877, %v3467, %v2737
        %v3500 = vsel %vm1877, %v3468, %v2739
        %v3501 = vsel %vm1877, %v3469, %v2741
        %v3502 = vsel %vm1877, %v3470, %v2743
        %v3503 = vsel %vm1877, %v3471, %v2745
        %v3504 = vsel %vm1877, %v3472, %v2747
        %v3505 = vsel %vm1877, %v3473, %v2749
        %v3506 = vsel %vm1877, %v3474, %v2751
        %v3507 = vsel %vm1877, %v3475, %v2753
        %v3508 = vsel %vm1877, %v3476, %v2755
        %v3509 = vsel %vm1877, %v3477, %v2757
        %v3510 = vsel %vm1877, %v3478, %v2759
        %v3511 = vsel %vm1877, %v3479, %v2761
        %v3512 = vsel %vm1877, %v3480, %v2763
        %v3513 = vsel %vm1877, %v3481, %v2765
        %v3514 = vsel %vm1877, %v3482, %v2767
        %v3515 = vsel %vm1877, %v3483, %v2769
        %v3516 = vsel %vm1877, %v3484, %v2771
        %v3517 = vsel %vm1877, %v3485, %v2773
        %v3518 = vsel %vm1877, %v3486, %v2775
        %v3519 = vsel %vm1877, %v3487, %v2777
        %v3520 = vsel %vm1877, %v3488, %v2779
        %v3521 = vsel %vm1877, %v3489, %v2781
        %v3522 = vsel %vm1877, %v3490, %v2783
        %v3523 = vsel %vm1877, %v3491, %v2785
        %v3524 = vsel %vm1877, %v3492, %v2787
        %v3525 = vsel %vm1877, %v3493, %v2789
        %vm3526 = vcmask 392192
        %v3527 = vsel %vm3526, %v3494, %v2855
        %v3528 = vsel %vm3526, %v3495, %v2857
        %v3529 = vsel %vm3526, %v3496, %v2859
        %v3530 = vsel %vm3526, %v3497, %v2861
        %v3531 = vsel %vm3526, %v3498, %v2863
        %v3532 = vsel %vm3526, %v3499, %v2865
        %v3533 = vsel %vm3526, %v3500, %v2867
        %v3534 = vsel %vm3526, %v3501, %v2869
        %v3535 = vsel %vm3526, %v3502, %v2871
        %v3536 = vsel %vm3526, %v3503, %v2873
        %v3537 = vsel %vm3526, %v3504, %v2875
        %v3538 = vsel %vm3526, %v3505, %v2877
        %v3539 = vsel %vm3526, %v3506, %v2879
        %v3540 = vsel %vm3526, %v3507, %v2881
        %v3541 = vsel %vm3526, %v3508, %v2883
        %v3542 = vsel %vm3526, %v3509, %v2885
        %v3543 = vsel %vm3526, %v3510, %v2887
        %v3544 = vsel %vm3526, %v3511, %v2889
        %v3545 = vsel %vm3526, %v3512, %v2891
        %v3546 = vsel %vm3526, %v3513, %v2893
        %v3547 = vsel %vm3526, %v3514, %v2895
        %v3548 = vsel %vm3526, %v3515, %v2897
        %v3549 = vsel %vm3526, %v3516, %v2899
        %v3550 = vsel %vm3526, %v3517, %v2901
        %v3551 = vsel %vm3526, %v3518, %v2903
        %v3552 = vsel %vm3526, %v3519, %v2905
        %v3553 = vsel %vm3526, %v3520, %v2907
        %v3554 = vsel %vm3526, %v3521, %v2909
        %v3555 = vsel %vm3526, %v3522, %v2911
        %v3556 = vsel %vm3526, %v3523, %v2913
        %v3557 = vsel %vm3526, %v3524, %v2915
        %v3558 = vsel %vm3526, %v3525, %v2917
        %vm3559 = vcmask 523264
        %v3560 = vsel %vm3559, %v3527, %v2983
        %v3561 = vsel %vm3559, %v3528, %v2985
        %v3562 = vsel %vm3559, %v3529, %v2987
        %v3563 = vsel %vm3559, %v3530, %v2989
        %v3564 = vsel %vm3559, %v3531, %v2991
        %v3565 = vsel %vm3559, %v3532, %v2993
        %v3566 = vsel %vm3559, %v3533, %v2995
        %v3567 = vsel %vm3559, %v3534, %v2997
        %v3568 = vsel %vm3559, %v3535, %v2999
        %v3569 = vsel %vm3559, %v3536, %v3001
        %v3570 = vsel %vm3559, %v3537, %v3003
        %v3571 = vsel %vm3559, %v3538, %v3005
        %v3572 = vsel %vm3559, %v3539, %v3007
        %v3573 = vsel %vm3559, %v3540, %v3009
        %v3574 = vsel %vm3559, %v3541, %v3011
        %v3575 = vsel %vm3559, %v3542, %v3013
        %v3576 = vsel %vm3559, %v3543, %v3015
        %v3577 = vsel %vm3559, %v3544, %v3017
        %v3578 = vsel %vm3559, %v3545, %v3019
        %v3579 = vsel %vm3559, %v3546, %v3021
        %v3580 = vsel %vm3559, %v3547, %v3023
        %v3581 = vsel %vm3559, %v3548, %v3025
        %v3582 = vsel %vm3559, %v3549, %v3027
        %v3583 = vsel %vm3559, %v3550, %v3029
        %v3584 = vsel %vm3559, %v3551, %v3031
        %v3585 = vsel %vm3559, %v3552, %v3033
        %v3586 = vsel %vm3559, %v3553, %v3035
        %v3587 = vsel %vm3559, %v3554, %v3037
        %v3588 = vsel %vm3559, %v3555, %v3039
        %v3589 = vsel %vm3559, %v3556, %v3041
        %v3590 = vsel %vm3559, %v3557, %v3043
        %v3591 = vsel %vm3559, %v3558, %v3045
        %vm3592 = vcmask 654336
        %v3593 = vsel %vm3592, %v3560, %v3111
        %v3594 = vsel %vm3592, %v3561, %v3113
        %v3595 = vsel %vm3592, %v3562, %v3115
        %v3596 = vsel %vm3592, %v3563, %v3117
        %v3597 = vsel %vm3592, %v3564, %v3119
        %v3598 = vsel %vm3592, %v3565, %v3121
        %v3599 = vsel %vm3592, %v3566, %v3123
        %v3600 = vsel %vm3592, %v3567, %v3125
        %v3601 = vsel %vm3592, %v3568, %v3127
        %v3602 = vsel %vm3592, %v3569, %v3129
        %v3603 = vsel %vm3592, %v3570, %v3131
        %v3604 = vsel %vm3592, %v3571, %v3133
        %v3605 = vsel %vm3592, %v3572, %v3135
        %v3606 = vsel %vm3592, %v3573, %v3137
        %v3607 = vsel %vm3592, %v3574, %v3139
        %v3608 = vsel %vm3592, %v3575, %v3141
        %v3609 = vsel %vm3592, %v3576, %v3143
        %v3610 = vsel %vm3592, %v3577, %v3145
        %v3611 = vsel %vm3592, %v3578, %v3147
        %v3612 = vsel %vm3592, %v3579, %v3149
        %v3613 = vsel %vm3592, %v3580, %v3151
        %v3614 = vsel %vm3592, %v3581, %v3153
        %v3615 = vsel %vm3592, %v3582, %v3155
        %v3616 = vsel %vm3592, %v3583, %v3157
        %v3617 = vsel %vm3592, %v3584, %v3159
        %v3618 = vsel %vm3592, %v3585, %v3161
        %v3619 = vsel %vm3592, %v3586, %v3163
        %v3620 = vsel %vm3592, %v3587, %v3165
        %v3621 = vsel %vm3592, %v3588, %v3167
        %v3622 = vsel %vm3592, %v3589, %v3169
        %v3623 = vsel %vm3592, %v3590, %v3171
        %v3624 = vsel %vm3592, %v3591, %v3173
        %vm3625 = vcmask 785408
        %v3626 = vsel %vm3625, %v3593, %v3239
        %v3627 = vsel %vm3625, %v3594, %v3241
        %v3628 = vsel %vm3625, %v3595, %v3243
        %v3629 = vsel %vm3625, %v3596, %v3245
        %v3630 = vsel %vm3625, %v3597, %v3247
        %v3631 = vsel %vm3625, %v3598, %v3249
        %v3632 = vsel %vm3625, %v3599, %v3251
        %v3633 = vsel %vm3625, %v3600, %v3253
        %v3634 = vsel %vm3625, %v3601, %v3255
        %v3635 = vsel %vm3625, %v3602, %v3257
        %v3636 = vsel %vm3625, %v3603, %v3259
        %v3637 = vsel %vm3625, %v3604, %v3261
        %v3638 = vsel %vm3625, %v3605, %v3263
        %v3639 = vsel %vm3625, %v3606, %v3265
        %v3640 = vsel %vm3625, %v3607, %v3267
        %v3641 = vsel %vm3625, %v3608, %v3269
        %v3642 = vsel %vm3625, %v3609, %v3271
        %v3643 = vsel %vm3625, %v3610, %v3273
        %v3644 = vsel %vm3625, %v3611, %v3275
        %v3645 = vsel %vm3625, %v3612, %v3277
        %v3646 = vsel %vm3625, %v3613, %v3279
        %v3647 = vsel %vm3625, %v3614, %v3281
        %v3648 = vsel %vm3625, %v3615, %v3283
        %v3649 = vsel %vm3625, %v3616, %v3285
        %v3650 = vsel %vm3625, %v3617, %v3287
        %v3651 = vsel %vm3625, %v3618, %v3289
        %v3652 = vsel %vm3625, %v3619, %v3291
        %v3653 = vsel %vm3625, %v3620, %v3293
        %v3654 = vsel %vm3625, %v3621, %v3295
        %v3655 = vsel %vm3625, %v3622, %v3297
        %v3656 = vsel %vm3625, %v3623, %v3299
        %v3657 = vsel %vm3625, %v3624, %v3301
        %vm3658 = vcmask 916480
        %v3659 = vsel %vm3658, %v3626, %v3367
        %v3660 = vsel %vm3658, %v3627, %v3369
        %v3661 = vsel %vm3658, %v3628, %v3371
        %v3662 = vsel %vm3658, %v3629, %v3373
        %v3663 = vsel %vm3658, %v3630, %v3375
        %v3664 = vsel %vm3658, %v3631, %v3377
        %v3665 = vsel %vm3658, %v3632, %v3379
        %v3666 = vsel %vm3658, %v3633, %v3381
        %v3667 = vsel %vm3658, %v3634, %v3383
        %v3668 = vsel %vm3658, %v3635, %v3385
        %v3669 = vsel %vm3658, %v3636, %v3387
        %v3670 = vsel %vm3658, %v3637, %v3389
        %v3671 = vsel %vm3658, %v3638, %v3391
        %v3672 = vsel %vm3658, %v3639, %v3393
        %v3673 = vsel %vm3658, %v3640, %v3395
        %v3674 = vsel %vm3658, %v3641, %v3397
        %v3675 = vsel %vm3658, %v3642, %v3399
        %v3676 = vsel %vm3658, %v3643, %v3401
        %v3677 = vsel %vm3658, %v3644, %v3403
        %v3678 = vsel %vm3658, %v3645, %v3405
        %v3679 = vsel %vm3658, %v3646, %v3407
        %v3680 = vsel %vm3658, %v3647, %v3409
        %v3681 = vsel %vm3658, %v3648, %v3411
        %v3682 = vsel %vm3658, %v3649, %v3413
        %v3683 = vsel %vm3658, %v3650, %v3415
        %v3684 = vsel %vm3658, %v3651, %v3417
        %v3685 = vsel %vm3658, %v3652, %v3419
        %v3686 = vsel %vm3658, %v3653, %v3421
        %v3687 = vsel %vm3658, %v3654, %v3423
        %v3688 = vsel %vm3658, %v3655, %v3425
        %v3689 = vsel %vm3658, %v3656, %v3427
        %v3690 = vsel %vm3658, %v3657, %v3429
        %v3691 = vpack.c.bf16 %v3660, %v3659
        %v3692 = vpack.c.bf16 %v2535, %v2534
        %v3693 = vpack.c.bf16 %v3662, %v3661
        %v3694 = vpack.c.bf16 %v2537, %v2536
        %v3695 = vpack.c.bf16 %v3664, %v3663
        %v3696 = vpack.c.bf16 %v2539, %v2538
        %v3697 = vpack.c.bf16 %v3666, %v3665
        %v3698 = vpack.c.bf16 %v2541, %v2540
        %v3699 = vpack.c.bf16 %v3668, %v3667
        %v3700 = vpack.c.bf16 %v2543, %v2542
        %v3701 = vpack.c.bf16 %v3670, %v3669
        %v3702 = vpack.c.bf16 %v2545, %v2544
        %v3703 = vpack.c.bf16 %v3672, %v3671
        %v3704 = vpack.c.bf16 %v2547, %v2546
        %v3705 = vpack.c.bf16 %v3674, %v3673
        %v3706 = vpack.c.bf16 %v2549, %v2548
        %v3707 = vpack.c.bf16 %v3676, %v3675
        %v3708 = vpack.c.bf16 %v2551, %v2550
        %v3709 = vpack.c.bf16 %v3678, %v3677
        %v3710 = vpack.c.bf16 %v2553, %v2552
        %v3711 = vpack.c.bf16 %v3680, %v3679
        %v3712 = vpack.c.bf16 %v2555, %v2554
        %v3713 = vpack.c.bf16 %v3682, %v3681
        %v3714 = vpack.c.bf16 %v2557, %v2556
        %v3715 = vpack.c.bf16 %v3684, %v3683
        %v3716 = vpack.c.bf16 %v2559, %v2558
        %v3717 = vpack.c.bf16 %v3686, %v3685
        %v3718 = vpack.c.bf16 %v2561, %v2560
        %v3719 = vpack.c.bf16 %v3688, %v3687
        %v3720 = vpack.c.bf16 %v2563, %v2562
        %v3721 = vpack.c.bf16 %v3690, %v3689
        %v3722 = vpack.c.bf16 %v2565, %v2564
        %v3723 = vld [vmem:[%s3] sm:$0xf]
        %v3724 = vld [vmem:[%s3 + $0x4] sm:$0xf]
        %v3725 = vld [vmem:[%s3 + $0x8] sm:$0xf]
        %v3726 = vld [vmem:[%s3 + $0xc] sm:$0xf]
        %v3727 = vld [vmem:[%s3 + $0x10] sm:$0xf]
        %v3728 = vld [vmem:[%s3 + $0x14] sm:$0xf]
        %v3729 = vld [vmem:[%s3 + $0x18] sm:$0xf]
        %v3730 = vld [vmem:[%s3 + $0x1c] sm:$0xf]
        %v3731 = vld [vmem:[%s3 + $0x20] sm:$0xf]
        %v3732 = vld [vmem:[%s3 + $0x24] sm:$0xf]
        %v3733 = vld [vmem:[%s3 + $0x28] sm:$0xf]
        %v3734 = vld [vmem:[%s3 + $0x2c] sm:$0xf]
        %v3735 = vld [vmem:[%s3 + $0x30] sm:$0xf]
        %v3736 = vld [vmem:[%s3 + $0x34] sm:$0xf]
        %v3737 = vld [vmem:[%s3 + $0x38] sm:$0xf]
        %v3738 = vld [vmem:[%s3 + $0x3c] sm:$0xf]
        %v3739 = vld [vmem:[%s3 + $0x40] sm:$0xf]
        %v3740 = vld [vmem:[%s3 + $0x44] sm:$0xf]
        %v3741 = vld [vmem:[%s4] sm:$0x1]
        %v3743 = vlaneseq
        %v3744 = vshrl.u32 %v3743, 7
        %v3745 = vsub.s32 0, %v3744
        %v3746 = vrot.slane %v3741, %v3745
        %v3766 = vunpack.c.l.b16 %v3723
        %v3767 = vunpack.c.l.b16 %v3724
        %v3768 = vunpack.c.l.b16 %v3725
        %v3769 = vunpack.c.l.b16 %v3726
        %v3770 = vunpack.c.l.b16 %v3727
        %v3771 = vunpack.c.l.b16 %v3728
        %v3772 = vunpack.c.l.b16 %v3729
        %v3773 = vunpack.c.l.b16 %v3730
        %v3774 = vunpack.c.l.b16 %v3731
        %v3775 = vunpack.c.l.b16 %v3732
        %v3776 = vunpack.c.l.b16 %v3733
        %v3777 = vunpack.c.l.b16 %v3734
        %v3778 = vunpack.c.l.b16 %v3735
        %v3779 = vunpack.c.l.b16 %v3736
        %v3780 = vunpack.c.l.b16 %v3737
        %v3781 = vunpack.c.l.b16 %v3738
        %v3782 = vunpack.c.l.b16 %v3739
        %v3783 = vunpack.c.l.b16 %v3740
        %v3784 = vpack.c.b16 %v3767, %v3766
        %v3785 = vpack.c.b16 %v3769, %v3768
        %v3786 = vpack.c.b16 %v3771, %v3770
        %v3787 = vpack.c.b16 %v3773, %v3772
        %v3788 = vpack.c.b16 %v3775, %v3774
        %v3789 = vpack.c.b16 %v3777, %v3776
        %v3790 = vpack.c.b16 %v3779, %v3778
        %v3791 = vpack.c.b16 %v3781, %v3780
        %v3792 = vpack.c.b16 %v3783, %v3782
        %v3803 = vsel %vm1745, %v3692, 0
        %v3806 = vsel %vm1745, %v3694, 0
        %v3809 = vsel %vm1745, %v3696, 0
        %v3812 = vsel %vm1745, %v3698, 0
        %v3815 = vsel %vm1745, %v3700, 0
        %v3818 = vsel %vm1745, %v3702, 0
        %v3821 = vsel %vm1745, %v3704, 0
        %v3824 = vsel %vm1745, %v3706, 0
        %v3827 = vsel %vm1745, %v3708, 0
        %v3830 = vsel %vm1745, %v3710, 0
        %v3833 = vsel %vm1745, %v3712, 0
        %v3836 = vsel %vm1745, %v3714, 0
        %v3839 = vsel %vm1745, %v3716, 0
        %v3842 = vsel %vm1745, %v3718, 0
        %v3845 = vsel %vm1745, %v3720, 0
        %v3848 = vsel %vm1745, %v3722, 0
        %3850 = vmatprep.subr.bf16.mxu0 0
        %3851 = vmatpush1.bf16.msra.mxu0 %v3784
        %3852 = vmatprep.subr.bf16.mxu0 0
        %3853 = vmatpush1.bf16.msra.mxu0 %v3785
        %3854 = vmatprep.subr.bf16.mxu0 0
        %3855 = vmatpush1.bf16.msra.mxu0 %v3786
        %3856 = vmatprep.subr.bf16.mxu0 0
        %3857 = vmatpush1.bf16.msra.mxu0 %v3787
        %3858 = vmatprep.subr.bf16.mxu0 0
        %3859 = vmatpush1.bf16.msra.mxu0 %v3788
        %3860 = vmatprep.subr.bf16.mxu0 0
        %3861 = vmatpush1.bf16.msra.mxu0 %v3789
        %3862 = vmatprep.subr.bf16.mxu0 0
        %3863 = vmatpush1.bf16.msra.mxu0 %v3790
        %3864 = vmatprep.subr.bf16.mxu0 0
        %3865 = vmatpush1.bf16.msra.mxu0 %v3791
        %3866 = vmatprep.subr.bf16.mxu0 0
        %3867 = vmatpush1.bf16.msra.mxu0 %v3792
        %3868 = vmatprep.subr.bf16.mxu0 0
        %3869 = vmatpush1.bf16.msra.mxu0 0
        %3870 = vmatprep.subr.bf16.mxu0 0
        %3871 = vmatpush1.bf16.msra.mxu0 0
        %3872 = vmatprep.subr.bf16.mxu0 0
        %3873 = vmatpush1.bf16.msra.mxu0 0
        %3874 = vmatprep.subr.bf16.mxu0 0
        %3875 = vmatpush1.bf16.msra.mxu0 0
        %3876 = vmatprep.subr.bf16.mxu0 0
        %3877 = vmatpush1.bf16.msra.mxu0 0
        %3878 = vmatprep.subr.bf16.mxu0 0
        %3879 = vmatpush1.bf16.msra.mxu0 0
        %3880 = vmatprep.subr.bf16.mxu0 0
        %3881 = vmatpush1.bf16.msra.mxu0 0
        %3882 = vmatprep.mubr.bf16.mxu0 %v3803
        %3883 = vmatmul.mubr.bf16.gmra.mrb[0].mxu0 %v3691
        %v3884 = vpop.f32.mrb[0].mxu0
        %v3885 = vadd.f32 %v3746, %v3884
        %v3886 = vpop.f32.mrb[0].mxu0
        %v3887 = vpop.f32.mrb[0].mxu0
        %v3888 = vadd.f32 %v3746, %v3887
        %v3889 = vpop.f32.mrb[0].mxu0
        %3890 = vmatprep.mubr.bf16.mxu0 %v3806
        %3891 = vmatmul.mubr.bf16.gmra.mrb[0].mxu0 %v3693
        %v3892 = vpop.f32.mrb[0].mxu0
        %v3893 = vadd.f32 %v3746, %v3892
        %v3894 = vpop.f32.mrb[0].mxu0
        %v3895 = vpop.f32.mrb[0].mxu0
        %v3896 = vadd.f32 %v3746, %v3895
        %v3897 = vpop.f32.mrb[0].mxu0
        %3898 = vmatprep.mubr.bf16.mxu0 %v3809
        %3899 = vmatmul.mubr.bf16.gmra.mrb[0].mxu0 %v3695
        %v3900 = vpop.f32.mrb[0].mxu0
        %v3901 = vadd.f32 %v3746, %v3900
        %v3902 = vpop.f32.mrb[0].mxu0
        %v3903 = vpop.f32.mrb[0].mxu0
        %v3904 = vadd.f32 %v3746, %v3903
        %v3905 = vpop.f32.mrb[0].mxu0
        %3906 = vmatprep.mubr.bf16.mxu0 %v3812
        %3907 = vmatmul.mubr.bf16.gmra.mrb[0].mxu0 %v3697
        %v3908 = vpop.f32.mrb[0].mxu0
        %v3909 = vadd.f32 %v3746, %v3908
        %v3910 = vpop.f32.mrb[0].mxu0
        %v3911 = vpop.f32.mrb[0].mxu0
        %v3912 = vadd.f32 %v3746, %v3911
        %v3913 = vpop.f32.mrb[0].mxu0
        %3914 = vmatprep.mubr.bf16.mxu0 %v3815
        %3915 = vmatmul.mubr.bf16.gmra.mrb[0].mxu0 %v3699
        %v3916 = vpop.f32.mrb[0].mxu0
        %v3917 = vadd.f32 %v3746, %v3916
        %v3918 = vpop.f32.mrb[0].mxu0
        %v3919 = vpop.f32.mrb[0].mxu0
        %v3920 = vadd.f32 %v3746, %v3919
        %v3921 = vpop.f32.mrb[0].mxu0
        %3922 = vmatprep.mubr.bf16.mxu0 %v3818
        %3923 = vmatmul.mubr.bf16.gmra.mrb[0].mxu0 %v3701
        %v3924 = vpop.f32.mrb[0].mxu0
        %v3925 = vadd.f32 %v3746, %v3924
        %v3926 = vpop.f32.mrb[0].mxu0
        %v3927 = vpop.f32.mrb[0].mxu0
        %v3928 = vadd.f32 %v3746, %v3927
        %v3929 = vpop.f32.mrb[0].mxu0
        %3930 = vmatprep.mubr.bf16.mxu0 %v3821
        %3931 = vmatmul.mubr.bf16.gmra.mrb[0].mxu0 %v3703
        %v3932 = vpop.f32.mrb[0].mxu0
        %v3933 = vadd.f32 %v3746, %v3932
        %v3934 = vpop.f32.mrb[0].mxu0
        %v3935 = vpop.f32.mrb[0].mxu0
        %v3936 = vadd.f32 %v3746, %v3935
        %v3937 = vpop.f32.mrb[0].mxu0
        %3938 = vmatprep.mubr.bf16.mxu0 %v3824
        %3939 = vmatmul.mubr.bf16.gmra.mrb[0].mxu0 %v3705
        %v3940 = vpop.f32.mrb[0].mxu0
        %v3941 = vadd.f32 %v3746, %v3940
        %v3942 = vpop.f32.mrb[0].mxu0
        %v3943 = vpop.f32.mrb[0].mxu0
        %v3944 = vadd.f32 %v3746, %v3943
        %v3945 = vpop.f32.mrb[0].mxu0
        %3946 = vmatprep.mubr.bf16.mxu0 %v3827
        %3947 = vmatmul.mubr.bf16.gmra.mrb[0].mxu0 %v3707
        %v3948 = vpop.f32.mrb[0].mxu0
        %v3949 = vadd.f32 %v3746, %v3948
        %v3950 = vpop.f32.mrb[0].mxu0
        %v3951 = vpop.f32.mrb[0].mxu0
        %v3952 = vadd.f32 %v3746, %v3951
        %v3953 = vpop.f32.mrb[0].mxu0
        %3954 = vmatprep.mubr.bf16.mxu0 %v3830
        %3955 = vmatmul.mubr.bf16.gmra.mrb[0].mxu0 %v3709
        %v3956 = vpop.f32.mrb[0].mxu0
        %v3957 = vadd.f32 %v3746, %v3956
        %v3958 = vpop.f32.mrb[0].mxu0
        %v3959 = vpop.f32.mrb[0].mxu0
        %v3960 = vadd.f32 %v3746, %v3959
        %v3961 = vpop.f32.mrb[0].mxu0
        %3962 = vmatprep.mubr.bf16.mxu0 %v3833
        %3963 = vmatmul.mubr.bf16.gmra.mrb[0].mxu0 %v3711
        %v3964 = vpop.f32.mrb[0].mxu0
        %v3965 = vadd.f32 %v3746, %v3964
        %v3966 = vpop.f32.mrb[0].mxu0
        %v3967 = vpop.f32.mrb[0].mxu0
        %v3968 = vadd.f32 %v3746, %v3967
        %v3969 = vpop.f32.mrb[0].mxu0
        %3970 = vmatprep.mubr.bf16.mxu0 %v3836
        %3971 = vmatmul.mubr.bf16.gmra.mrb[0].mxu0 %v3713
        %v3972 = vpop.f32.mrb[0].mxu0
        %v3973 = vadd.f32 %v3746, %v3972
        %v3974 = vpop.f32.mrb[0].mxu0
        %v3975 = vpop.f32.mrb[0].mxu0
        %v3976 = vadd.f32 %v3746, %v3975
        %v3977 = vpop.f32.mrb[0].mxu0
        %3978 = vmatprep.mubr.bf16.mxu0 %v3839
        %3979 = vmatmul.mubr.bf16.gmra.mrb[0].mxu0 %v3715
        %v3980 = vpop.f32.mrb[0].mxu0
        %v3981 = vadd.f32 %v3746, %v3980
        %v3982 = vpop.f32.mrb[0].mxu0
        %v3983 = vpop.f32.mrb[0].mxu0
        %v3984 = vadd.f32 %v3746, %v3983
        %v3985 = vpop.f32.mrb[0].mxu0
        %3986 = vmatprep.mubr.bf16.mxu0 %v3842
        %3987 = vmatmul.mubr.bf16.gmra.mrb[0].mxu0 %v3717
        %v3988 = vpop.f32.mrb[0].mxu0
        %v3989 = vadd.f32 %v3746, %v3988
        %v3990 = vpop.f32.mrb[0].mxu0
        %v3991 = vpop.f32.mrb[0].mxu0
        %v3992 = vadd.f32 %v3746, %v3991
        %v3993 = vpop.f32.mrb[0].mxu0
        %3994 = vmatprep.mubr.bf16.mxu0 %v3845
        %3995 = vmatmul.mubr.bf16.gmra.mrb[0].mxu0 %v3719
        %v3996 = vpop.f32.mrb[0].mxu0
        %v3997 = vadd.f32 %v3746, %v3996
        %v3998 = vpop.f32.mrb[0].mxu0
        %v3999 = vpop.f32.mrb[0].mxu0
        %v4000 = vadd.f32 %v3746, %v3999
        %v4001 = vpop.f32.mrb[0].mxu0
        %4002 = vmatprep.mubr.bf16.mxu0 %v3848
        %4003 = vmatmul.mubr.bf16.gmra.mrb[0].mxu0 %v3721
        %v4004 = vpop.f32.mrb[0].mxu0
        %v4005 = vadd.f32 %v3746, %v4004
        %v4006 = vpop.f32.mrb[0].mxu0
        %v4007 = vpop.f32.mrb[0].mxu0
        %v4008 = vadd.f32 %v3746, %v4007
        %v4009 = vpop.f32.mrb[0].mxu0
        %4010 = vdwg.mxu0
        %v4011 = vmax.f32 %v3885, 0.0
        %v4012 = vmax.f32 %v3888, 0.0
        %v4013 = vmax.f32 %v3893, 0.0
        %v4014 = vmax.f32 %v3896, 0.0
        %v4015 = vmax.f32 %v3901, 0.0
        %v4016 = vmax.f32 %v3904, 0.0
        %v4017 = vmax.f32 %v3909, 0.0
        %v4018 = vmax.f32 %v3912, 0.0
        %v4019 = vmax.f32 %v3917, 0.0
        %v4020 = vmax.f32 %v3920, 0.0
        %v4021 = vmax.f32 %v3925, 0.0
        %v4022 = vmax.f32 %v3928, 0.0
        %v4023 = vmax.f32 %v3933, 0.0
        %v4024 = vmax.f32 %v3936, 0.0
        %v4025 = vmax.f32 %v3941, 0.0
        %v4026 = vmax.f32 %v3944, 0.0
        %v4027 = vmax.f32 %v3949, 0.0
        %v4028 = vmax.f32 %v3952, 0.0
        %v4029 = vmax.f32 %v3957, 0.0
        %v4030 = vmax.f32 %v3960, 0.0
        %v4031 = vmax.f32 %v3965, 0.0
        %v4032 = vmax.f32 %v3968, 0.0
        %v4033 = vmax.f32 %v3973, 0.0
        %v4034 = vmax.f32 %v3976, 0.0
        %v4035 = vmax.f32 %v3981, 0.0
        %v4036 = vmax.f32 %v3984, 0.0
        %v4037 = vmax.f32 %v3989, 0.0
        %v4038 = vmax.f32 %v3992, 0.0
        %v4039 = vmax.f32 %v3997, 0.0
        %v4040 = vmax.f32 %v4000, 0.0
        %v4041 = vmax.f32 %v4005, 0.0
        %v4042 = vmax.f32 %v4008, 0.0
        %v4043 = vsel %vm3559, %v4011, 0.0
        %v4044 = vsel %vm3559, %v4012, 0.0
        %v4045 = vadd.f32 %v4043, %v4044
        %v4046 = vsel %vm3559, %v4013, 0.0
        %v4047 = vadd.f32 %v4045, %v4046
        %v4048 = vsel %vm3559, %v4014, 0.0
        %v4049 = vadd.f32 %v4047, %v4048
        %v4050 = vsel %vm3559, %v4015, 0.0
        %v4051 = vadd.f32 %v4049, %v4050
        %v4052 = vsel %vm3559, %v4016, 0.0
        %v4053 = vadd.f32 %v4051, %v4052
        %v4054 = vsel %vm3559, %v4017, 0.0
        %v4055 = vadd.f32 %v4053, %v4054
        %v4056 = vsel %vm3559, %v4018, 0.0
        %v4057 = vadd.f32 %v4055, %v4056
        %v4058 = vsel %vm3559, %v4019, 0.0
        %v4059 = vadd.f32 %v4057, %v4058
        %v4060 = vsel %vm3559, %v4020, 0.0
        %v4061 = vadd.f32 %v4059, %v4060
        %v4062 = vsel %vm3559, %v4021, 0.0
        %v4063 = vadd.f32 %v4061, %v4062
        %v4064 = vsel %vm3559, %v4022, 0.0
        %v4065 = vadd.f32 %v4063, %v4064
        %v4066 = vsel %vm3559, %v4023, 0.0
        %v4067 = vadd.f32 %v4065, %v4066
        %v4068 = vsel %vm3559, %v4024, 0.0
        %v4069 = vadd.f32 %v4067, %v4068
        %v4070 = vsel %vm3559, %v4025, 0.0
        %v4071 = vadd.f32 %v4069, %v4070
        %v4072 = vsel %vm3559, %v4026, 0.0
        %v4073 = vadd.f32 %v4071, %v4072
        %v4074 = vsel %vm3559, %v4027, 0.0
        %v4075 = vadd.f32 %v4073, %v4074
        %v4076 = vsel %vm3559, %v4028, 0.0
        %v4077 = vadd.f32 %v4075, %v4076
        %v4078 = vsel %vm3559, %v4029, 0.0
        %v4079 = vadd.f32 %v4077, %v4078
        %v4080 = vsel %vm3559, %v4030, 0.0
        %v4081 = vadd.f32 %v4079, %v4080
        %v4082 = vsel %vm3559, %v4031, 0.0
        %v4083 = vadd.f32 %v4081, %v4082
        %v4084 = vsel %vm3559, %v4032, 0.0
        %v4085 = vadd.f32 %v4083, %v4084
        %v4086 = vsel %vm3559, %v4033, 0.0
        %v4087 = vadd.f32 %v4085, %v4086
        %v4088 = vsel %vm3559, %v4034, 0.0
        %v4089 = vadd.f32 %v4087, %v4088
        %v4090 = vsel %vm3559, %v4035, 0.0
        %v4091 = vadd.f32 %v4089, %v4090
        %v4092 = vsel %vm3559, %v4036, 0.0
        %v4093 = vadd.f32 %v4091, %v4092
        %v4094 = vsel %vm3559, %v4037, 0.0
        %v4095 = vadd.f32 %v4093, %v4094
        %v4096 = vsel %vm3559, %v4038, 0.0
        %v4097 = vadd.f32 %v4095, %v4096
        %v4098 = vsel %vm3559, %v4039, 0.0
        %v4099 = vadd.f32 %v4097, %v4098
        %v4100 = vsel %vm3559, %v4040, 0.0
        %v4101 = vadd.f32 %v4099, %v4100
        %v4102 = vsel %vm3559, %v4041, 0.0
        %v4103 = vadd.f32 %v4101, %v4102
        %v4104 = vsel %vm3559, %v4042, 0.0
        %v4105 = vadd.f32 %v4103, %v4104
        %v4106 = vrot.slane %v4105, 4
        %v4107 = vadd.f32 %v4105, %v4106
        %v4108 = vrot.slane %v4107, 2
        %v4109 = vadd.f32 %v4107, %v4108
        %v4110 = vrot.slane %v4109, 1
        %v4111 = vadd.f32 %v4109, %v4110
        %v4112 = vmul.f32 %v4111, 0.00390625
        %vm4113 = vcmask 516096
        %4114 = vst.msk [vmem:[%s216] sm:$0x1] %vm4113, %v4112
        %s4115 = sand.u32 %s137, 1
        %s4116 = scalar_lea.sflag [#allocation5], %s4115
        %s4117 = sand.u32 %s137, 1
        %s4118 = scalar_lea.vmem [#allocation4], %s4117
        // Predicated region
        $region41: #{wrapper_inception_v3.1} parent=39 // pred_check
          %p4119 = pneg %p147
        $region42: #{wrapper_inception_v3.1} parent=39 // pred_check_branch
          %4121 = sbr.rel (%p4119) target = $region44
        $region43: #{wrapper_inception_v3.1} parent=39 // pred_region
          %s4123 = ssub.s32 16, 16
          %4124 = vsyncadd %s4116, %s4123
          %s4125 = smul.addr %s19, 16
          %s4126 = scalar_lea.hbm %s5, %s4125
          %s4128 = sshll.u32 %s4118, 4
          %s4129 = int_to_ptr.vmem [resolvable:$true] %s4128
          %4131 = dma.vmem_to_hbm [thread:$0]  %s4129, 16, %s4126, %s4116
        $region44: #{wrapper_inception_v3.1} parent=39 // pred_fallthru
          _
      $region40: #{wrapper_inception_v3.1} parent=5 // pred_fallthru
        _
      %p4132 = scmp.le.s32.totalorder 2, %s14
      // Predicated region
      $region45: #{wrapper_inception_v3.1} parent=5 // pred_check
        %p4133 = pneg %p4132
      $region46: #{wrapper_inception_v3.1} parent=5 // pred_check_branch
        %4135 = sbr.rel (%p4133) target = $region48
      $region47: #{wrapper_inception_v3.1} parent=5 // pred_region
        %s4136 = ssub.s32 %s14, 2
        // Predicated region
        $region49: #{wrapper_inception_v3.1} parent=47 // pred_check
          %p4137 = pneg %p153
        $region50: #{wrapper_inception_v3.1} parent=47 // pred_check_branch
          %4139 = sbr.rel (%p4137) target = $region52
        $region51: #{wrapper_inception_v3.1} parent=47 // pred_region
          %s4140 = sand.u32 %s138, 1
          %s4141 = scalar_lea.sflag [#allocation5], %s4140
          %s4142 = sand.u32 %s138, 1
          %s4143 = scalar_lea.vmem [#allocation4], %s4142
          %4144 = dma.done %s4141, 16
        $region52: #{wrapper_inception_v3.1} parent=47 // pred_fallthru
          _
      $region48: #{wrapper_inception_v3.1} parent=5 // pred_fallthru
        _
    $region6: #{wrapper_inception_v3.1} parent=1 // loop_footer
      %s18 = sadd.s32 1, %s14
    $region7: #{wrapper_inception_v3.1} parent=1 // loop_footer_branch
      %13 = sbr.rel target = $region3
    $region8: #{wrapper_inception_v3.1} parent=1 // loop_exit
      _
    %4145 = vsyncpa [#allocation5], 1
    %s4146 = scalar_lea.sflag [#allocation5], 1
    %4147 = vsyncpa %s4146, 1

</llo_original>
